<compile_context>
chip_gen: v7x
topology: tpu7x:2x2x1
jax: 0.10.0
libtpu: 0.0.40
codegen_flags: <defaults>
</compile_context>

<pallas_src>
import functools

import jax
import jax.numpy as jnp
from jax.experimental import pallas as pl
from jax.experimental.pallas import tpu as pltpu


PACKED_WIDTH = 128  # lane-dense packed output: mu | sigma | value | zero padding


# -----------------------------------------------------------------------------
# Kernel
# -----------------------------------------------------------------------------
def actor_critic_kernel(
    action_dim, action_bound,
    x_ref,               # (TB, S) f32
    w1_ref,              # fused actor/critic layer 1 weight   (S, 2H)    bf16
    w2a_ref,             # actor layer 2 weight                (H, H/2)   bf16
    w2c_ref,             # critic layer 2 weight               (H, H/2)   bf16
    wms_ref,             # fused mu|sigma hidden head weight   (H/2, H/2) bf16
    wf_ref,              # fused block-diag output head weight (H, 128)   bf16
    b_ref,               # coalesced biases (1, 2H + 3*(H/2) + 128)       f32
    out_ref,             # packed output (TB, 128) f32
):
    x = x_ref[...]                       # (TB, S) float32
    h = w2a_ref.shape[0]                 # 512
    h2 = w2a_ref.shape[1]                # 256

    # Static, 128-aligned lane slices of the coalesced bias vector.
    o1 = 2 * h
    b1 = b_ref[:, :o1]                                   # (1, 2H)
    b2a = b_ref[:, o1:o1 + h2]                           # (1, H/2)
    b2c = b_ref[:, o1 + h2:o1 + 2 * h2]                  # (1, H/2)
    bms = b_ref[:, o1 + 2 * h2:o1 + 3 * h2]              # (1, H/2)
    bf = b_ref[:, o1 + 3 * h2:o1 + 3 * h2 + PACKED_WIDTH]  # (1, 128)

    def mm(a, w_ref, rows=None):
        # bf16 x bf16 MXU matmul with f32 accumulation.
        w = w_ref[...] if rows is None else w_ref[rows, :]
        return jnp.dot(a.astype(w.dtype), w, preferred_element_type=jnp.float32)

    relu = lambda v: jnp.maximum(v, 0.0)

    # Fused actor/critic first layer: (TB, 2H) = [ actor_h1 | critic_h1 ]
    h1 = relu(mm(x, w1_ref) + b1)
    h_a = h1[:, :h]
    h_c = h1[:, h:]

    h_a2 = relu(mm(h_a, w2a_ref) + b2a)     # (TB, H/2) actor hidden 2
    h_c2 = relu(mm(h_c, w2c_ref) + b2c)     # (TB, H/2) critic hidden 2

    # Fused mu|sigma hidden heads: (TB, 256) = [ out_mu | out_sigma ]
    h_ms = relu(mm(h_a2, wms_ref) + bms)

    # Block-diagonal output head, split into two accumulated dots (no concat copy):
    #   lanes [0, A)      : mu_out(out_mu)
    #   lanes [A, 2A)     : sigma_out(out_sigma)
    #   lane  2A          : c3(critic_h2)
    #   lanes [2A+1, 128) : zeros
    z = (mm(h_ms, wf_ref, rows=slice(0, h2))
         + mm(h_c2, wf_ref, rows=slice(h2, 2 * h2))
         + bf)                               # (TB, 128) f32

    a = action_dim
    lane = jax.lax.broadcasted_iota(jnp.int32, z.shape, dimension=1)
    mu = jnp.tanh(z) * action_bound
    # Numerically stable softplus in f32 (EUP exp/log1p; compute slot has huge slack).
    sigma = jnp.maximum(z, 0.0) + jnp.log1p(jnp.exp(-jnp.abs(z)))
    packed = jnp.where(
        lane < a, mu,
        jnp.where(lane < 2 * a, sigma,
                  jnp.where(lane < 2 * a + 1, z, 0.0)))
    out_ref[...] = packed.astype(out_ref.dtype)


# -----------------------------------------------------------------------------
# Parameter construction / fusion
# -----------------------------------------------------------------------------
def init_params(key, state_dim, action_dim, hidden_size=512):
    """Deterministic parameter init mirroring the PyTorch module:
    weights ~ N(0, 0.1); biases use default nn.Linear init U(-1/sqrt(fan_in), +)."""
    def linear_params(k, fan_in, fan_out):
        kw, kb = jax.random.split(k)
        # stored as (in, out) — already transposed for x @ W + b
        w = 0.1 * jax.random.normal(kw, (fan_in, fan_out), jnp.float32)
        bnd = 1.0 / jnp.sqrt(fan_in)
        b = jax.random.uniform(kb, (1, fan_out), jnp.float32, -bnd, bnd)
        return w, b

    keys = jax.random.split(key, 9)
    h, h2, h4 = hidden_size, hidden_size // 2, hidden_size // 4
    params = {}
    params["a_1"] = linear_params(keys[0], state_dim, h)
    params["a_2"] = linear_params(keys[1], h, h2)
    params["mu"] = linear_params(keys[2], h2, h4)
    params["sigma"] = linear_params(keys[3], h2, h4)
    params["mu_out"] = linear_params(keys[4], h4, action_dim)
    params["sigma_out"] = linear_params(keys[5], h4, action_dim)
    params["c1"] = linear_params(keys[6], state_dim, h)
    params["c2"] = linear_params(keys[7], h, h2)
    params["c3"] = linear_params(keys[8], h2, 1)
    return params


def prepare_fused_params(params, action_dim):
    """Fuse parallel layers, cast weights to bf16, and coalesce all biases
    into a single lane-dense (1, 2H + 3*(H/2) + 128) f32 array."""
    a = action_dim
    h4 = params["mu_out"][0].shape[0]    # 128
    h2 = params["c3"][0].shape[0]        # 256

    w1 = jnp.concatenate([params["a_1"][0], params["c1"][0]], axis=1)
    b1 = jnp.concatenate([params["a_1"][1], params["c1"][1]], axis=1)

    wms = jnp.concatenate([params["mu"][0], params["sigma"][0]], axis=1)
    bms = jnp.concatenate([params["mu"][1], params["sigma"][1]], axis=1)

    # Block-diagonal final head: rows = [ out_mu | out_sigma | critic_h2 ],
    # cols = lane-dense packed output [ mu | sigma | value | pad ].
    wf = jnp.zeros((2 * h4 + h2, PACKED_WIDTH), jnp.float32)
    wf = wf.at[:h4, :a].set(params["mu_out"][0])
    wf = wf.at[h4:2 * h4, a:2 * a].set(params["sigma_out"][0])
    wf = wf.at[2 * h4:, 2 * a:2 * a + 1].set(params["c3"][0])
    bf = jnp.zeros((1, PACKED_WIDTH), jnp.float32)
    bf = bf.at[:, :a].set(params["mu_out"][1])
    bf = bf.at[:, a:2 * a].set(params["sigma_out"][1])
    bf = bf.at[:, 2 * a:2 * a + 1].set(params["c3"][1])

    # Coalesced biases: [ b1 (2H) | b2a (H/2) | b2c (H/2) | bms (H/2) | bf (128) ]
    biases = jnp.concatenate(
        [b1, params["a_2"][1], params["c2"][1], bms, bf], axis=1)

    bf16 = jnp.bfloat16
    return dict(
        w1=w1.astype(bf16),
        w2a=params["a_2"][0].astype(bf16),
        w2c=params["c2"][0].astype(bf16),
        wms=wms.astype(bf16),
        wf=wf.astype(bf16),
        biases=biases,
    )


# -----------------------------------------------------------------------------
# Wrapper
# -----------------------------------------------------------------------------
def actor_critic_forward(x, fused, action_dim, action_bound, *, batch_tile=256):
    B, S = x.shape
    assert 2 * action_dim + 1 <= PACKED_WIDTH, "action_dim too large for packed output"

    tb = min(batch_tile, max(8, ((B + 7) // 8) * 8))
    num_blocks = pl.cdiv(B, tb)
    b_pad = num_blocks * tb
    if b_pad != B:
        x = jnp.pad(x, ((0, b_pad - B), (0, 0)))

    weights = [
        fused["w1"], fused["w2a"], fused["w2c"],
        fused["wms"], fused["wf"], fused["biases"],
    ]

    in_specs = [pl.BlockSpec((tb, S), lambda i: (i, 0))]
    # Weights/biases: same block every grid step -> VMEM-resident across steps.
    in_specs += [pl.BlockSpec(w.shape, lambda i: (0, 0)) for w in weights]
    out_spec = pl.BlockSpec((tb, PACKED_WIDTH), lambda i: (i, 0))

    # Only shard the batch axis across TensorCores (v7x) when each core would
    # get >= 2 blocks; otherwise keep a single TC and a single weight DMA stream.
    sems = ("parallel",) if num_blocks >= 4 else ("arbitrary",)

    mm_weights = weights[:-1]  # all matmul weights (exclude coalesced biases)
    flops = 2 * b_pad * int(sum(w.shape[0] * w.shape[1] for w in mm_weights))
    bytes_accessed = (
        int(sum(w.size * w.dtype.itemsize for w in weights))
        + b_pad * S * 4
        + b_pad * PACKED_WIDTH * 4
    )
    cost = pl.CostEstimate(
        flops=flops,
        transcendentals=3 * b_pad * PACKED_WIDTH,   # tanh + exp + log1p per lane
        bytes_accessed=bytes_accessed,
    )

    kernel = functools.partial(actor_critic_kernel, action_dim, float(action_bound))

    packed = pl.pallas_call(
        kernel,
        out_shape=jax.ShapeDtypeStruct((b_pad, PACKED_WIDTH), jnp.float32),
        grid=(num_blocks,),
        in_specs=in_specs,
        out_specs=out_spec,
        compiler_params=pltpu.CompilerParams(dimension_semantics=sems),
        cost_estimate=cost,
    )(x, *weights)

    a = action_dim
    mu = packed[:B, :a]
    sigma = packed[:B, a:2 * a]
    value = packed[:B, 2 * a:2 * a + 1]
    return mu, sigma, value


# -----------------------------------------------------------------------------
# References
# -----------------------------------------------------------------------------
def reference_forward(x, params, action_bound):
    """Pure-JAX f32 reference (same math as the PyTorch forward)."""
    lin = lambda h, p: h @ p[0] + p[1]
    relu = lambda v: jnp.maximum(v, 0.0)
    out = relu(lin(x, params["a_1"]))
    out = relu(lin(out, params["a_2"]))
    out_mu = relu(lin(out, params["mu"]))
    out_sg = relu(lin(out, params["sigma"]))
    mu = jnp.tanh(lin(out_mu, params["mu_out"])) * action_bound
    sigma = jax.nn.softplus(lin(out_sg, params["sigma_out"]))
    v = relu(lin(x, params["c1"]))
    v = relu(lin(v, params["c2"]))
    v = lin(v, params["c3"])
    return mu, sigma, v


def reference_forward_quantized(x, params, action_bound):
    """Pure-JAX reference mirroring the kernel's numerics:
    bf16 weights + bf16-cast dot inputs, f32 accumulation, f32 elementwise."""
    def lin(h, p):
        w = p[0].astype(jnp.bfloat16).astype(jnp.float32)
        hq = h.astype(jnp.bfloat16).astype(jnp.float32)
        return hq @ w + p[1]
    relu = lambda v: jnp.maximum(v, 0.0)
    out = relu(lin(x, params["a_1"]))
    out = relu(lin(out, params["a_2"]))
    out_mu = relu(lin(out, params["mu"]))
    out_sg = relu(lin(out, params["sigma"]))
    mu = jnp.tanh(lin(out_mu, params["mu_out"])) * action_bound
    sigma = jax.nn.softplus(lin(out_sg, params["sigma_out"]))
    v = relu(lin(x, params["c1"]))
    v = relu(lin(v, params["c2"]))
    v = lin(v, params["c3"])
    return mu, sigma, v


# -----------------------------------------------------------------------------
# Demo / correctness check
# -----------------------------------------------------------------------------
if __name__ == "__main__":
    B = 256          # with batch_tile=256 this is a single grid step (grid=(1,))
    STATE_DIM = 16
    ACTION_DIM = 4
    ACTION_BOUND = 2.0

    key = jax.random.PRNGKey(0)
    kx, kp = jax.random.split(key)
    x = jax.random.normal(kx, (B, STATE_DIM), jnp.float32)
    params = init_params(kp, STATE_DIM, ACTION_DIM)
    fused = prepare_fused_params(params, ACTION_DIM)
    fused = jax.tree_util.tree_map(jnp.asarray, fused)   # device-resident weights

    forward = jax.jit(functools.partial(
        actor_critic_forward, action_dim=ACTION_DIM, action_bound=ACTION_BOUND))

    mu, sigma, value = forward(x, fused)
    jax.block_until_ready((mu, sigma, value))

    assert mu.shape == (B, ACTION_DIM)
    assert sigma.shape == (B, ACTION_DIM)
    assert value.shape == (B, 1)

    # Exact-math check vs. a reference that mirrors the kernel's bf16 numerics.
    mu_q, sigma_q, value_q = reference_forward_quantized(x, params, ACTION_BOUND)
    assert jnp.allclose(mu, mu_q, atol=1e-3, rtol=1e-3)
    assert jnp.allclose(sigma, sigma_q, atol=1e-3, rtol=1e-3)
    assert jnp.allclose(value, value_q, atol=1e-3, rtol=1e-3)

    # Semantics check vs. the original f32 module (loose: bf16 weight quantization).
    mu_r, sigma_r, value_r = reference_forward(x, params, ACTION_BOUND)
    assert jnp.allclose(mu, mu_r, atol=1e-1, rtol=1e-1)
    assert jnp.allclose(sigma, sigma_r, atol=1e-1, rtol=1e-1)
    assert jnp.allclose(value, value_r, atol=1e-1, rtol=1e-1)

    print("KERNEL_OK")
</pallas_src>

<mosaic_0001>
module attributes {stable_mosaic.version = 11 : i64} {
  func.func @actor_critic_kernel(%arg0: i32, %arg1: memref<256x16xf32, #tpu.memory_space<vmem>>, %arg2: memref<16x1024xbf16, #tpu.memory_space<vmem>>, %arg3: memref<512x256xbf16, #tpu.memory_space<vmem>>, %arg4: memref<512x256xbf16, #tpu.memory_space<vmem>>, %arg5: memref<256x256xbf16, #tpu.memory_space<vmem>>, %arg6: memref<512x128xbf16, #tpu.memory_space<vmem>>, %arg7: memref<1x1920xf32, #tpu.memory_space<vmem>>, %arg8: memref<256x128xf32, #tpu.memory_space<vmem>>) attributes {dimension_semantics = [#tpu.dimension_semantics<arbitrary>], iteration_bounds = array<i64: 1>, scalar_prefetch = 0 : i64, scratch_operands = 0 : i64, tpu.core_type = #tpu.core_type<tc>, window_params = [{transform_indices = @transform_0, window_bounds = array<i64: 256, 16>}, {pipeline_mode = #tpu.pipeline_mode<synchronous>, transform_indices = @transform_1, window_bounds = array<i64: 16, 1024>}, {pipeline_mode = #tpu.pipeline_mode<synchronous>, transform_indices = @transform_2, window_bounds = array<i64: 512, 256>}, {pipeline_mode = #tpu.pipeline_mode<synchronous>, transform_indices = @transform_3, window_bounds = array<i64: 512, 256>}, {pipeline_mode = #tpu.pipeline_mode<synchronous>, transform_indices = @transform_4, window_bounds = array<i64: 256, 256>}, {pipeline_mode = #tpu.pipeline_mode<synchronous>, transform_indices = @transform_5, window_bounds = array<i64: 512, 128>}, {pipeline_mode = #tpu.pipeline_mode<synchronous>, transform_indices = @transform_6, window_bounds = array<i64: 1, 1920>}, {transform_indices = @transform_7, window_bounds = array<i64: 256, 128>}]} {
    %c0 = arith.constant 0 : index
    %c0_0 = arith.constant 0 : index
    %0 = vector.load %arg1[%c0, %c0_0] : memref<256x16xf32, #tpu.memory_space<vmem>>, vector<256x16xf32>
    %c0_1 = arith.constant 0 : index
    %c0_2 = arith.constant 0 : index
    %1 = vector.load %arg7[%c0_1, %c0_2] : memref<1x1920xf32, #tpu.memory_space<vmem>>, vector<1x1024xf32>
    %c0_3 = arith.constant 0 : index
    %c1024 = arith.constant 1024 : index
    %2 = vector.load %arg7[%c0_3, %c1024] : memref<1x1920xf32, #tpu.memory_space<vmem>>, vector<1x256xf32>
    %c0_4 = arith.constant 0 : index
    %c1280 = arith.constant 1280 : index
    %3 = vector.load %arg7[%c0_4, %c1280] : memref<1x1920xf32, #tpu.memory_space<vmem>>, vector<1x256xf32>
    %c0_5 = arith.constant 0 : index
    %c1536 = arith.constant 1536 : index
    %4 = vector.load %arg7[%c0_5, %c1536] : memref<1x1920xf32, #tpu.memory_space<vmem>>, vector<1x256xf32>
    %c0_6 = arith.constant 0 : index
    %c1792 = arith.constant 1792 : index
    %5 = vector.load %arg7[%c0_6, %c1792] : memref<1x1920xf32, #tpu.memory_space<vmem>>, vector<1x128xf32>
    %c0_7 = arith.constant 0 : index
    %c0_8 = arith.constant 0 : index
    %6 = vector.load %arg2[%c0_7, %c0_8] : memref<16x1024xbf16, #tpu.memory_space<vmem>>, vector<16x1024xbf16>
    %7 = arith.truncf %0 : vector<256x16xf32> to vector<256x16xbf16>
    %cst = arith.constant dense<0.000000e+00> : vector<256x1024xf32>
    %8 = tpu.matmul %7, %6, %cst {dimension_numbers = #tpu.dot_dimension_numbers<[1], [0], [0], [1], [0, 0, 1, 1], [], []>} : vector<256x16xbf16>, vector<16x1024xbf16>, vector<256x1024xf32> -> vector<256x1024xf32>
    %9 = vector.broadcast %1 : vector<1x1024xf32> to vector<256x1024xf32>
    %10 = arith.addf %8, %9 : vector<256x1024xf32>
    %cst_9 = arith.constant 0.000000e+00 : f32
    %11 = vector.broadcast %cst_9 : f32 to vector<256x1024xf32>
    %12 = arith.maximumf %10, %11 : vector<256x1024xf32>
    %13 = vector.extract_strided_slice %12 {offsets = [0, 0], sizes = [256, 512], strides = [1, 1]} : vector<256x1024xf32> to vector<256x512xf32>
    %14 = vector.extract_strided_slice %12 {offsets = [0, 512], sizes = [256, 512], strides = [1, 1]} : vector<256x1024xf32> to vector<256x512xf32>
    %c0_10 = arith.constant 0 : index
    %c0_11 = arith.constant 0 : index
    %15 = vector.load %arg3[%c0_10, %c0_11] : memref<512x256xbf16, #tpu.memory_space<vmem>>, vector<512x256xbf16>
    %16 = arith.truncf %13 : vector<256x512xf32> to vector<256x512xbf16>
    %cst_12 = arith.constant dense<0.000000e+00> : vector<256x256xf32>
    %17 = tpu.matmul %16, %15, %cst_12 {dimension_numbers = #tpu.dot_dimension_numbers<[1], [0], [0], [1], [0, 0, 1, 1], [], []>} : vector<256x512xbf16>, vector<512x256xbf16>, vector<256x256xf32> -> vector<256x256xf32>
    %18 = vector.broadcast %2 : vector<1x256xf32> to vector<256x256xf32>
    %19 = arith.addf %17, %18 : vector<256x256xf32>
    %cst_13 = arith.constant 0.000000e+00 : f32
    %20 = vector.broadcast %cst_13 : f32 to vector<256x256xf32>
    %21 = arith.maximumf %19, %20 : vector<256x256xf32>
    %c0_14 = arith.constant 0 : index
    %c0_15 = arith.constant 0 : index
    %22 = vector.load %arg4[%c0_14, %c0_15] : memref<512x256xbf16, #tpu.memory_space<vmem>>, vector<512x256xbf16>
    %23 = arith.truncf %14 : vector<256x512xf32> to vector<256x512xbf16>
    %cst_16 = arith.constant dense<0.000000e+00> : vector<256x256xf32>
    %24 = tpu.matmul %23, %22, %cst_16 {dimension_numbers = #tpu.dot_dimension_numbers<[1], [0], [0], [1], [0, 0, 1, 1], [], []>} : vector<256x512xbf16>, vector<512x256xbf16>, vector<256x256xf32> -> vector<256x256xf32>
    %25 = vector.broadcast %3 : vector<1x256xf32> to vector<256x256xf32>
    %26 = arith.addf %24, %25 : vector<256x256xf32>
    %cst_17 = arith.constant 0.000000e+00 : f32
    %27 = vector.broadcast %cst_17 : f32 to vector<256x256xf32>
    %28 = arith.maximumf %26, %27 : vector<256x256xf32>
    %c0_18 = arith.constant 0 : index
    %c0_19 = arith.constant 0 : index
    %29 = vector.load %arg5[%c0_18, %c0_19] : memref<256x256xbf16, #tpu.memory_space<vmem>>, vector<256x256xbf16>
    %30 = arith.truncf %21 : vector<256x256xf32> to vector<256x256xbf16>
    %cst_20 = arith.constant dense<0.000000e+00> : vector<256x256xf32>
    %31 = tpu.matmul %30, %29, %cst_20 {dimension_numbers = #tpu.dot_dimension_numbers<[1], [0], [0], [1], [0, 0, 1, 1], [], []>} : vector<256x256xbf16>, vector<256x256xbf16>, vector<256x256xf32> -> vector<256x256xf32>
    %32 = vector.broadcast %4 : vector<1x256xf32> to vector<256x256xf32>
    %33 = arith.addf %31, %32 : vector<256x256xf32>
    %cst_21 = arith.constant 0.000000e+00 : f32
    %34 = vector.broadcast %cst_21 : f32 to vector<256x256xf32>
    %35 = arith.maximumf %33, %34 : vector<256x256xf32>
    %c0_22 = arith.constant 0 : index
    %c0_23 = arith.constant 0 : index
    %36 = vector.load %arg6[%c0_22, %c0_23] : memref<512x128xbf16, #tpu.memory_space<vmem>>, vector<256x128xbf16>
    %37 = arith.truncf %35 : vector<256x256xf32> to vector<256x256xbf16>
    %cst_24 = arith.constant dense<0.000000e+00> : vector<256x128xf32>
    %38 = tpu.matmul %37, %36, %cst_24 {dimension_numbers = #tpu.dot_dimension_numbers<[1], [0], [0], [1], [0, 0, 1, 1], [], []>} : vector<256x256xbf16>, vector<256x128xbf16>, vector<256x128xf32> -> vector<256x128xf32>
    %c256 = arith.constant 256 : index
    %c0_25 = arith.constant 0 : index
    %39 = vector.load %arg6[%c256, %c0_25] : memref<512x128xbf16, #tpu.memory_space<vmem>>, vector<256x128xbf16>
    %40 = arith.truncf %28 : vector<256x256xf32> to vector<256x256xbf16>
    %cst_26 = arith.constant dense<0.000000e+00> : vector<256x128xf32>
    %41 = tpu.matmul %40, %39, %cst_26 {dimension_numbers = #tpu.dot_dimension_numbers<[1], [0], [0], [1], [0, 0, 1, 1], [], []>} : vector<256x256xbf16>, vector<256x128xbf16>, vector<256x128xf32> -> vector<256x128xf32>
    %42 = arith.addf %38, %41 : vector<256x128xf32>
    %43 = vector.broadcast %5 : vector<1x128xf32> to vector<256x128xf32>
    %44 = arith.addf %42, %43 : vector<256x128xf32>
    %45 = tpu.iota {dimensions = array<i32: 1>} : vector<256x128xi32>
    %46 = math.tanh %44 : vector<256x128xf32>
    %cst_27 = arith.constant 2.000000e+00 : f32
    %47 = vector.broadcast %cst_27 : f32 to vector<256x128xf32>
    %48 = arith.mulf %46, %47 : vector<256x128xf32>
    %cst_28 = arith.constant 0.000000e+00 : f32
    %49 = vector.broadcast %cst_28 : f32 to vector<256x128xf32>
    %50 = arith.maximumf %44, %49 : vector<256x128xf32>
    %51 = math.absf %44 : vector<256x128xf32>
    %cst_29 = arith.constant 0.000000e+00 : f32
    %52 = vector.broadcast %cst_29 : f32 to vector<256x128xf32>
    %53 = arith.subf %52, %51 : vector<256x128xf32>
    %54 = math.exp %53 : vector<256x128xf32>
    %55 = math.log1p %54 : vector<256x128xf32>
    %56 = arith.addf %50, %55 : vector<256x128xf32>
    %c4_i32 = arith.constant 4 : i32
    %57 = vector.broadcast %c4_i32 : i32 to vector<256x128xi32>
    %58 = arith.cmpi slt, %45, %57 : vector<256x128xi32>
    %c8_i32 = arith.constant 8 : i32
    %59 = vector.broadcast %c8_i32 : i32 to vector<256x128xi32>
    %60 = arith.cmpi slt, %45, %59 : vector<256x128xi32>
    %c9_i32 = arith.constant 9 : i32
    %61 = vector.broadcast %c9_i32 : i32 to vector<256x128xi32>
    %62 = arith.cmpi slt, %45, %61 : vector<256x128xi32>
    %cst_30 = arith.constant 0.000000e+00 : f32
    %63 = vector.broadcast %cst_30 : f32 to vector<256x128xf32>
    %64 = arith.select %62, %44, %63 : vector<256x128xi1>, vector<256x128xf32>
    %65 = arith.select %60, %56, %64 : vector<256x128xi1>, vector<256x128xf32>
    %66 = arith.select %58, %48, %65 : vector<256x128xi1>, vector<256x128xf32>
    %c0_31 = arith.constant 0 : index
    %c0_32 = arith.constant 0 : index
    %67 = vector.load %arg8[%c0_31, %c0_32] : memref<256x128xf32, #tpu.memory_space<vmem>>, vector<256x128xf32>
    tpu.vector_store %arg8[%c0_31, %c0_32], %66 {strides = array<i32>} : memref<256x128xf32, #tpu.memory_space<vmem>>, vector<256x128xf32>,
    return
  }
  func.func @transform_0(%arg0: i32) -> (i32, i32) {
    %c0_i32 = arith.constant 0 : i32
    %c0_i32_0 = arith.constant 0 : i32
    return %arg0, %c0_i32 : i32, i32
  }
  func.func @transform_1(%arg0: i32) -> (i32, i32) {
    %c0_i32 = arith.constant 0 : i32
    %c0_i32_0 = arith.constant 0 : i32
    %c0_i32_1 = arith.constant 0 : i32
    return %c0_i32, %c0_i32_0 : i32, i32
  }
  func.func @transform_2(%arg0: i32) -> (i32, i32) {
    %c0_i32 = arith.constant 0 : i32
    %c0_i32_0 = arith.constant 0 : i32
    %c0_i32_1 = arith.constant 0 : i32
    return %c0_i32, %c0_i32_0 : i32, i32
  }
  func.func @transform_3(%arg0: i32) -> (i32, i32) {
    %c0_i32 = arith.constant 0 : i32
    %c0_i32_0 = arith.constant 0 : i32
    %c0_i32_1 = arith.constant 0 : i32
    return %c0_i32, %c0_i32_0 : i32, i32
  }
  func.func @transform_4(%arg0: i32) -> (i32, i32) {
    %c0_i32 = arith.constant 0 : i32
    %c0_i32_0 = arith.constant 0 : i32
    %c0_i32_1 = arith.constant 0 : i32
    return %c0_i32, %c0_i32_0 : i32, i32
  }
  func.func @transform_5(%arg0: i32) -> (i32, i32) {
    %c0_i32 = arith.constant 0 : i32
    %c0_i32_0 = arith.constant 0 : i32
    %c0_i32_1 = arith.constant 0 : i32
    return %c0_i32, %c0_i32_0 : i32, i32
  }
  func.func @transform_6(%arg0: i32) -> (i32, i32) {
    %c0_i32 = arith.constant 0 : i32
    %c0_i32_0 = arith.constant 0 : i32
    %c0_i32_1 = arith.constant 0 : i32
    return %c0_i32, %c0_i32_0 : i32, i32
  }
  func.func @transform_7(%arg0: i32) -> (i32, i32) {
    %c0_i32 = arith.constant 0 : i32
    %c0_i32_0 = arith.constant 0 : i32
    return %arg0, %c0_i32 : i32, i32
  }
}

</mosaic_0001>

<llo_original>
// kernel: actor_critic_forward.1
$region0: #{actor_critic_forward.1}
  #allocation0 [shape = 'u32[]', space=smem, size = 0x4, offset = 0x4, fixed_abs, tag = 'smem constant byte address 0x4 - core index']
  #allocation1 [shape = 'u32[144,128]{1,0:T(1,128)}', space=vmem, size = 0x12000, scoped, tag = 'internal scratch']
  %s0 = inlined_call_operand.vmem [shape: f32[256,16], index: 0, kind: input, shape index: {}]
  %s1 = inlined_call_operand.hbm [shape: bf16[16,1024], index: 1, kind: input, shape index: {}]
  %s2 = inlined_call_operand.hbm [shape: bf16[512,256], index: 2, kind: input, shape index: {}]
  %s3 = inlined_call_operand.hbm [shape: bf16[512,256], index: 3, kind: input, shape index: {}]
  %s4 = inlined_call_operand.vmem [shape: bf16[256,256], index: 4, kind: input, shape index: {}]
  %s5 = inlined_call_operand.hbm [shape: bf16[512,128], index: 5, kind: input, shape index: {}]
  %s6 = inlined_call_operand.vmem [shape: f32[1,1920], index: 6, kind: input, shape index: {}]
  %s7 = inlined_call_operand.vmem [shape: f32[256,128], index: 7, kind: output, shape index: {}]
  %s8 = sld [smem:[#allocation0]]
  $region54: #{actor_critic_forward.1} parent=0
    _
  %s10 = ssub.s32 1, %s8
  %s11 = scalar_select 0, %s10, %s8
  $region1: #{actor_critic_forward.1} parent=0
    #allocation2 [shape = 'u8[32768]{0}', space=vmem, size = 0x8000, scoped, tag = 'input window, operand 1, single buffered']
    #allocation3 [shape = 's32[1]{0}', space=sflag, size = 0x4, scoped, tag = 'scoped memory for actor_critic_forward.1']
    #allocation4 [shape = 'u8[262144]{0}', space=vmem, size = 0x40000, scoped, tag = 'input window, operand 2, single buffered']
    #allocation5 [shape = 's32[1]{0}', space=sflag, size = 0x4, scoped, tag = 'scoped memory for actor_critic_forward.1']
    #allocation6 [shape = 'u8[262144]{0}', space=vmem, size = 0x40000, scoped, tag = 'input window, operand 3, single buffered']
    #allocation7 [shape = 'u8[131072]{0}', space=vmem, size = 0x20000, scoped, tag = 'input window, operand 5, single buffered']
    #allocation8 [shape = 's32[1]{0}', space=sflag, size = 0x4, scoped, tag = 'scoped memory for actor_critic_forward.1']
    %12 = vsyncpa [#allocation3], 0
    %13 = vsyncpa [#allocation5], 0
    %14 = vsyncpa [#allocation8], 0
    // Predicated region
    $region2: #{actor_critic_forward.1} parent=1 // pred_check
      _
    $region3: #{actor_critic_forward.1} parent=1 // pred_check_branch
      %16 = sbr.rel (0) target = $region5
    $region4: #{actor_critic_forward.1} parent=1 // pred_region
      _
    $region5: #{actor_critic_forward.1} parent=1 // pred_fallthru
      _
    // Predicated region
    $region6: #{actor_critic_forward.1} parent=1 // pred_check
      _
    $region7: #{actor_critic_forward.1} parent=1 // pred_check_branch
      %18 = sbr.rel (0) target = $region9
    $region8: #{actor_critic_forward.1} parent=1 // pred_region
      %s20 = ssub.s32 1024, 1024
      %21 = vsyncadd [#allocation3], %s20
      %s22 = sshll.u32 [#allocation2], 4
      %s23 = int_to_ptr.vmem [resolvable:$true] %s22
      %28 = dma.hbm_to_vmem [thread:$0]  %s1, 1024, %s23, [#allocation3], 512, 512, 32
    $region9: #{actor_critic_forward.1} parent=1 // pred_fallthru
      _
    // Predicated region
    $region10: #{actor_critic_forward.1} parent=1 // pred_check
      _
    $region11: #{actor_critic_forward.1} parent=1 // pred_check_branch
      %30 = sbr.rel (0) target = $region13
    $region12: #{actor_critic_forward.1} parent=1 // pred_region
      %s32 = ssub.s32 8192, 8192
      %33 = vsyncadd [#allocation5], %s32
      %s34 = sshll.u32 [#allocation4], 4
      %s35 = int_to_ptr.vmem [resolvable:$true] %s34
      %40 = dma.hbm_to_vmem [thread:$0]  %s2, 8192, %s35, [#allocation5], 128, 128, 8
    $region13: #{actor_critic_forward.1} parent=1 // pred_fallthru
      _
    // Predicated region
    $region14: #{actor_critic_forward.1} parent=1 // pred_check
      _
    $region15: #{actor_critic_forward.1} parent=1 // pred_check_branch
      %42 = sbr.rel (0) target = $region17
    $region16: #{actor_critic_forward.1} parent=1 // pred_region
      %s44 = ssub.s32 8192, 8192
      %45 = vsyncadd [#allocation5], %s44
      %s46 = sshll.u32 [#allocation6], 4
      %s47 = int_to_ptr.vmem [resolvable:$true] %s46
      %52 = dma.hbm_to_vmem [thread:$0]  %s3, 8192, %s47, [#allocation5], 128, 128, 8
    $region17: #{actor_critic_forward.1} parent=1 // pred_fallthru
      _
    // Predicated region
    $region18: #{actor_critic_forward.1} parent=1 // pred_check
      _
    $region19: #{actor_critic_forward.1} parent=1 // pred_check_branch
      %54 = sbr.rel (0) target = $region21
    $region20: #{actor_critic_forward.1} parent=1 // pred_region
      _
    $region21: #{actor_critic_forward.1} parent=1 // pred_fallthru
      _
    // Predicated region
    $region22: #{actor_critic_forward.1} parent=1 // pred_check
      _
    $region23: #{actor_critic_forward.1} parent=1 // pred_check_branch
      %56 = sbr.rel (0) target = $region25
    $region24: #{actor_critic_forward.1} parent=1 // pred_region
      %s58 = ssub.s32 4096, 4096
      %59 = vsyncadd [#allocation8], %s58
      %s60 = sshll.u32 [#allocation7], 4
      %s61 = int_to_ptr.vmem [resolvable:$true] %s60
      %66 = dma.hbm_to_vmem [thread:$0]  %s5, 4096, %s61, [#allocation8], 64, 64, 4
    $region25: #{actor_critic_forward.1} parent=1 // pred_fallthru
      _
    // Predicated region
    $region26: #{actor_critic_forward.1} parent=1 // pred_check
      _
    $region27: #{actor_critic_forward.1} parent=1 // pred_check_branch
      %68 = sbr.rel (0) target = $region29
    $region28: #{actor_critic_forward.1} parent=1 // pred_region
      _
    $region29: #{actor_critic_forward.1} parent=1 // pred_fallthru
      _
    // Predicated region
    $region30: #{actor_critic_forward.1} parent=1 // pred_check
      _
    $region31: #{actor_critic_forward.1} parent=1 // pred_check_branch
      %70 = sbr.rel (0) target = $region33
    $region32: #{actor_critic_forward.1} parent=1 // pred_region
      %71 = dma.done [#allocation3], 1024
    $region33: #{actor_critic_forward.1} parent=1 // pred_fallthru
      _
    // Predicated region
    $region34: #{actor_critic_forward.1} parent=1 // pred_check
      _
    $region35: #{actor_critic_forward.1} parent=1 // pred_check_branch
      %73 = sbr.rel (0) target = $region37
    $region36: #{actor_critic_forward.1} parent=1 // pred_region
      %74 = dma.done [#allocation5], 8192
    $region37: #{actor_critic_forward.1} parent=1 // pred_fallthru
      _
    // Predicated region
    $region38: #{actor_critic_forward.1} parent=1 // pred_check
      _
    $region39: #{actor_critic_forward.1} parent=1 // pred_check_branch
      %76 = sbr.rel (0) target = $region41
    $region40: #{actor_critic_forward.1} parent=1 // pred_region
      %77 = dma.done [#allocation5], 8192
    $region41: #{actor_critic_forward.1} parent=1 // pred_fallthru
      _
    // Predicated region
    $region42: #{actor_critic_forward.1} parent=1 // pred_check
      _
    $region43: #{actor_critic_forward.1} parent=1 // pred_check_branch
      %79 = sbr.rel (0) target = $region45
    $region44: #{actor_critic_forward.1} parent=1 // pred_region
      %80 = dma.done [#allocation8], 4096
    $region45: #{actor_critic_forward.1} parent=1 // pred_fallthru
      _
    %v82 = vld [vmem:[%s0] sm:$0xff]
    %v83 = vld [vmem:[%s0 + $0x8] sm:$0xff]
    %v84 = vld [vmem:[%s0 + $0x10] sm:$0xff]
    %v85 = vld [vmem:[%s0 + $0x18] sm:$0xff]
    %v86 = vld [vmem:[%s0 + $0x20] sm:$0xff]
    %v87 = vld [vmem:[%s0 + $0x28] sm:$0xff]
    %v88 = vld [vmem:[%s0 + $0x30] sm:$0xff]
    %v89 = vld [vmem:[%s0 + $0x38] sm:$0xff]
    %v90 = vld [vmem:[%s0 + $0x40] sm:$0xff]
    %v91 = vld [vmem:[%s0 + $0x48] sm:$0xff]
    %v92 = vld [vmem:[%s0 + $0x50] sm:$0xff]
    %v93 = vld [vmem:[%s0 + $0x58] sm:$0xff]
    %v94 = vld [vmem:[%s0 + $0x60] sm:$0xff]
    %v95 = vld [vmem:[%s0 + $0x68] sm:$0xff]
    %v96 = vld [vmem:[%s0 + $0x70] sm:$0xff]
    %v97 = vld [vmem:[%s0 + $0x78] sm:$0xff]
    %v98 = vld [vmem:[%s0 + $0x80] sm:$0xff]
    %v99 = vld [vmem:[%s0 + $0x88] sm:$0xff]
    %v100 = vld [vmem:[%s0 + $0x90] sm:$0xff]
    %v101 = vld [vmem:[%s0 + $0x98] sm:$0xff]
    %v102 = vld [vmem:[%s0 + $0xa0] sm:$0xff]
    %v103 = vld [vmem:[%s0 + $0xa8] sm:$0xff]
    %v104 = vld [vmem:[%s0 + $0xb0] sm:$0xff]
    %v105 = vld [vmem:[%s0 + $0xb8] sm:$0xff]
    %v106 = vld [vmem:[%s0 + $0xc0] sm:$0xff]
    %v107 = vld [vmem:[%s0 + $0xc8] sm:$0xff]
    %v108 = vld [vmem:[%s0 + $0xd0] sm:$0xff]
    %v109 = vld [vmem:[%s0 + $0xd8] sm:$0xff]
    %v110 = vld [vmem:[%s0 + $0xe0] sm:$0xff]
    %v111 = vld [vmem:[%s0 + $0xe8] sm:$0xff]
    %v112 = vld [vmem:[%s0 + $0xf0] sm:$0xff]
    %v113 = vld [vmem:[%s0 + $0xf8] sm:$0xff]
    %v114 = vld [vmem:[%s6] sm:$0xff]
    %v115 = vld [vmem:[%s6 + $0x8] sm:$0x3]
    %v116 = vld [vmem:[%s6 + $0xa] sm:$0x3]
    %v117 = vld [vmem:[%s6 + $0xc] sm:$0x3]
    %v118 = vld [vmem:[%s6 + $0xe] sm:$0x1]
    %v119 = vld [vmem:[#allocation2] sm:$0xff]
    %v120 = vld [vmem:[#allocation2 + $0x8] sm:$0xff]
    %v121 = vld [vmem:[#allocation2 + $0x10] sm:$0xff]
    %v122 = vld [vmem:[#allocation2 + $0x18] sm:$0xff]
    %v123 = vld [vmem:[#allocation2 + $0x20] sm:$0xff]
    %v124 = vld [vmem:[#allocation2 + $0x28] sm:$0xff]
    %v125 = vld [vmem:[#allocation2 + $0x30] sm:$0xff]
    %v126 = vld [vmem:[#allocation2 + $0x38] sm:$0xff]
    %v127 = vpack.c.bf16 %v83, %v82
    %v128 = vpack.c.bf16 %v85, %v84
    %v129 = vpack.c.bf16 %v87, %v86
    %v130 = vpack.c.bf16 %v89, %v88
    %v131 = vpack.c.bf16 %v91, %v90
    %v132 = vpack.c.bf16 %v93, %v92
    %v133 = vpack.c.bf16 %v95, %v94
    %v134 = vpack.c.bf16 %v97, %v96
    %v135 = vpack.c.bf16 %v99, %v98
    %v136 = vpack.c.bf16 %v101, %v100
    %v137 = vpack.c.bf16 %v103, %v102
    %v138 = vpack.c.bf16 %v105, %v104
    %v139 = vpack.c.bf16 %v107, %v106
    %v140 = vpack.c.bf16 %v109, %v108
    %v141 = vpack.c.bf16 %v111, %v110
    %v142 = vpack.c.bf16 %v113, %v112
    %v144 = vlaneseq
    %v145 = vshrl.u32 %v144, 7
    %v146 = vsub.s32 0, %v145
    %v147 = vrot.slane %v114, %v146
    %v148 = vlaneseq
    %v149 = vshrl.u32 %v148, 7
    %v150 = vsub.s32 1, %v149
    %v151 = vrot.slane %v114, %v150
    %v152 = vlaneseq
    %v153 = vshrl.u32 %v152, 7
    %v154 = vsub.s32 2, %v153
    %v155 = vrot.slane %v114, %v154
    %v156 = vlaneseq
    %v157 = vshrl.u32 %v156, 7
    %v158 = vsub.s32 3, %v157
    %v159 = vrot.slane %v114, %v158
    %v160 = vlaneseq
    %v161 = vshrl.u32 %v160, 7
    %v162 = vsub.s32 4, %v161
    %v163 = vrot.slane %v114, %v162
    %v164 = vlaneseq
    %v165 = vshrl.u32 %v164, 7
    %v166 = vsub.s32 5, %v165
    %v167 = vrot.slane %v114, %v166
    %v168 = vlaneseq
    %v169 = vshrl.u32 %v168, 7
    %v170 = vsub.s32 6, %v169
    %v171 = vrot.slane %v114, %v170
    %v172 = vlaneseq
    %v173 = vshrl.u32 %v172, 7
    %v174 = vsub.s32 7, %v173
    %v175 = vrot.slane %v114, %v174
    %v192 = vunpack.c.l.b16 %v119
    %v193 = vunpack.c.h.b16 %v119
    %v194 = vunpack.c.l.b16 %v120
    %v195 = vunpack.c.h.b16 %v120
    %v196 = vunpack.c.l.b16 %v121
    %v197 = vunpack.c.h.b16 %v121
    %v198 = vunpack.c.l.b16 %v122
    %v199 = vunpack.c.h.b16 %v122
    %v200 = vunpack.c.l.b16 %v123
    %v201 = vunpack.c.h.b16 %v123
    %v202 = vunpack.c.l.b16 %v124
    %v203 = vunpack.c.h.b16 %v124
    %v204 = vunpack.c.l.b16 %v125
    %v205 = vunpack.c.h.b16 %v125
    %v206 = vunpack.c.l.b16 %v126
    %v207 = vunpack.c.h.b16 %v126
    %v208 = vpack.c.b16 %v200, %v192
    %v209 = vpack.c.b16 %v201, %v193
    %v210 = vpack.c.b16 %v202, %v194
    %v211 = vpack.c.b16 %v203, %v195
    %v212 = vpack.c.b16 %v204, %v196
    %v213 = vpack.c.b16 %v205, %v197
    %v214 = vpack.c.b16 %v206, %v198
    %v215 = vpack.c.b16 %v207, %v199
    %vm224 = vcmask 130048
    %v226 = vsel %vm224, %v127, 0
    %v229 = vsel %vm224, %v128, 0
    %v232 = vsel %vm224, %v129, 0
    %v235 = vsel %vm224, %v130, 0
    %v238 = vsel %vm224, %v131, 0
    %v241 = vsel %vm224, %v132, 0
    %v244 = vsel %vm224, %v133, 0
    %v247 = vsel %vm224, %v134, 0
    %v250 = vsel %vm224, %v135, 0
    %v253 = vsel %vm224, %v136, 0
    %v256 = vsel %vm224, %v137, 0
    %v259 = vsel %vm224, %v138, 0
    %v262 = vsel %vm224, %v139, 0
    %v265 = vsel %vm224, %v140, 0
    %v268 = vsel %vm224, %v141, 0
    %v271 = vsel %vm224, %v142, 0
    %273 = vmatprep.subr.bf16.mxu0 %v209
    %274 = vmatpush1.bf16.msra.mxu0 %v208
    %275 = vmatprep.subr.bf16.mxu0 0
    %276 = vmatpush1.bf16.msra.mxu0 0
    %277 = vmatprep.subr.bf16.mxu0 0
    %278 = vmatpush1.bf16.msra.mxu0 0
    %279 = vmatprep.subr.bf16.mxu0 0
    %280 = vmatpush1.bf16.msra.mxu0 0
    %281 = vmatprep.subr.bf16.mxu0 0
    %282 = vmatpush1.bf16.msra.mxu0 0
    %283 = vmatprep.subr.bf16.mxu0 0
    %284 = vmatpush1.bf16.msra.mxu0 0
    %285 = vmatprep.subr.bf16.mxu0 0
    %286 = vmatpush1.bf16.msra.mxu0 0
    %287 = vmatprep.subr.bf16.mxu0 0
    %288 = vmatpush1.bf16.msra.mxu0 0
    %289 = vmatprep.subr.bf16.mxu0 0
    %290 = vmatpush1.bf16.msra.mxu0 0
    %291 = vmatprep.subr.bf16.mxu0 0
    %292 = vmatpush1.bf16.msra.mxu0 0
    %293 = vmatprep.subr.bf16.mxu0 0
    %294 = vmatpush1.bf16.msra.mxu0 0
    %295 = vmatprep.subr.bf16.mxu0 0
    %296 = vmatpush1.bf16.msra.mxu0 0
    %297 = vmatprep.subr.bf16.mxu0 0
    %298 = vmatpush1.bf16.msra.mxu0 0
    %299 = vmatprep.subr.bf16.mxu0 0
    %300 = vmatpush1.bf16.msra.mxu0 0
    %301 = vmatprep.subr.bf16.mxu0 0
    %302 = vmatpush1.bf16.msra.mxu0 0
    %303 = vmatprep.subr.bf16.mxu0 0
    %304 = vmatpush1.bf16.msra.mxu0 0
    %305 = vmatprep.mubr.bf16.mxu0 0
    %306 = vmatmul.mubr.bf16.gmra.mrb[0].mxu0 %v226
    %v307 = vpop.f32.mrb[0].mxu0
    %v308 = vadd.f32 %v147, %v307
    %v309 = vpop.f32.mrb[0].mxu0
    %v310 = vadd.f32 %v151, %v309
    %v311 = vpop.f32.mrb[0].mxu0
    %v312 = vadd.f32 %v147, %v311
    %v313 = vpop.f32.mrb[0].mxu0
    %v314 = vadd.f32 %v151, %v313
    %315 = vmatprep.mubr.bf16.mxu0 0
    %316 = vmatmul.mubr.bf16.gmra.mrb[0].mxu0 %v229
    %v317 = vpop.f32.mrb[0].mxu0
    %v318 = vadd.f32 %v147, %v317
    %v319 = vpop.f32.mrb[0].mxu0
    %v320 = vadd.f32 %v151, %v319
    %v321 = vpop.f32.mrb[0].mxu0
    %v322 = vadd.f32 %v147, %v321
    %v323 = vpop.f32.mrb[0].mxu0
    %v324 = vadd.f32 %v151, %v323
    %325 = vmatprep.mubr.bf16.mxu0 0
    %326 = vmatmul.mubr.bf16.gmra.mrb[0].mxu0 %v232
    %v327 = vpop.f32.mrb[0].mxu0
    %v328 = vadd.f32 %v147, %v327
    %v329 = vpop.f32.mrb[0].mxu0
    %v330 = vadd.f32 %v151, %v329
    %v331 = vpop.f32.mrb[0].mxu0
    %v332 = vadd.f32 %v147, %v331
    %v333 = vpop.f32.mrb[0].mxu0
    %v334 = vadd.f32 %v151, %v333
    %335 = vmatprep.mubr.bf16.mxu0 0
    %336 = vmatmul.mubr.bf16.gmra.mrb[0].mxu0 %v235
    %v337 = vpop.f32.mrb[0].mxu0
    %v338 = vadd.f32 %v147, %v337
    %v339 = vpop.f32.mrb[0].mxu0
    %v340 = vadd.f32 %v151, %v339
    %v341 = vpop.f32.mrb[0].mxu0
    %v342 = vadd.f32 %v147, %v341
    %v343 = vpop.f32.mrb[0].mxu0
    %v344 = vadd.f32 %v151, %v343
    %345 = vmatprep.mubr.bf16.mxu0 0
    %346 = vmatmul.mubr.bf16.gmra.mrb[0].mxu0 %v238
    %v347 = vpop.f32.mrb[0].mxu0
    %v348 = vadd.f32 %v147, %v347
    %v349 = vpop.f32.mrb[0].mxu0
    %v350 = vadd.f32 %v151, %v349
    %v351 = vpop.f32.mrb[0].mxu0
    %v352 = vadd.f32 %v147, %v351
    %v353 = vpop.f32.mrb[0].mxu0
    %v354 = vadd.f32 %v151, %v353
    %355 = vmatprep.mubr.bf16.mxu0 0
    %356 = vmatmul.mubr.bf16.gmra.mrb[0].mxu0 %v241
    %v357 = vpop.f32.mrb[0].mxu0
    %v358 = vadd.f32 %v147, %v357
    %v359 = vpop.f32.mrb[0].mxu0
    %v360 = vadd.f32 %v151, %v359
    %v361 = vpop.f32.mrb[0].mxu0
    %v362 = vadd.f32 %v147, %v361
    %v363 = vpop.f32.mrb[0].mxu0
    %v364 = vadd.f32 %v151, %v363
    %365 = vmatprep.mubr.bf16.mxu0 0
    %366 = vmatmul.mubr.bf16.gmra.mrb[0].mxu0 %v244
    %v367 = vpop.f32.mrb[0].mxu0
    %v368 = vadd.f32 %v147, %v367
    %v369 = vpop.f32.mrb[0].mxu0
    %v370 = vadd.f32 %v151, %v369
    %v371 = vpop.f32.mrb[0].mxu0
    %v372 = vadd.f32 %v147, %v371
    %v373 = vpop.f32.mrb[0].mxu0
    %v374 = vadd.f32 %v151, %v373
    %375 = vmatprep.mubr.bf16.mxu0 0
    %376 = vmatmul.mubr.bf16.gmra.mrb[0].mxu0 %v247
    %v377 = vpop.f32.mrb[0].mxu0
    %v378 = vadd.f32 %v147, %v377
    %v379 = vpop.f32.mrb[0].mxu0
    %v380 = vadd.f32 %v151, %v379
    %v381 = vpop.f32.mrb[0].mxu0
    %v382 = vadd.f32 %v147, %v381
    %v383 = vpop.f32.mrb[0].mxu0
    %v384 = vadd.f32 %v151, %v383
    %385 = vmatprep.mubr.bf16.mxu0 0
    %386 = vmatmul.mubr.bf16.gmra.mrb[0].mxu0 %v250
    %v387 = vpop.f32.mrb[0].mxu0
    %v388 = vadd.f32 %v147, %v387
    %v389 = vpop.f32.mrb[0].mxu0
    %v390 = vadd.f32 %v151, %v389
    %v391 = vpop.f32.mrb[0].mxu0
    %v392 = vadd.f32 %v147, %v391
    %v393 = vpop.f32.mrb[0].mxu0
    %v394 = vadd.f32 %v151, %v393
    %395 = vmatprep.mubr.bf16.mxu0 0
    %396 = vmatmul.mubr.bf16.gmra.mrb[0].mxu0 %v253
    %v397 = vpop.f32.mrb[0].mxu0
    %v398 = vadd.f32 %v147, %v397
    %v399 = vpop.f32.mrb[0].mxu0
    %v400 = vadd.f32 %v151, %v399
    %v401 = vpop.f32.mrb[0].mxu0
    %v402 = vadd.f32 %v147, %v401
    %v403 = vpop.f32.mrb[0].mxu0
    %v404 = vadd.f32 %v151, %v403
    %405 = vmatprep.mubr.bf16.mxu0 0
    %406 = vmatmul.mubr.bf16.gmra.mrb[0].mxu0 %v256
    %v407 = vpop.f32.mrb[0].mxu0
    %v408 = vadd.f32 %v147, %v407
    %v409 = vpop.f32.mrb[0].mxu0
    %v410 = vadd.f32 %v151, %v409
    %v411 = vpop.f32.mrb[0].mxu0
    %v412 = vadd.f32 %v147, %v411
    %v413 = vpop.f32.mrb[0].mxu0
    %v414 = vadd.f32 %v151, %v413
    %415 = vmatprep.mubr.bf16.mxu0 0
    %416 = vmatmul.mubr.bf16.gmra.mrb[0].mxu0 %v259
    %v417 = vpop.f32.mrb[0].mxu0
    %v418 = vadd.f32 %v147, %v417
    %v419 = vpop.f32.mrb[0].mxu0
    %v420 = vadd.f32 %v151, %v419
    %v421 = vpop.f32.mrb[0].mxu0
    %v422 = vadd.f32 %v147, %v421
    %v423 = vpop.f32.mrb[0].mxu0
    %v424 = vadd.f32 %v151, %v423
    %425 = vmatprep.mubr.bf16.mxu0 0
    %426 = vmatmul.mubr.bf16.gmra.mrb[0].mxu0 %v262
    %v427 = vpop.f32.mrb[0].mxu0
    %v428 = vadd.f32 %v147, %v427
    %v429 = vpop.f32.mrb[0].mxu0
    %v430 = vadd.f32 %v151, %v429
    %v431 = vpop.f32.mrb[0].mxu0
    %v432 = vadd.f32 %v147, %v431
    %v433 = vpop.f32.mrb[0].mxu0
    %v434 = vadd.f32 %v151, %v433
    %435 = vmatprep.mubr.bf16.mxu0 0
    %436 = vmatmul.mubr.bf16.gmra.mrb[0].mxu0 %v265
    %v437 = vpop.f32.mrb[0].mxu0
    %v438 = vadd.f32 %v147, %v437
    %v439 = vpop.f32.mrb[0].mxu0
    %v440 = vadd.f32 %v151, %v439
    %v441 = vpop.f32.mrb[0].mxu0
    %v442 = vadd.f32 %v147, %v441
    %v443 = vpop.f32.mrb[0].mxu0
    %v444 = vadd.f32 %v151, %v443
    %445 = vmatprep.mubr.bf16.mxu0 0
    %446 = vmatmul.mubr.bf16.gmra.mrb[0].mxu0 %v268
    %v447 = vpop.f32.mrb[0].mxu0
    %v448 = vadd.f32 %v147, %v447
    %v449 = vpop.f32.mrb[0].mxu0
    %v450 = vadd.f32 %v151, %v449
    %v451 = vpop.f32.mrb[0].mxu0
    %v452 = vadd.f32 %v147, %v451
    %v453 = vpop.f32.mrb[0].mxu0
    %v454 = vadd.f32 %v151, %v453
    %455 = vmatprep.mubr.bf16.mxu0 0
    %456 = vmatmul.mubr.bf16.gmra.mrb[0].mxu0 %v271
    %v457 = vpop.f32.mrb[0].mxu0
    %v458 = vadd.f32 %v147, %v457
    %v459 = vpop.f32.mrb[0].mxu0
    %v460 = vadd.f32 %v151, %v459
    %v461 = vpop.f32.mrb[0].mxu0
    %v462 = vadd.f32 %v147, %v461
    %v463 = vpop.f32.mrb[0].mxu0
    %v464 = vadd.f32 %v151, %v463
    %465 = vdwg.mxu0
    %466 = vmatprep.subr.bf16.mxu0 %v211
    %467 = vmatpush1.bf16.msra.mxu0 %v210
    %468 = vmatprep.subr.bf16.mxu0 0
    %469 = vmatpush1.bf16.msra.mxu0 0
    %470 = vmatprep.subr.bf16.mxu0 0
    %471 = vmatpush1.bf16.msra.mxu0 0
    %472 = vmatprep.subr.bf16.mxu0 0
    %473 = vmatpush1.bf16.msra.mxu0 0
    %474 = vmatprep.subr.bf16.mxu0 0
    %475 = vmatpush1.bf16.msra.mxu0 0
    %476 = vmatprep.subr.bf16.mxu0 0
    %477 = vmatpush1.bf16.msra.mxu0 0
    %478 = vmatprep.subr.bf16.mxu0 0
    %479 = vmatpush1.bf16.msra.mxu0 0
    %480 = vmatprep.subr.bf16.mxu0 0
    %481 = vmatpush1.bf16.msra.mxu0 0
    %482 = vmatprep.subr.bf16.mxu0 0
    %483 = vmatpush1.bf16.msra.mxu0 0
    %484 = vmatprep.subr.bf16.mxu0 0
    %485 = vmatpush1.bf16.msra.mxu0 0
    %486 = vmatprep.subr.bf16.mxu0 0
    %487 = vmatpush1.bf16.msra.mxu0 0
    %488 = vmatprep.subr.bf16.mxu0 0
    %489 = vmatpush1.bf16.msra.mxu0 0
    %490 = vmatprep.subr.bf16.mxu0 0
    %491 = vmatpush1.bf16.msra.mxu0 0
    %492 = vmatprep.subr.bf16.mxu0 0
    %493 = vmatpush1.bf16.msra.mxu0 0
    %494 = vmatprep.subr.bf16.mxu0 0
    %495 = vmatpush1.bf16.msra.mxu0 0
    %496 = vmatprep.subr.bf16.mxu0 0
    %497 = vmatpush1.bf16.msra.mxu0 0
    %498 = vmatprep.mubr.bf16.mxu0 0
    %499 = vmatmul.mubr.bf16.gmra.mrb[0].mxu0 %v226
    %v500 = vpop.f32.mrb[0].mxu0
    %v501 = vadd.f32 %v155, %v500
    %v502 = vpop.f32.mrb[0].mxu0
    %v503 = vadd.f32 %v159, %v502
    %v504 = vpop.f32.mrb[0].mxu0
    %v505 = vadd.f32 %v155, %v504
    %v506 = vpop.f32.mrb[0].mxu0
    %v507 = vadd.f32 %v159, %v506
    %508 = vmatprep.mubr.bf16.mxu0 0
    %509 = vmatmul.mubr.bf16.gmra.mrb[0].mxu0 %v229
    %v510 = vpop.f32.mrb[0].mxu0
    %v511 = vadd.f32 %v155, %v510
    %v512 = vpop.f32.mrb[0].mxu0
    %v513 = vadd.f32 %v159, %v512
    %v514 = vpop.f32.mrb[0].mxu0
    %v515 = vadd.f32 %v155, %v514
    %v516 = vpop.f32.mrb[0].mxu0
    %v517 = vadd.f32 %v159, %v516
    %518 = vmatprep.mubr.bf16.mxu0 0
    %519 = vmatmul.mubr.bf16.gmra.mrb[0].mxu0 %v232
    %v520 = vpop.f32.mrb[0].mxu0
    %v521 = vadd.f32 %v155, %v520
    %v522 = vpop.f32.mrb[0].mxu0
    %v523 = vadd.f32 %v159, %v522
    %v524 = vpop.f32.mrb[0].mxu0
    %v525 = vadd.f32 %v155, %v524
    %v526 = vpop.f32.mrb[0].mxu0
    %v527 = vadd.f32 %v159, %v526
    %528 = vmatprep.mubr.bf16.mxu0 0
    %529 = vmatmul.mubr.bf16.gmra.mrb[0].mxu0 %v235
    %v530 = vpop.f32.mrb[0].mxu0
    %v531 = vadd.f32 %v155, %v530
    %v532 = vpop.f32.mrb[0].mxu0
    %v533 = vadd.f32 %v159, %v532
    %v534 = vpop.f32.mrb[0].mxu0
    %v535 = vadd.f32 %v155, %v534
    %v536 = vpop.f32.mrb[0].mxu0
    %v537 = vadd.f32 %v159, %v536
    %538 = vmatprep.mubr.bf16.mxu0 0
    %539 = vmatmul.mubr.bf16.gmra.mrb[0].mxu0 %v238
    %v540 = vpop.f32.mrb[0].mxu0
    %v541 = vadd.f32 %v155, %v540
    %v542 = vpop.f32.mrb[0].mxu0
    %v543 = vadd.f32 %v159, %v542
    %v544 = vpop.f32.mrb[0].mxu0
    %v545 = vadd.f32 %v155, %v544
    %v546 = vpop.f32.mrb[0].mxu0
    %v547 = vadd.f32 %v159, %v546
    %548 = vmatprep.mubr.bf16.mxu0 0
    %549 = vmatmul.mubr.bf16.gmra.mrb[0].mxu0 %v241
    %v550 = vpop.f32.mrb[0].mxu0
    %v551 = vadd.f32 %v155, %v550
    %v552 = vpop.f32.mrb[0].mxu0
    %v553 = vadd.f32 %v159, %v552
    %v554 = vpop.f32.mrb[0].mxu0
    %v555 = vadd.f32 %v155, %v554
    %v556 = vpop.f32.mrb[0].mxu0
    %v557 = vadd.f32 %v159, %v556
    %558 = vmatprep.mubr.bf16.mxu0 0
    %559 = vmatmul.mubr.bf16.gmra.mrb[0].mxu0 %v244
    %v560 = vpop.f32.mrb[0].mxu0
    %v561 = vadd.f32 %v155, %v560
    %v562 = vpop.f32.mrb[0].mxu0
    %v563 = vadd.f32 %v159, %v562
    %v564 = vpop.f32.mrb[0].mxu0
    %v565 = vadd.f32 %v155, %v564
    %v566 = vpop.f32.mrb[0].mxu0
    %v567 = vadd.f32 %v159, %v566
    %568 = vmatprep.mubr.bf16.mxu0 0
    %569 = vmatmul.mubr.bf16.gmra.mrb[0].mxu0 %v247
    %v570 = vpop.f32.mrb[0].mxu0
    %v571 = vadd.f32 %v155, %v570
    %v572 = vpop.f32.mrb[0].mxu0
    %v573 = vadd.f32 %v159, %v572
    %v574 = vpop.f32.mrb[0].mxu0
    %v575 = vadd.f32 %v155, %v574
    %v576 = vpop.f32.mrb[0].mxu0
    %v577 = vadd.f32 %v159, %v576
    %578 = vmatprep.mubr.bf16.mxu0 0
    %579 = vmatmul.mubr.bf16.gmra.mrb[0].mxu0 %v250
    %v580 = vpop.f32.mrb[0].mxu0
    %v581 = vadd.f32 %v155, %v580
    %v582 = vpop.f32.mrb[0].mxu0
    %v583 = vadd.f32 %v159, %v582
    %v584 = vpop.f32.mrb[0].mxu0
    %v585 = vadd.f32 %v155, %v584
    %v586 = vpop.f32.mrb[0].mxu0
    %v587 = vadd.f32 %v159, %v586
    %588 = vmatprep.mubr.bf16.mxu0 0
    %589 = vmatmul.mubr.bf16.gmra.mrb[0].mxu0 %v253
    %v590 = vpop.f32.mrb[0].mxu0
    %v591 = vadd.f32 %v155, %v590
    %v592 = vpop.f32.mrb[0].mxu0
    %v593 = vadd.f32 %v159, %v592
    %v594 = vpop.f32.mrb[0].mxu0
    %v595 = vadd.f32 %v155, %v594
    %v596 = vpop.f32.mrb[0].mxu0
    %v597 = vadd.f32 %v159, %v596
    %598 = vmatprep.mubr.bf16.mxu0 0
    %599 = vmatmul.mubr.bf16.gmra.mrb[0].mxu0 %v256
    %v600 = vpop.f32.mrb[0].mxu0
    %v601 = vadd.f32 %v155, %v600
    %v602 = vpop.f32.mrb[0].mxu0
    %v603 = vadd.f32 %v159, %v602
    %v604 = vpop.f32.mrb[0].mxu0
    %v605 = vadd.f32 %v155, %v604
    %v606 = vpop.f32.mrb[0].mxu0
    %v607 = vadd.f32 %v159, %v606
    %608 = vmatprep.mubr.bf16.mxu0 0
    %609 = vmatmul.mubr.bf16.gmra.mrb[0].mxu0 %v259
    %v610 = vpop.f32.mrb[0].mxu0
    %v611 = vadd.f32 %v155, %v610
    %v612 = vpop.f32.mrb[0].mxu0
    %v613 = vadd.f32 %v159, %v612
    %v614 = vpop.f32.mrb[0].mxu0
    %v615 = vadd.f32 %v155, %v614
    %v616 = vpop.f32.mrb[0].mxu0
    %v617 = vadd.f32 %v159, %v616
    %618 = vmatprep.mubr.bf16.mxu0 0
    %619 = vmatmul.mubr.bf16.gmra.mrb[0].mxu0 %v262
    %v620 = vpop.f32.mrb[0].mxu0
    %v621 = vadd.f32 %v155, %v620
    %v622 = vpop.f32.mrb[0].mxu0
    %v623 = vadd.f32 %v159, %v622
    %v624 = vpop.f32.mrb[0].mxu0
    %v625 = vadd.f32 %v155, %v624
    %v626 = vpop.f32.mrb[0].mxu0
    %v627 = vadd.f32 %v159, %v626
    %628 = vmatprep.mubr.bf16.mxu0 0
    %629 = vmatmul.mubr.bf16.gmra.mrb[0].mxu0 %v265
    %v630 = vpop.f32.mrb[0].mxu0
    %v631 = vadd.f32 %v155, %v630
    %v632 = vpop.f32.mrb[0].mxu0
    %v633 = vadd.f32 %v159, %v632
    %v634 = vpop.f32.mrb[0].mxu0
    %v635 = vadd.f32 %v155, %v634
    %v636 = vpop.f32.mrb[0].mxu0
    %v637 = vadd.f32 %v159, %v636
    %638 = vmatprep.mubr.bf16.mxu0 0
    %639 = vmatmul.mubr.bf16.gmra.mrb[0].mxu0 %v268
    %v640 = vpop.f32.mrb[0].mxu0
    %v641 = vadd.f32 %v155, %v640
    %v642 = vpop.f32.mrb[0].mxu0
    %v643 = vadd.f32 %v159, %v642
    %v644 = vpop.f32.mrb[0].mxu0
    %v645 = vadd.f32 %v155, %v644
    %v646 = vpop.f32.mrb[0].mxu0
    %v647 = vadd.f32 %v159, %v646
    %648 = vmatprep.mubr.bf16.mxu0 0
    %649 = vmatmul.mubr.bf16.gmra.mrb[0].mxu0 %v271
    %v650 = vpop.f32.mrb[0].mxu0
    %v651 = vadd.f32 %v155, %v650
    %v652 = vpop.f32.mrb[0].mxu0
    %v653 = vadd.f32 %v159, %v652
    %v654 = vpop.f32.mrb[0].mxu0
    %v655 = vadd.f32 %v155, %v654
    %v656 = vpop.f32.mrb[0].mxu0
    %v657 = vadd.f32 %v159, %v656
    %658 = vdwg.mxu0
    %659 = vmatprep.subr.bf16.mxu0 %v213
    %660 = vmatpush1.bf16.msra.mxu0 %v212
    %661 = vmatprep.subr.bf16.mxu0 0
    %662 = vmatpush1.bf16.msra.mxu0 0
    %663 = vmatprep.subr.bf16.mxu0 0
    %664 = vmatpush1.bf16.msra.mxu0 0
    %665 = vmatprep.subr.bf16.mxu0 0
    %666 = vmatpush1.bf16.msra.mxu0 0
    %667 = vmatprep.subr.bf16.mxu0 0
    %668 = vmatpush1.bf16.msra.mxu0 0
    %669 = vmatprep.subr.bf16.mxu0 0
    %670 = vmatpush1.bf16.msra.mxu0 0
    %671 = vmatprep.subr.bf16.mxu0 0
    %672 = vmatpush1.bf16.msra.mxu0 0
    %673 = vmatprep.subr.bf16.mxu0 0
    %674 = vmatpush1.bf16.msra.mxu0 0
    %675 = vmatprep.subr.bf16.mxu0 0
    %676 = vmatpush1.bf16.msra.mxu0 0
    %677 = vmatprep.subr.bf16.mxu0 0
    %678 = vmatpush1.bf16.msra.mxu0 0
    %679 = vmatprep.subr.bf16.mxu0 0
    %680 = vmatpush1.bf16.msra.mxu0 0
    %681 = vmatprep.subr.bf16.mxu0 0
    %682 = vmatpush1.bf16.msra.mxu0 0
    %683 = vmatprep.subr.bf16.mxu0 0
    %684 = vmatpush1.bf16.msra.mxu0 0
    %685 = vmatprep.subr.bf16.mxu0 0
    %686 = vmatpush1.bf16.msra.mxu0 0
    %687 = vmatprep.subr.bf16.mxu0 0
    %688 = vmatpush1.bf16.msra.mxu0 0
    %689 = vmatprep.subr.bf16.mxu0 0
    %690 = vmatpush1.bf16.msra.mxu0 0
    %691 = vmatprep.mubr.bf16.mxu0 0
    %692 = vmatmul.mubr.bf16.gmra.mrb[0].mxu0 %v226
    %v693 = vpop.f32.mrb[0].mxu0
    %v694 = vadd.f32 %v163, %v693
    %v695 = vpop.f32.mrb[0].mxu0
    %v696 = vadd.f32 %v167, %v695
    %v697 = vpop.f32.mrb[0].mxu0
    %v698 = vadd.f32 %v163, %v697
    %v699 = vpop.f32.mrb[0].mxu0
    %v700 = vadd.f32 %v167, %v699
    %701 = vmatprep.mubr.bf16.mxu0 0
    %702 = vmatmul.mubr.bf16.gmra.mrb[0].mxu0 %v229
    %v703 = vpop.f32.mrb[0].mxu0
    %v704 = vadd.f32 %v163, %v703
    %v705 = vpop.f32.mrb[0].mxu0
    %v706 = vadd.f32 %v167, %v705
    %v707 = vpop.f32.mrb[0].mxu0
    %v708 = vadd.f32 %v163, %v707
    %v709 = vpop.f32.mrb[0].mxu0
    %v710 = vadd.f32 %v167, %v709
    %711 = vmatprep.mubr.bf16.mxu0 0
    %712 = vmatmul.mubr.bf16.gmra.mrb[0].mxu0 %v232
    %v713 = vpop.f32.mrb[0].mxu0
    %v714 = vadd.f32 %v163, %v713
    %v715 = vpop.f32.mrb[0].mxu0
    %v716 = vadd.f32 %v167, %v715
    %v717 = vpop.f32.mrb[0].mxu0
    %v718 = vadd.f32 %v163, %v717
    %v719 = vpop.f32.mrb[0].mxu0
    %v720 = vadd.f32 %v167, %v719
    %721 = vmatprep.mubr.bf16.mxu0 0
    %722 = vmatmul.mubr.bf16.gmra.mrb[0].mxu0 %v235
    %v723 = vpop.f32.mrb[0].mxu0
    %v724 = vadd.f32 %v163, %v723
    %v725 = vpop.f32.mrb[0].mxu0
    %v726 = vadd.f32 %v167, %v725
    %v727 = vpop.f32.mrb[0].mxu0
    %v728 = vadd.f32 %v163, %v727
    %v729 = vpop.f32.mrb[0].mxu0
    %v730 = vadd.f32 %v167, %v729
    %731 = vmatprep.mubr.bf16.mxu0 0
    %732 = vmatmul.mubr.bf16.gmra.mrb[0].mxu0 %v238
    %v733 = vpop.f32.mrb[0].mxu0
    %v734 = vadd.f32 %v163, %v733
    %v735 = vpop.f32.mrb[0].mxu0
    %v736 = vadd.f32 %v167, %v735
    %v737 = vpop.f32.mrb[0].mxu0
    %v738 = vadd.f32 %v163, %v737
    %v739 = vpop.f32.mrb[0].mxu0
    %v740 = vadd.f32 %v167, %v739
    %741 = vmatprep.mubr.bf16.mxu0 0
    %742 = vmatmul.mubr.bf16.gmra.mrb[0].mxu0 %v241
    %v743 = vpop.f32.mrb[0].mxu0
    %v744 = vadd.f32 %v163, %v743
    %v745 = vpop.f32.mrb[0].mxu0
    %v746 = vadd.f32 %v167, %v745
    %v747 = vpop.f32.mrb[0].mxu0
    %v748 = vadd.f32 %v163, %v747
    %v749 = vpop.f32.mrb[0].mxu0
    %v750 = vadd.f32 %v167, %v749
    %751 = vmatprep.mubr.bf16.mxu0 0
    %752 = vmatmul.mubr.bf16.gmra.mrb[0].mxu0 %v244
    %v753 = vpop.f32.mrb[0].mxu0
    %v754 = vadd.f32 %v163, %v753
    %v755 = vpop.f32.mrb[0].mxu0
    %v756 = vadd.f32 %v167, %v755
    %v757 = vpop.f32.mrb[0].mxu0
    %v758 = vadd.f32 %v163, %v757
    %v759 = vpop.f32.mrb[0].mxu0
    %v760 = vadd.f32 %v167, %v759
    %761 = vmatprep.mubr.bf16.mxu0 0
    %762 = vmatmul.mubr.bf16.gmra.mrb[0].mxu0 %v247
    %v763 = vpop.f32.mrb[0].mxu0
    %v764 = vadd.f32 %v163, %v763
    %v765 = vpop.f32.mrb[0].mxu0
    %v766 = vadd.f32 %v167, %v765
    %v767 = vpop.f32.mrb[0].mxu0
    %v768 = vadd.f32 %v163, %v767
    %v769 = vpop.f32.mrb[0].mxu0
    %v770 = vadd.f32 %v167, %v769
    %771 = vmatprep.mubr.bf16.mxu0 0
    %772 = vmatmul.mubr.bf16.gmra.mrb[0].mxu0 %v250
    %v773 = vpop.f32.mrb[0].mxu0
    %v774 = vadd.f32 %v163, %v773
    %v775 = vpop.f32.mrb[0].mxu0
    %v776 = vadd.f32 %v167, %v775
    %v777 = vpop.f32.mrb[0].mxu0
    %v778 = vadd.f32 %v163, %v777
    %v779 = vpop.f32.mrb[0].mxu0
    %v780 = vadd.f32 %v167, %v779
    %781 = vmatprep.mubr.bf16.mxu0 0
    %782 = vmatmul.mubr.bf16.gmra.mrb[0].mxu0 %v253
    %v783 = vpop.f32.mrb[0].mxu0
    %v784 = vadd.f32 %v163, %v783
    %v785 = vpop.f32.mrb[0].mxu0
    %v786 = vadd.f32 %v167, %v785
    %v787 = vpop.f32.mrb[0].mxu0
    %v788 = vadd.f32 %v163, %v787
    %v789 = vpop.f32.mrb[0].mxu0
    %v790 = vadd.f32 %v167, %v789
    %791 = vmatprep.mubr.bf16.mxu0 0
    %792 = vmatmul.mubr.bf16.gmra.mrb[0].mxu0 %v256
    %v793 = vpop.f32.mrb[0].mxu0
    %v794 = vadd.f32 %v163, %v793
    %v795 = vpop.f32.mrb[0].mxu0
    %v796 = vadd.f32 %v167, %v795
    %v797 = vpop.f32.mrb[0].mxu0
    %v798 = vadd.f32 %v163, %v797
    %v799 = vpop.f32.mrb[0].mxu0
    %v800 = vadd.f32 %v167, %v799
    %801 = vmatprep.mubr.bf16.mxu0 0
    %802 = vmatmul.mubr.bf16.gmra.mrb[0].mxu0 %v259
    %v803 = vpop.f32.mrb[0].mxu0
    %v804 = vadd.f32 %v163, %v803
    %v805 = vpop.f32.mrb[0].mxu0
    %v806 = vadd.f32 %v167, %v805
    %v807 = vpop.f32.mrb[0].mxu0
    %v808 = vadd.f32 %v163, %v807
    %v809 = vpop.f32.mrb[0].mxu0
    %v810 = vadd.f32 %v167, %v809
    %811 = vmatprep.mubr.bf16.mxu0 0
    %812 = vmatmul.mubr.bf16.gmra.mrb[0].mxu0 %v262
    %v813 = vpop.f32.mrb[0].mxu0
    %v814 = vadd.f32 %v163, %v813
    %v815 = vpop.f32.mrb[0].mxu0
    %v816 = vadd.f32 %v167, %v815
    %v817 = vpop.f32.mrb[0].mxu0
    %v818 = vadd.f32 %v163, %v817
    %v819 = vpop.f32.mrb[0].mxu0
    %v820 = vadd.f32 %v167, %v819
    %821 = vmatprep.mubr.bf16.mxu0 0
    %822 = vmatmul.mubr.bf16.gmra.mrb[0].mxu0 %v265
    %v823 = vpop.f32.mrb[0].mxu0
    %v824 = vadd.f32 %v163, %v823
    %v825 = vpop.f32.mrb[0].mxu0
    %v826 = vadd.f32 %v167, %v825
    %v827 = vpop.f32.mrb[0].mxu0
    %v828 = vadd.f32 %v163, %v827
    %v829 = vpop.f32.mrb[0].mxu0
    %v830 = vadd.f32 %v167, %v829
    %831 = vmatprep.mubr.bf16.mxu0 0
    %832 = vmatmul.mubr.bf16.gmra.mrb[0].mxu0 %v268
    %v833 = vpop.f32.mrb[0].mxu0
    %v834 = vadd.f32 %v163, %v833
    %v835 = vpop.f32.mrb[0].mxu0
    %v836 = vadd.f32 %v167, %v835
    %v837 = vpop.f32.mrb[0].mxu0
    %v838 = vadd.f32 %v163, %v837
    %v839 = vpop.f32.mrb[0].mxu0
    %v840 = vadd.f32 %v167, %v839
    %841 = vmatprep.mubr.bf16.mxu0 0
    %842 = vmatmul.mubr.bf16.gmra.mrb[0].mxu0 %v271
    %v843 = vpop.f32.mrb[0].mxu0
    %v844 = vadd.f32 %v163, %v843
    %v845 = vpop.f32.mrb[0].mxu0
    %v846 = vadd.f32 %v167, %v845
    %v847 = vpop.f32.mrb[0].mxu0
    %v848 = vadd.f32 %v163, %v847
    %v849 = vpop.f32.mrb[0].mxu0
    %v850 = vadd.f32 %v167, %v849
    %851 = vdwg.mxu0
    %852 = vmatprep.subr.bf16.mxu0 %v215
    %853 = vmatpush1.bf16.msra.mxu0 %v214
    %854 = vmatprep.subr.bf16.mxu0 0
    %855 = vmatpush1.bf16.msra.mxu0 0
    %856 = vmatprep.subr.bf16.mxu0 0
    %857 = vmatpush1.bf16.msra.mxu0 0
    %858 = vmatprep.subr.bf16.mxu0 0
    %859 = vmatpush1.bf16.msra.mxu0 0
    %860 = vmatprep.subr.bf16.mxu0 0
    %861 = vmatpush1.bf16.msra.mxu0 0
    %862 = vmatprep.subr.bf16.mxu0 0
    %863 = vmatpush1.bf16.msra.mxu0 0
    %864 = vmatprep.subr.bf16.mxu0 0
    %865 = vmatpush1.bf16.msra.mxu0 0
    %866 = vmatprep.subr.bf16.mxu0 0
    %867 = vmatpush1.bf16.msra.mxu0 0
    %868 = vmatprep.subr.bf16.mxu0 0
    %869 = vmatpush1.bf16.msra.mxu0 0
    %870 = vmatprep.subr.bf16.mxu0 0
    %871 = vmatpush1.bf16.msra.mxu0 0
    %872 = vmatprep.subr.bf16.mxu0 0
    %873 = vmatpush1.bf16.msra.mxu0 0
    %874 = vmatprep.subr.bf16.mxu0 0
    %875 = vmatpush1.bf16.msra.mxu0 0
    %876 = vmatprep.subr.bf16.mxu0 0
    %877 = vmatpush1.bf16.msra.mxu0 0
    %878 = vmatprep.subr.bf16.mxu0 0
    %879 = vmatpush1.bf16.msra.mxu0 0
    %880 = vmatprep.subr.bf16.mxu0 0
    %881 = vmatpush1.bf16.msra.mxu0 0
    %882 = vmatprep.subr.bf16.mxu0 0
    %883 = vmatpush1.bf16.msra.mxu0 0
    %884 = vmatprep.mubr.bf16.mxu0 0
    %885 = vmatmul.mubr.bf16.gmra.mrb[0].mxu0 %v226
    %v886 = vpop.f32.mrb[0].mxu0
    %v887 = vadd.f32 %v171, %v886
    %v888 = vpop.f32.mrb[0].mxu0
    %v889 = vadd.f32 %v175, %v888
    %v890 = vpop.f32.mrb[0].mxu0
    %v891 = vadd.f32 %v171, %v890
    %v892 = vpop.f32.mrb[0].mxu0
    %v893 = vadd.f32 %v175, %v892
    %894 = vmatprep.mubr.bf16.mxu0 0
    %895 = vmatmul.mubr.bf16.gmra.mrb[0].mxu0 %v229
    %v896 = vpop.f32.mrb[0].mxu0
    %v897 = vadd.f32 %v171, %v896
    %v898 = vpop.f32.mrb[0].mxu0
    %v899 = vadd.f32 %v175, %v898
    %v900 = vpop.f32.mrb[0].mxu0
    %v901 = vadd.f32 %v171, %v900
    %v902 = vpop.f32.mrb[0].mxu0
    %v903 = vadd.f32 %v175, %v902
    %904 = vmatprep.mubr.bf16.mxu0 0
    %905 = vmatmul.mubr.bf16.gmra.mrb[0].mxu0 %v232
    %v906 = vpop.f32.mrb[0].mxu0
    %v907 = vadd.f32 %v171, %v906
    %v908 = vpop.f32.mrb[0].mxu0
    %v909 = vadd.f32 %v175, %v908
    %v910 = vpop.f32.mrb[0].mxu0
    %v911 = vadd.f32 %v171, %v910
    %v912 = vpop.f32.mrb[0].mxu0
    %v913 = vadd.f32 %v175, %v912
    %914 = vmatprep.mubr.bf16.mxu0 0
    %915 = vmatmul.mubr.bf16.gmra.mrb[0].mxu0 %v235
    %v916 = vpop.f32.mrb[0].mxu0
    %v917 = vadd.f32 %v171, %v916
    %v918 = vpop.f32.mrb[0].mxu0
    %v919 = vadd.f32 %v175, %v918
    %v920 = vpop.f32.mrb[0].mxu0
    %v921 = vadd.f32 %v171, %v920
    %v922 = vpop.f32.mrb[0].mxu0
    %v923 = vadd.f32 %v175, %v922
    %924 = vmatprep.mubr.bf16.mxu0 0
    %925 = vmatmul.mubr.bf16.gmra.mrb[0].mxu0 %v238
    %v926 = vpop.f32.mrb[0].mxu0
    %v927 = vadd.f32 %v171, %v926
    %v928 = vpop.f32.mrb[0].mxu0
    %v929 = vadd.f32 %v175, %v928
    %v930 = vpop.f32.mrb[0].mxu0
    %v931 = vadd.f32 %v171, %v930
    %v932 = vpop.f32.mrb[0].mxu0
    %v933 = vadd.f32 %v175, %v932
    %934 = vmatprep.mubr.bf16.mxu0 0
    %935 = vmatmul.mubr.bf16.gmra.mrb[0].mxu0 %v241
    %v936 = vpop.f32.mrb[0].mxu0
    %v937 = vadd.f32 %v171, %v936
    %v938 = vpop.f32.mrb[0].mxu0
    %v939 = vadd.f32 %v175, %v938
    %v940 = vpop.f32.mrb[0].mxu0
    %v941 = vadd.f32 %v171, %v940
    %v942 = vpop.f32.mrb[0].mxu0
    %v943 = vadd.f32 %v175, %v942
    %944 = vmatprep.mubr.bf16.mxu0 0
    %945 = vmatmul.mubr.bf16.gmra.mrb[0].mxu0 %v244
    %v946 = vpop.f32.mrb[0].mxu0
    %v947 = vadd.f32 %v171, %v946
    %v948 = vpop.f32.mrb[0].mxu0
    %v949 = vadd.f32 %v175, %v948
    %v950 = vpop.f32.mrb[0].mxu0
    %v951 = vadd.f32 %v171, %v950
    %v952 = vpop.f32.mrb[0].mxu0
    %v953 = vadd.f32 %v175, %v952
    %954 = vmatprep.mubr.bf16.mxu0 0
    %955 = vmatmul.mubr.bf16.gmra.mrb[0].mxu0 %v247
    %v956 = vpop.f32.mrb[0].mxu0
    %v957 = vadd.f32 %v171, %v956
    %v958 = vpop.f32.mrb[0].mxu0
    %v959 = vadd.f32 %v175, %v958
    %v960 = vpop.f32.mrb[0].mxu0
    %v961 = vadd.f32 %v171, %v960
    %v962 = vpop.f32.mrb[0].mxu0
    %v963 = vadd.f32 %v175, %v962
    %964 = vmatprep.mubr.bf16.mxu0 0
    %965 = vmatmul.mubr.bf16.gmra.mrb[0].mxu0 %v250
    %v966 = vpop.f32.mrb[0].mxu0
    %v967 = vadd.f32 %v171, %v966
    %v968 = vpop.f32.mrb[0].mxu0
    %v969 = vadd.f32 %v175, %v968
    %v970 = vpop.f32.mrb[0].mxu0
    %v971 = vadd.f32 %v171, %v970
    %v972 = vpop.f32.mrb[0].mxu0
    %v973 = vadd.f32 %v175, %v972
    %974 = vmatprep.mubr.bf16.mxu0 0
    %975 = vmatmul.mubr.bf16.gmra.mrb[0].mxu0 %v253
    %v976 = vpop.f32.mrb[0].mxu0
    %v977 = vadd.f32 %v171, %v976
    %v978 = vpop.f32.mrb[0].mxu0
    %v979 = vadd.f32 %v175, %v978
    %v980 = vpop.f32.mrb[0].mxu0
    %v981 = vadd.f32 %v171, %v980
    %v982 = vpop.f32.mrb[0].mxu0
    %v983 = vadd.f32 %v175, %v982
    %984 = vmatprep.mubr.bf16.mxu0 0
    %985 = vmatmul.mubr.bf16.gmra.mrb[0].mxu0 %v256
    %v986 = vpop.f32.mrb[0].mxu0
    %v987 = vadd.f32 %v171, %v986
    %v988 = vpop.f32.mrb[0].mxu0
    %v989 = vadd.f32 %v175, %v988
    %v990 = vpop.f32.mrb[0].mxu0
    %v991 = vadd.f32 %v171, %v990
    %v992 = vpop.f32.mrb[0].mxu0
    %v993 = vadd.f32 %v175, %v992
    %994 = vmatprep.mubr.bf16.mxu0 0
    %995 = vmatmul.mubr.bf16.gmra.mrb[0].mxu0 %v259
    %v996 = vpop.f32.mrb[0].mxu0
    %v997 = vadd.f32 %v171, %v996
    %v998 = vpop.f32.mrb[0].mxu0
    %v999 = vadd.f32 %v175, %v998
    %v1000 = vpop.f32.mrb[0].mxu0
    %v1001 = vadd.f32 %v171, %v1000
    %v1002 = vpop.f32.mrb[0].mxu0
    %v1003 = vadd.f32 %v175, %v1002
    %1004 = vmatprep.mubr.bf16.mxu0 0
    %1005 = vmatmul.mubr.bf16.gmra.mrb[0].mxu0 %v262
    %v1006 = vpop.f32.mrb[0].mxu0
    %v1007 = vadd.f32 %v171, %v1006
    %v1008 = vpop.f32.mrb[0].mxu0
    %v1009 = vadd.f32 %v175, %v1008
    %v1010 = vpop.f32.mrb[0].mxu0
    %v1011 = vadd.f32 %v171, %v1010
    %v1012 = vpop.f32.mrb[0].mxu0
    %v1013 = vadd.f32 %v175, %v1012
    %1014 = vmatprep.mubr.bf16.mxu0 0
    %1015 = vmatmul.mubr.bf16.gmra.mrb[0].mxu0 %v265
    %v1016 = vpop.f32.mrb[0].mxu0
    %v1017 = vadd.f32 %v171, %v1016
    %v1018 = vpop.f32.mrb[0].mxu0
    %v1019 = vadd.f32 %v175, %v1018
    %v1020 = vpop.f32.mrb[0].mxu0
    %v1021 = vadd.f32 %v171, %v1020
    %v1022 = vpop.f32.mrb[0].mxu0
    %v1023 = vadd.f32 %v175, %v1022
    %1024 = vmatprep.mubr.bf16.mxu0 0
    %1025 = vmatmul.mubr.bf16.gmra.mrb[0].mxu0 %v268
    %v1026 = vpop.f32.mrb[0].mxu0
    %v1027 = vadd.f32 %v171, %v1026
    %v1028 = vpop.f32.mrb[0].mxu0
    %v1029 = vadd.f32 %v175, %v1028
    %v1030 = vpop.f32.mrb[0].mxu0
    %v1031 = vadd.f32 %v171, %v1030
    %v1032 = vpop.f32.mrb[0].mxu0
    %v1033 = vadd.f32 %v175, %v1032
    %1034 = vmatprep.mubr.bf16.mxu0 0
    %1035 = vmatmul.mubr.bf16.gmra.mrb[0].mxu0 %v271
    %v1036 = vpop.f32.mrb[0].mxu0
    %v1037 = vadd.f32 %v171, %v1036
    %v1038 = vpop.f32.mrb[0].mxu0
    %v1039 = vadd.f32 %v175, %v1038
    %v1040 = vpop.f32.mrb[0].mxu0
    %v1041 = vadd.f32 %v171, %v1040
    %v1042 = vpop.f32.mrb[0].mxu0
    %v1043 = vadd.f32 %v175, %v1042
    %1044 = vdwg.mxu0
    %v1045 = vmax.f32 %v308, 0.0
    %v1046 = vmax.f32 %v310, 0.0
    %v1047 = vmax.f32 %v501, 0.0
    %v1048 = vmax.f32 %v503, 0.0
    %v1049 = vmax.f32 %v694, 0.0
    %v1050 = vmax.f32 %v696, 0.0
    %v1051 = vmax.f32 %v887, 0.0
    %v1052 = vmax.f32 %v889, 0.0
    %v1053 = vmax.f32 %v312, 0.0
    %v1054 = vmax.f32 %v314, 0.0
    %v1055 = vmax.f32 %v505, 0.0
    %v1056 = vmax.f32 %v507, 0.0
    %v1057 = vmax.f32 %v698, 0.0
    %v1058 = vmax.f32 %v700, 0.0
    %v1059 = vmax.f32 %v891, 0.0
    %v1060 = vmax.f32 %v893, 0.0
    %v1061 = vmax.f32 %v318, 0.0
    %v1062 = vmax.f32 %v320, 0.0
    %v1063 = vmax.f32 %v511, 0.0
    %v1064 = vmax.f32 %v513, 0.0
    %v1065 = vmax.f32 %v704, 0.0
    %v1066 = vmax.f32 %v706, 0.0
    %v1067 = vmax.f32 %v897, 0.0
    %v1068 = vmax.f32 %v899, 0.0
    %v1069 = vmax.f32 %v322, 0.0
    %v1070 = vmax.f32 %v324, 0.0
    %v1071 = vmax.f32 %v515, 0.0
    %v1072 = vmax.f32 %v517, 0.0
    %v1073 = vmax.f32 %v708, 0.0
    %v1074 = vmax.f32 %v710, 0.0
    %v1075 = vmax.f32 %v901, 0.0
    %v1076 = vmax.f32 %v903, 0.0
    %v1077 = vmax.f32 %v328, 0.0
    %v1078 = vmax.f32 %v330, 0.0
    %v1079 = vmax.f32 %v521, 0.0
    %v1080 = vmax.f32 %v523, 0.0
    %v1081 = vmax.f32 %v714, 0.0
    %v1082 = vmax.f32 %v716, 0.0
    %v1083 = vmax.f32 %v907, 0.0
    %v1084 = vmax.f32 %v909, 0.0
    %v1085 = vmax.f32 %v332, 0.0
    %v1086 = vmax.f32 %v334, 0.0
    %v1087 = vmax.f32 %v525, 0.0
    %v1088 = vmax.f32 %v527, 0.0
    %v1089 = vmax.f32 %v718, 0.0
    %v1090 = vmax.f32 %v720, 0.0
    %v1091 = vmax.f32 %v911, 0.0
    %v1092 = vmax.f32 %v913, 0.0
    %v1093 = vmax.f32 %v338, 0.0
    %v1094 = vmax.f32 %v340, 0.0
    %v1095 = vmax.f32 %v531, 0.0
    %v1096 = vmax.f32 %v533, 0.0
    %v1097 = vmax.f32 %v724, 0.0
    %v1098 = vmax.f32 %v726, 0.0
    %v1099 = vmax.f32 %v917, 0.0
    %v1100 = vmax.f32 %v919, 0.0
    %v1101 = vmax.f32 %v342, 0.0
    %v1102 = vmax.f32 %v344, 0.0
    %v1103 = vmax.f32 %v535, 0.0
    %v1104 = vmax.f32 %v537, 0.0
    %v1105 = vmax.f32 %v728, 0.0
    %v1106 = vmax.f32 %v730, 0.0
    %v1107 = vmax.f32 %v921, 0.0
    %v1108 = vmax.f32 %v923, 0.0
    %v1109 = vmax.f32 %v348, 0.0
    %v1110 = vmax.f32 %v350, 0.0
    %v1111 = vmax.f32 %v541, 0.0
    %v1112 = vmax.f32 %v543, 0.0
    %v1113 = vmax.f32 %v734, 0.0
    %v1114 = vmax.f32 %v736, 0.0
    %v1115 = vmax.f32 %v927, 0.0
    %v1116 = vmax.f32 %v929, 0.0
    %v1117 = vmax.f32 %v352, 0.0
    %v1118 = vmax.f32 %v354, 0.0
    %v1119 = vmax.f32 %v545, 0.0
    %v1120 = vmax.f32 %v547, 0.0
    %v1121 = vmax.f32 %v738, 0.0
    %v1122 = vmax.f32 %v740, 0.0
    %v1123 = vmax.f32 %v931, 0.0
    %v1124 = vmax.f32 %v933, 0.0
    %v1125 = vmax.f32 %v358, 0.0
    %v1126 = vmax.f32 %v360, 0.0
    %v1127 = vmax.f32 %v551, 0.0
    %v1128 = vmax.f32 %v553, 0.0
    %v1129 = vmax.f32 %v744, 0.0
    %v1130 = vmax.f32 %v746, 0.0
    %v1131 = vmax.f32 %v937, 0.0
    %v1132 = vmax.f32 %v939, 0.0
    %v1133 = vmax.f32 %v362, 0.0
    %v1134 = vmax.f32 %v364, 0.0
    %v1135 = vmax.f32 %v555, 0.0
    %v1136 = vmax.f32 %v557, 0.0
    %v1137 = vmax.f32 %v748, 0.0
    %v1138 = vmax.f32 %v750, 0.0
    %v1139 = vmax.f32 %v941, 0.0
    %v1140 = vmax.f32 %v943, 0.0
    %v1141 = vmax.f32 %v368, 0.0
    %v1142 = vmax.f32 %v370, 0.0
    %v1143 = vmax.f32 %v561, 0.0
    %v1144 = vmax.f32 %v563, 0.0
    %v1145 = vmax.f32 %v754, 0.0
    %v1146 = vmax.f32 %v756, 0.0
    %v1147 = vmax.f32 %v947, 0.0
    %v1148 = vmax.f32 %v949, 0.0
    %v1149 = vmax.f32 %v372, 0.0
    %v1150 = vmax.f32 %v374, 0.0
    %v1151 = vmax.f32 %v565, 0.0
    %v1152 = vmax.f32 %v567, 0.0
    %v1153 = vmax.f32 %v758, 0.0
    %v1154 = vmax.f32 %v760, 0.0
    %v1155 = vmax.f32 %v951, 0.0
    %v1156 = vmax.f32 %v953, 0.0
    %v1157 = vmax.f32 %v378, 0.0
    %v1158 = vmax.f32 %v380, 0.0
    %v1159 = vmax.f32 %v571, 0.0
    %v1160 = vmax.f32 %v573, 0.0
    %v1161 = vmax.f32 %v764, 0.0
    %v1162 = vmax.f32 %v766, 0.0
    %v1163 = vmax.f32 %v957, 0.0
    %v1164 = vmax.f32 %v959, 0.0
    %v1165 = vmax.f32 %v382, 0.0
    %v1166 = vmax.f32 %v384, 0.0
    %v1167 = vmax.f32 %v575, 0.0
    %v1168 = vmax.f32 %v577, 0.0
    %v1169 = vmax.f32 %v768, 0.0
    %v1170 = vmax.f32 %v770, 0.0
    %v1171 = vmax.f32 %v961, 0.0
    %v1172 = vmax.f32 %v963, 0.0
    %v1173 = vmax.f32 %v388, 0.0
    %v1174 = vmax.f32 %v390, 0.0
    %v1175 = vmax.f32 %v581, 0.0
    %v1176 = vmax.f32 %v583, 0.0
    %v1177 = vmax.f32 %v774, 0.0
    %v1178 = vmax.f32 %v776, 0.0
    %v1179 = vmax.f32 %v967, 0.0
    %v1180 = vmax.f32 %v969, 0.0
    %v1181 = vmax.f32 %v392, 0.0
    %v1182 = vmax.f32 %v394, 0.0
    %v1183 = vmax.f32 %v585, 0.0
    %v1184 = vmax.f32 %v587, 0.0
    %v1185 = vmax.f32 %v778, 0.0
    %v1186 = vmax.f32 %v780, 0.0
    %v1187 = vmax.f32 %v971, 0.0
    %v1188 = vmax.f32 %v973, 0.0
    %v1189 = vmax.f32 %v398, 0.0
    %v1190 = vmax.f32 %v400, 0.0
    %v1191 = vmax.f32 %v591, 0.0
    %v1192 = vmax.f32 %v593, 0.0
    %v1193 = vmax.f32 %v784, 0.0
    %v1194 = vmax.f32 %v786, 0.0
    %v1195 = vmax.f32 %v977, 0.0
    %v1196 = vmax.f32 %v979, 0.0
    %v1197 = vmax.f32 %v402, 0.0
    %v1198 = vmax.f32 %v404, 0.0
    %v1199 = vmax.f32 %v595, 0.0
    %v1200 = vmax.f32 %v597, 0.0
    %v1201 = vmax.f32 %v788, 0.0
    %v1202 = vmax.f32 %v790, 0.0
    %v1203 = vmax.f32 %v981, 0.0
    %v1204 = vmax.f32 %v983, 0.0
    %v1205 = vmax.f32 %v408, 0.0
    %v1206 = vmax.f32 %v410, 0.0
    %v1207 = vmax.f32 %v601, 0.0
    %v1208 = vmax.f32 %v603, 0.0
    %v1209 = vmax.f32 %v794, 0.0
    %v1210 = vmax.f32 %v796, 0.0
    %v1211 = vmax.f32 %v987, 0.0
    %v1212 = vmax.f32 %v989, 0.0
    %v1213 = vmax.f32 %v412, 0.0
    %v1214 = vmax.f32 %v414, 0.0
    %v1215 = vmax.f32 %v605, 0.0
    %v1216 = vmax.f32 %v607, 0.0
    %v1217 = vmax.f32 %v798, 0.0
    %v1218 = vmax.f32 %v800, 0.0
    %v1219 = vmax.f32 %v991, 0.0
    %v1220 = vmax.f32 %v993, 0.0
    %v1221 = vmax.f32 %v418, 0.0
    %v1222 = vmax.f32 %v420, 0.0
    %v1223 = vmax.f32 %v611, 0.0
    %v1224 = vmax.f32 %v613, 0.0
    %v1225 = vmax.f32 %v804, 0.0
    %v1226 = vmax.f32 %v806, 0.0
    %v1227 = vmax.f32 %v997, 0.0
    %v1228 = vmax.f32 %v999, 0.0
    %v1229 = vmax.f32 %v422, 0.0
    %v1230 = vmax.f32 %v424, 0.0
    %v1231 = vmax.f32 %v615, 0.0
    %v1232 = vmax.f32 %v617, 0.0
    %v1233 = vmax.f32 %v808, 0.0
    %v1234 = vmax.f32 %v810, 0.0
    %v1235 = vmax.f32 %v1001, 0.0
    %v1236 = vmax.f32 %v1003, 0.0
    %v1237 = vmax.f32 %v428, 0.0
    %v1238 = vmax.f32 %v430, 0.0
    %v1239 = vmax.f32 %v621, 0.0
    %v1240 = vmax.f32 %v623, 0.0
    %v1241 = vmax.f32 %v814, 0.0
    %v1242 = vmax.f32 %v816, 0.0
    %v1243 = vmax.f32 %v1007, 0.0
    %v1244 = vmax.f32 %v1009, 0.0
    %v1245 = vmax.f32 %v432, 0.0
    %v1246 = vmax.f32 %v434, 0.0
    %v1247 = vmax.f32 %v625, 0.0
    %v1248 = vmax.f32 %v627, 0.0
    %v1249 = vmax.f32 %v818, 0.0
    %v1250 = vmax.f32 %v820, 0.0
    %v1251 = vmax.f32 %v1011, 0.0
    %v1252 = vmax.f32 %v1013, 0.0
    %v1253 = vmax.f32 %v438, 0.0
    %v1254 = vmax.f32 %v440, 0.0
    %v1255 = vmax.f32 %v631, 0.0
    %v1256 = vmax.f32 %v633, 0.0
    %v1257 = vmax.f32 %v824, 0.0
    %v1258 = vmax.f32 %v826, 0.0
    %v1259 = vmax.f32 %v1017, 0.0
    %v1260 = vmax.f32 %v1019, 0.0
    %v1261 = vmax.f32 %v442, 0.0
    %v1262 = vmax.f32 %v444, 0.0
    %v1263 = vmax.f32 %v635, 0.0
    %v1264 = vmax.f32 %v637, 0.0
    %v1265 = vmax.f32 %v828, 0.0
    %v1266 = vmax.f32 %v830, 0.0
    %v1267 = vmax.f32 %v1021, 0.0
    %v1268 = vmax.f32 %v1023, 0.0
    %v1269 = vmax.f32 %v448, 0.0
    %v1270 = vmax.f32 %v450, 0.0
    %v1271 = vmax.f32 %v641, 0.0
    %v1272 = vmax.f32 %v643, 0.0
    %v1273 = vmax.f32 %v834, 0.0
    %v1274 = vmax.f32 %v836, 0.0
    %v1275 = vmax.f32 %v1027, 0.0
    %v1276 = vmax.f32 %v1029, 0.0
    %v1277 = vmax.f32 %v452, 0.0
    %v1278 = vmax.f32 %v454, 0.0
    %v1279 = vmax.f32 %v645, 0.0
    %v1280 = vmax.f32 %v647, 0.0
    %v1281 = vmax.f32 %v838, 0.0
    %v1282 = vmax.f32 %v840, 0.0
    %v1283 = vmax.f32 %v1031, 0.0
    %v1284 = vmax.f32 %v1033, 0.0
    %v1285 = vmax.f32 %v458, 0.0
    %v1286 = vmax.f32 %v460, 0.0
    %v1287 = vmax.f32 %v651, 0.0
    %v1288 = vmax.f32 %v653, 0.0
    %v1289 = vmax.f32 %v844, 0.0
    %v1290 = vmax.f32 %v846, 0.0
    %v1291 = vmax.f32 %v1037, 0.0
    %v1292 = vmax.f32 %v1039, 0.0
    %v1293 = vmax.f32 %v462, 0.0
    %v1294 = vmax.f32 %v464, 0.0
    %v1295 = vmax.f32 %v655, 0.0
    %v1296 = vmax.f32 %v657, 0.0
    %v1297 = vmax.f32 %v848, 0.0
    %v1298 = vmax.f32 %v850, 0.0
    %v1299 = vmax.f32 %v1041, 0.0
    %v1300 = vmax.f32 %v1043, 0.0
    %v1301 = vld [vmem:[#allocation4] sm:$0xff]
    %v1302 = vld [vmem:[#allocation4 + $0x8] sm:$0xff]
    %v1303 = vld [vmem:[#allocation4 + $0x10] sm:$0xff]
    %v1304 = vld [vmem:[#allocation4 + $0x18] sm:$0xff]
    %v1305 = vld [vmem:[#allocation4 + $0x20] sm:$0xff]
    %v1306 = vld [vmem:[#allocation4 + $0x28] sm:$0xff]
    %v1307 = vld [vmem:[#allocation4 + $0x30] sm:$0xff]
    %v1308 = vld [vmem:[#allocation4 + $0x38] sm:$0xff]
    %v1309 = vld [vmem:[#allocation4 + $0x40] sm:$0xff]
    %v1310 = vld [vmem:[#allocation4 + $0x48] sm:$0xff]
    %v1311 = vld [vmem:[#allocation4 + $0x50] sm:$0xff]
    %v1312 = vld [vmem:[#allocation4 + $0x58] sm:$0xff]
    %v1313 = vld [vmem:[#allocation4 + $0x60] sm:$0xff]
    %v1314 = vld [vmem:[#allocation4 + $0x68] sm:$0xff]
    %v1315 = vld [vmem:[#allocation4 + $0x70] sm:$0xff]
    %v1316 = vld [vmem:[#allocation4 + $0x78] sm:$0xff]
    %v1317 = vld [vmem:[#allocation4 + $0x80] sm:$0xff]
    %v1318 = vld [vmem:[#allocation4 + $0x88] sm:$0xff]
    %v1319 = vld [vmem:[#allocation4 + $0x90] sm:$0xff]
    %v1320 = vld [vmem:[#allocation4 + $0x98] sm:$0xff]
    %v1321 = vld [vmem:[#allocation4 + $0xa0] sm:$0xff]
    %v1322 = vld [vmem:[#allocation4 + $0xa8] sm:$0xff]
    %v1323 = vld [vmem:[#allocation4 + $0xb0] sm:$0xff]
    %v1324 = vld [vmem:[#allocation4 + $0xb8] sm:$0xff]
    %v1325 = vld [vmem:[#allocation4 + $0xc0] sm:$0xff]
    %v1326 = vld [vmem:[#allocation4 + $0xc8] sm:$0xff]
    %v1327 = vld [vmem:[#allocation4 + $0xd0] sm:$0xff]
    %v1328 = vld [vmem:[#allocation4 + $0xd8] sm:$0xff]
    %v1329 = vld [vmem:[#allocation4 + $0xe0] sm:$0xff]
    %v1330 = vld [vmem:[#allocation4 + $0xe8] sm:$0xff]
    %v1331 = vld [vmem:[#allocation4 + $0xf0] sm:$0xff]
    %v1332 = vld [vmem:[#allocation4 + $0xf8] sm:$0xff]
    %v1333 = vld [vmem:[#allocation4 + $0x100] sm:$0xff]
    %v1334 = vld [vmem:[#allocation4 + $0x108] sm:$0xff]
    %v1335 = vld [vmem:[#allocation4 + $0x110] sm:$0xff]
    %v1336 = vld [vmem:[#allocation4 + $0x118] sm:$0xff]
    %v1337 = vld [vmem:[#allocation4 + $0x120] sm:$0xff]
    %v1338 = vld [vmem:[#allocation4 + $0x128] sm:$0xff]
    %v1339 = vld [vmem:[#allocation4 + $0x130] sm:$0xff]
    %v1340 = vld [vmem:[#allocation4 + $0x138] sm:$0xff]
    %v1341 = vld [vmem:[#allocation4 + $0x140] sm:$0xff]
    %v1342 = vld [vmem:[#allocation4 + $0x148] sm:$0xff]
    %v1343 = vld [vmem:[#allocation4 + $0x150] sm:$0xff]
    %v1344 = vld [vmem:[#allocation4 + $0x158] sm:$0xff]
    %v1345 = vld [vmem:[#allocation4 + $0x160] sm:$0xff]
    %v1346 = vld [vmem:[#allocation4 + $0x168] sm:$0xff]
    %v1347 = vld [vmem:[#allocation4 + $0x170] sm:$0xff]
    %v1348 = vld [vmem:[#allocation4 + $0x178] sm:$0xff]
    %v1349 = vld [vmem:[#allocation4 + $0x180] sm:$0xff]
    %v1350 = vld [vmem:[#allocation4 + $0x188] sm:$0xff]
    %v1351 = vld [vmem:[#allocation4 + $0x190] sm:$0xff]
    %v1352 = vld [vmem:[#allocation4 + $0x198] sm:$0xff]
    %v1353 = vld [vmem:[#allocation4 + $0x1a0] sm:$0xff]
    %v1354 = vld [vmem:[#allocation4 + $0x1a8] sm:$0xff]
    %v1355 = vld [vmem:[#allocation4 + $0x1b0] sm:$0xff]
    %v1356 = vld [vmem:[#allocation4 + $0x1b8] sm:$0xff]
    %v1357 = vld [vmem:[#allocation4 + $0x1c0] sm:$0xff]
    %v1358 = vld [vmem:[#allocation4 + $0x1c8] sm:$0xff]
    %v1359 = vld [vmem:[#allocation4 + $0x1d0] sm:$0xff]
    %v1360 = vld [vmem:[#allocation4 + $0x1d8] sm:$0xff]
    %v1361 = vld [vmem:[#allocation4 + $0x1e0] sm:$0xff]
    %v1362 = vld [vmem:[#allocation4 + $0x1e8] sm:$0xff]
    %v1363 = vld [vmem:[#allocation4 + $0x1f0] sm:$0xff]
    %v1364 = vld [vmem:[#allocation4 + $0x1f8] sm:$0xff]
    %v1365 = vpack.c.bf16 %v1053, %v1045
    %v1366 = vpack.c.bf16 %v1054, %v1046
    %v1367 = vpack.c.bf16 %v1055, %v1047
    %v1368 = vpack.c.bf16 %v1056, %v1048
    %v1369 = vpack.c.bf16 %v1069, %v1061
    %v1370 = vpack.c.bf16 %v1070, %v1062
    %v1371 = vpack.c.bf16 %v1071, %v1063
    %v1372 = vpack.c.bf16 %v1072, %v1064
    %v1373 = vpack.c.bf16 %v1085, %v1077
    %v1374 = vpack.c.bf16 %v1086, %v1078
    %v1375 = vpack.c.bf16 %v1087, %v1079
    %v1376 = vpack.c.bf16 %v1088, %v1080
    %v1377 = vpack.c.bf16 %v1101, %v1093
    %v1378 = vpack.c.bf16 %v1102, %v1094
    %v1379 = vpack.c.bf16 %v1103, %v1095
    %v1380 = vpack.c.bf16 %v1104, %v1096
    %v1381 = vpack.c.bf16 %v1117, %v1109
    %v1382 = vpack.c.bf16 %v1118, %v1110
    %v1383 = vpack.c.bf16 %v1119, %v1111
    %v1384 = vpack.c.bf16 %v1120, %v1112
    %v1385 = vpack.c.bf16 %v1133, %v1125
    %v1386 = vpack.c.bf16 %v1134, %v1126
    %v1387 = vpack.c.bf16 %v1135, %v1127
    %v1388 = vpack.c.bf16 %v1136, %v1128
    %v1389 = vpack.c.bf16 %v1149, %v1141
    %v1390 = vpack.c.bf16 %v1150, %v1142
    %v1391 = vpack.c.bf16 %v1151, %v1143
    %v1392 = vpack.c.bf16 %v1152, %v1144
    %v1393 = vpack.c.bf16 %v1165, %v1157
    %v1394 = vpack.c.bf16 %v1166, %v1158
    %v1395 = vpack.c.bf16 %v1167, %v1159
    %v1396 = vpack.c.bf16 %v1168, %v1160
    %v1397 = vpack.c.bf16 %v1181, %v1173
    %v1398 = vpack.c.bf16 %v1182, %v1174
    %v1399 = vpack.c.bf16 %v1183, %v1175
    %v1400 = vpack.c.bf16 %v1184, %v1176
    %v1401 = vpack.c.bf16 %v1197, %v1189
    %v1402 = vpack.c.bf16 %v1198, %v1190
    %v1403 = vpack.c.bf16 %v1199, %v1191
    %v1404 = vpack.c.bf16 %v1200, %v1192
    %v1405 = vpack.c.bf16 %v1213, %v1205
    %v1406 = vpack.c.bf16 %v1214, %v1206
    %v1407 = vpack.c.bf16 %v1215, %v1207
    %v1408 = vpack.c.bf16 %v1216, %v1208
    %v1409 = vpack.c.bf16 %v1229, %v1221
    %v1410 = vpack.c.bf16 %v1230, %v1222
    %v1411 = vpack.c.bf16 %v1231, %v1223
    %v1412 = vpack.c.bf16 %v1232, %v1224
    %v1413 = vpack.c.bf16 %v1245, %v1237
    %v1414 = vpack.c.bf16 %v1246, %v1238
    %v1415 = vpack.c.bf16 %v1247, %v1239
    %v1416 = vpack.c.bf16 %v1248, %v1240
    %v1417 = vpack.c.bf16 %v1261, %v1253
    %v1418 = vpack.c.bf16 %v1262, %v1254
    %v1419 = vpack.c.bf16 %v1263, %v1255
    %v1420 = vpack.c.bf16 %v1264, %v1256
    %v1421 = vpack.c.bf16 %v1277, %v1269
    %v1422 = vpack.c.bf16 %v1278, %v1270
    %v1423 = vpack.c.bf16 %v1279, %v1271
    %v1424 = vpack.c.bf16 %v1280, %v1272
    %v1425 = vpack.c.bf16 %v1293, %v1285
    %v1426 = vpack.c.bf16 %v1294, %v1286
    %v1427 = vpack.c.bf16 %v1295, %v1287
    %v1428 = vpack.c.bf16 %v1296, %v1288
    %v1430 = vlaneseq
    %v1431 = vshrl.u32 %v1430, 7
    %v1432 = vsub.s32 0, %v1431
    %v1433 = vrot.slane %v115, %v1432
    %v1434 = vlaneseq
    %v1435 = vshrl.u32 %v1434, 7
    %v1436 = vsub.s32 1, %v1435
    %v1437 = vrot.slane %v115, %v1436
    %v1504 = vunpack.c.l.b16 %v1301
    %v1505 = vunpack.c.h.b16 %v1301
    %v1506 = vunpack.c.l.b16 %v1302
    %v1507 = vunpack.c.h.b16 %v1302
    %v1508 = vunpack.c.l.b16 %v1303
    %v1509 = vunpack.c.h.b16 %v1303
    %v1510 = vunpack.c.l.b16 %v1304
    %v1511 = vunpack.c.h.b16 %v1304
    %v1512 = vunpack.c.l.b16 %v1305
    %v1513 = vunpack.c.h.b16 %v1305
    %v1514 = vunpack.c.l.b16 %v1306
    %v1515 = vunpack.c.h.b16 %v1306
    %v1516 = vunpack.c.l.b16 %v1307
    %v1517 = vunpack.c.h.b16 %v1307
    %v1518 = vunpack.c.l.b16 %v1308
    %v1519 = vunpack.c.h.b16 %v1308
    %v1520 = vunpack.c.l.b16 %v1309
    %v1521 = vunpack.c.h.b16 %v1309
    %v1522 = vunpack.c.l.b16 %v1310
    %v1523 = vunpack.c.h.b16 %v1310
    %v1524 = vunpack.c.l.b16 %v1311
    %v1525 = vunpack.c.h.b16 %v1311
    %v1526 = vunpack.c.l.b16 %v1312
    %v1527 = vunpack.c.h.b16 %v1312
    %v1528 = vunpack.c.l.b16 %v1313
    %v1529 = vunpack.c.h.b16 %v1313
    %v1530 = vunpack.c.l.b16 %v1314
    %v1531 = vunpack.c.h.b16 %v1314
    %v1532 = vunpack.c.l.b16 %v1315
    %v1533 = vunpack.c.h.b16 %v1315
    %v1534 = vunpack.c.l.b16 %v1316
    %v1535 = vunpack.c.h.b16 %v1316
    %v1536 = vunpack.c.l.b16 %v1317
    %v1537 = vunpack.c.h.b16 %v1317
    %v1538 = vunpack.c.l.b16 %v1318
    %v1539 = vunpack.c.h.b16 %v1318
    %v1540 = vunpack.c.l.b16 %v1319
    %v1541 = vunpack.c.h.b16 %v1319
    %v1542 = vunpack.c.l.b16 %v1320
    %v1543 = vunpack.c.h.b16 %v1320
    %v1544 = vunpack.c.l.b16 %v1321
    %v1545 = vunpack.c.h.b16 %v1321
    %v1546 = vunpack.c.l.b16 %v1322
    %v1547 = vunpack.c.h.b16 %v1322
    %v1548 = vunpack.c.l.b16 %v1323
    %v1549 = vunpack.c.h.b16 %v1323
    %v1550 = vunpack.c.l.b16 %v1324
    %v1551 = vunpack.c.h.b16 %v1324
    %v1552 = vunpack.c.l.b16 %v1325
    %v1553 = vunpack.c.h.b16 %v1325
    %v1554 = vunpack.c.l.b16 %v1326
    %v1555 = vunpack.c.h.b16 %v1326
    %v1556 = vunpack.c.l.b16 %v1327
    %v1557 = vunpack.c.h.b16 %v1327
    %v1558 = vunpack.c.l.b16 %v1328
    %v1559 = vunpack.c.h.b16 %v1328
    %v1560 = vunpack.c.l.b16 %v1329
    %v1561 = vunpack.c.h.b16 %v1329
    %v1562 = vunpack.c.l.b16 %v1330
    %v1563 = vunpack.c.h.b16 %v1330
    %v1564 = vunpack.c.l.b16 %v1331
    %v1565 = vunpack.c.h.b16 %v1331
    %v1566 = vunpack.c.l.b16 %v1332
    %v1567 = vunpack.c.h.b16 %v1332
    %v1568 = vunpack.c.l.b16 %v1333
    %v1569 = vunpack.c.h.b16 %v1333
    %v1570 = vunpack.c.l.b16 %v1334
    %v1571 = vunpack.c.h.b16 %v1334
    %v1572 = vunpack.c.l.b16 %v1335
    %v1573 = vunpack.c.h.b16 %v1335
    %v1574 = vunpack.c.l.b16 %v1336
    %v1575 = vunpack.c.h.b16 %v1336
    %v1576 = vunpack.c.l.b16 %v1337
    %v1577 = vunpack.c.h.b16 %v1337
    %v1578 = vunpack.c.l.b16 %v1338
    %v1579 = vunpack.c.h.b16 %v1338
    %v1580 = vunpack.c.l.b16 %v1339
    %v1581 = vunpack.c.h.b16 %v1339
    %v1582 = vunpack.c.l.b16 %v1340
    %v1583 = vunpack.c.h.b16 %v1340
    %v1584 = vunpack.c.l.b16 %v1341
    %v1585 = vunpack.c.h.b16 %v1341
    %v1586 = vunpack.c.l.b16 %v1342
    %v1587 = vunpack.c.h.b16 %v1342
    %v1588 = vunpack.c.l.b16 %v1343
    %v1589 = vunpack.c.h.b16 %v1343
    %v1590 = vunpack.c.l.b16 %v1344
    %v1591 = vunpack.c.h.b16 %v1344
    %v1592 = vunpack.c.l.b16 %v1345
    %v1593 = vunpack.c.h.b16 %v1345
    %v1594 = vunpack.c.l.b16 %v1346
    %v1595 = vunpack.c.h.b16 %v1346
    %v1596 = vunpack.c.l.b16 %v1347
    %v1597 = vunpack.c.h.b16 %v1347
    %v1598 = vunpack.c.l.b16 %v1348
    %v1599 = vunpack.c.h.b16 %v1348
    %v1600 = vunpack.c.l.b16 %v1349
    %v1601 = vunpack.c.h.b16 %v1349
    %v1602 = vunpack.c.l.b16 %v1350
    %v1603 = vunpack.c.h.b16 %v1350
    %v1604 = vunpack.c.l.b16 %v1351
    %v1605 = vunpack.c.h.b16 %v1351
    %v1606 = vunpack.c.l.b16 %v1352
    %v1607 = vunpack.c.h.b16 %v1352
    %v1608 = vunpack.c.l.b16 %v1353
    %v1609 = vunpack.c.h.b16 %v1353
    %v1610 = vunpack.c.l.b16 %v1354
    %v1611 = vunpack.c.h.b16 %v1354
    %v1612 = vunpack.c.l.b16 %v1355
    %v1613 = vunpack.c.h.b16 %v1355
    %v1614 = vunpack.c.l.b16 %v1356
    %v1615 = vunpack.c.h.b16 %v1356
    %v1616 = vunpack.c.l.b16 %v1357
    %v1617 = vunpack.c.h.b16 %v1357
    %v1618 = vunpack.c.l.b16 %v1358
    %v1619 = vunpack.c.h.b16 %v1358
    %v1620 = vunpack.c.l.b16 %v1359
    %v1621 = vunpack.c.h.b16 %v1359
    %v1622 = vunpack.c.l.b16 %v1360
    %v1623 = vunpack.c.h.b16 %v1360
    %v1624 = vunpack.c.l.b16 %v1361
    %v1625 = vunpack.c.h.b16 %v1361
    %v1626 = vunpack.c.l.b16 %v1362
    %v1627 = vunpack.c.h.b16 %v1362
    %v1628 = vunpack.c.l.b16 %v1363
    %v1629 = vunpack.c.h.b16 %v1363
    %v1630 = vunpack.c.l.b16 %v1364
    %v1631 = vunpack.c.h.b16 %v1364
    %v1632 = vpack.c.b16 %v1506, %v1504
    %v1633 = vpack.c.b16 %v1507, %v1505
    %v1634 = vpack.c.b16 %v1510, %v1508
    %v1635 = vpack.c.b16 %v1511, %v1509
    %v1636 = vpack.c.b16 %v1514, %v1512
    %v1637 = vpack.c.b16 %v1515, %v1513
    %v1638 = vpack.c.b16 %v1518, %v1516
    %v1639 = vpack.c.b16 %v1519, %v1517
    %v1640 = vpack.c.b16 %v1522, %v1520
    %v1641 = vpack.c.b16 %v1523, %v1521
    %v1642 = vpack.c.b16 %v1526, %v1524
    %v1643 = vpack.c.b16 %v1527, %v1525
    %v1644 = vpack.c.b16 %v1530, %v1528
    %v1645 = vpack.c.b16 %v1531, %v1529
    %v1646 = vpack.c.b16 %v1534, %v1532
    %v1647 = vpack.c.b16 %v1535, %v1533
    %v1648 = vpack.c.b16 %v1538, %v1536
    %v1649 = vpack.c.b16 %v1539, %v1537
    %v1650 = vpack.c.b16 %v1542, %v1540
    %v1651 = vpack.c.b16 %v1543, %v1541
    %v1652 = vpack.c.b16 %v1546, %v1544
    %v1653 = vpack.c.b16 %v1547, %v1545
    %v1654 = vpack.c.b16 %v1550, %v1548
    %v1655 = vpack.c.b16 %v1551, %v1549
    %v1656 = vpack.c.b16 %v1554, %v1552
    %v1657 = vpack.c.b16 %v1555, %v1553
    %v1658 = vpack.c.b16 %v1558, %v1556
    %v1659 = vpack.c.b16 %v1559, %v1557
    %v1660 = vpack.c.b16 %v1562, %v1560
    %v1661 = vpack.c.b16 %v1563, %v1561
    %v1662 = vpack.c.b16 %v1566, %v1564
    %v1663 = vpack.c.b16 %v1567, %v1565
    %v1664 = vpack.c.b16 %v1570, %v1568
    %v1665 = vpack.c.b16 %v1571, %v1569
    %v1666 = vpack.c.b16 %v1574, %v1572
    %v1667 = vpack.c.b16 %v1575, %v1573
    %v1668 = vpack.c.b16 %v1578, %v1576
    %v1669 = vpack.c.b16 %v1579, %v1577
    %v1670 = vpack.c.b16 %v1582, %v1580
    %v1671 = vpack.c.b16 %v1583, %v1581
    %v1672 = vpack.c.b16 %v1586, %v1584
    %v1673 = vpack.c.b16 %v1587, %v1585
    %v1674 = vpack.c.b16 %v1590, %v1588
    %v1675 = vpack.c.b16 %v1591, %v1589
    %v1676 = vpack.c.b16 %v1594, %v1592
    %v1677 = vpack.c.b16 %v1595, %v1593
    %v1678 = vpack.c.b16 %v1598, %v1596
    %v1679 = vpack.c.b16 %v1599, %v1597
    %v1680 = vpack.c.b16 %v1602, %v1600
    %v1681 = vpack.c.b16 %v1603, %v1601
    %v1682 = vpack.c.b16 %v1606, %v1604
    %v1683 = vpack.c.b16 %v1607, %v1605
    %v1684 = vpack.c.b16 %v1610, %v1608
    %v1685 = vpack.c.b16 %v1611, %v1609
    %v1686 = vpack.c.b16 %v1614, %v1612
    %v1687 = vpack.c.b16 %v1615, %v1613
    %v1688 = vpack.c.b16 %v1618, %v1616
    %v1689 = vpack.c.b16 %v1619, %v1617
    %v1690 = vpack.c.b16 %v1622, %v1620
    %v1691 = vpack.c.b16 %v1623, %v1621
    %v1692 = vpack.c.b16 %v1626, %v1624
    %v1693 = vpack.c.b16 %v1627, %v1625
    %v1694 = vpack.c.b16 %v1630, %v1628
    %v1695 = vpack.c.b16 %v1631, %v1629
    %1760 = vmatprep.subr.bf16.mxu0 %v1633
    %1761 = vmatpush1.bf16.msra.mxu0 %v1632
    %1762 = vmatprep.subr.bf16.mxu0 %v1635
    %1763 = vmatpush1.bf16.msra.mxu0 %v1634
    %1764 = vmatprep.subr.bf16.mxu0 %v1637
    %1765 = vmatpush1.bf16.msra.mxu0 %v1636
    %1766 = vmatprep.subr.bf16.mxu0 %v1639
    %1767 = vmatpush1.bf16.msra.mxu0 %v1638
    %1768 = vmatprep.subr.bf16.mxu0 %v1641
    %1769 = vmatpush1.bf16.msra.mxu0 %v1640
    %1770 = vmatprep.subr.bf16.mxu0 %v1643
    %1771 = vmatpush1.bf16.msra.mxu0 %v1642
    %1772 = vmatprep.subr.bf16.mxu0 %v1645
    %1773 = vmatpush1.bf16.msra.mxu0 %v1644
    %1774 = vmatprep.subr.bf16.mxu0 %v1647
    %1775 = vmatpush1.bf16.msra.mxu0 %v1646
    %1776 = vmatprep.subr.bf16.mxu0 %v1649
    %1777 = vmatpush1.bf16.msra.mxu0 %v1648
    %1778 = vmatprep.subr.bf16.mxu0 %v1651
    %1779 = vmatpush1.bf16.msra.mxu0 %v1650
    %1780 = vmatprep.subr.bf16.mxu0 %v1653
    %1781 = vmatpush1.bf16.msra.mxu0 %v1652
    %1782 = vmatprep.subr.bf16.mxu0 %v1655
    %1783 = vmatpush1.bf16.msra.mxu0 %v1654
    %1784 = vmatprep.subr.bf16.mxu0 %v1657
    %1785 = vmatpush1.bf16.msra.mxu0 %v1656
    %1786 = vmatprep.subr.bf16.mxu0 %v1659
    %1787 = vmatpush1.bf16.msra.mxu0 %v1658
    %1788 = vmatprep.subr.bf16.mxu0 %v1661
    %1789 = vmatpush1.bf16.msra.mxu0 %v1660
    %1790 = vmatprep.subr.bf16.mxu0 %v1663
    %1791 = vmatpush1.bf16.msra.mxu0 %v1662
    %1792 = vmatprep.mubr.bf16.mxu0 %v1366
    %1793 = vmatmul.mubr.bf16.gmra.mrb[0].mxu0 %v1365
    %v1794 = vpop.f32.mrb[0].mxu0
    %v1795 = vadd.f32 %v1433, %v1794
    %v1796 = vpop.f32.mrb[0].mxu0
    %v1797 = vadd.f32 %v1437, %v1796
    %v1798 = vpop.f32.mrb[0].mxu0
    %v1799 = vadd.f32 %v1433, %v1798
    %v1800 = vpop.f32.mrb[0].mxu0
    %v1801 = vadd.f32 %v1437, %v1800
    %1802 = vmatprep.mubr.bf16.mxu0 %v1370
    %1803 = vmatmul.mubr.bf16.gmra.mrb[0].mxu0 %v1369
    %v1804 = vpop.f32.mrb[0].mxu0
    %v1805 = vadd.f32 %v1433, %v1804
    %v1806 = vpop.f32.mrb[0].mxu0
    %v1807 = vadd.f32 %v1437, %v1806
    %v1808 = vpop.f32.mrb[0].mxu0
    %v1809 = vadd.f32 %v1433, %v1808
    %v1810 = vpop.f32.mrb[0].mxu0
    %v1811 = vadd.f32 %v1437, %v1810
    %1812 = vmatprep.mubr.bf16.mxu0 %v1374
    %1813 = vmatmul.mubr.bf16.gmra.mrb[0].mxu0 %v1373
    %v1814 = vpop.f32.mrb[0].mxu0
    %v1815 = vadd.f32 %v1433, %v1814
    %v1816 = vpop.f32.mrb[0].mxu0
    %v1817 = vadd.f32 %v1437, %v1816
    %v1818 = vpop.f32.mrb[0].mxu0
    %v1819 = vadd.f32 %v1433, %v1818
    %v1820 = vpop.f32.mrb[0].mxu0
    %v1821 = vadd.f32 %v1437, %v1820
    %1822 = vmatprep.mubr.bf16.mxu0 %v1378
    %1823 = vmatmul.mubr.bf16.gmra.mrb[0].mxu0 %v1377
    %v1824 = vpop.f32.mrb[0].mxu0
    %v1825 = vadd.f32 %v1433, %v1824
    %v1826 = vpop.f32.mrb[0].mxu0
    %v1827 = vadd.f32 %v1437, %v1826
    %v1828 = vpop.f32.mrb[0].mxu0
    %v1829 = vadd.f32 %v1433, %v1828
    %v1830 = vpop.f32.mrb[0].mxu0
    %v1831 = vadd.f32 %v1437, %v1830
    %1832 = vmatprep.mubr.bf16.mxu0 %v1382
    %1833 = vmatmul.mubr.bf16.gmra.mrb[0].mxu0 %v1381
    %v1834 = vpop.f32.mrb[0].mxu0
    %v1835 = vadd.f32 %v1433, %v1834
    %v1836 = vpop.f32.mrb[0].mxu0
    %v1837 = vadd.f32 %v1437, %v1836
    %v1838 = vpop.f32.mrb[0].mxu0
    %v1839 = vadd.f32 %v1433, %v1838
    %v1840 = vpop.f32.mrb[0].mxu0
    %v1841 = vadd.f32 %v1437, %v1840
    %1842 = vmatprep.mubr.bf16.mxu0 %v1386
    %1843 = vmatmul.mubr.bf16.gmra.mrb[0].mxu0 %v1385
    %v1844 = vpop.f32.mrb[0].mxu0
    %v1845 = vadd.f32 %v1433, %v1844
    %v1846 = vpop.f32.mrb[0].mxu0
    %v1847 = vadd.f32 %v1437, %v1846
    %v1848 = vpop.f32.mrb[0].mxu0
    %v1849 = vadd.f32 %v1433, %v1848
    %v1850 = vpop.f32.mrb[0].mxu0
    %v1851 = vadd.f32 %v1437, %v1850
    %1852 = vmatprep.mubr.bf16.mxu0 %v1390
    %1853 = vmatmul.mubr.bf16.gmra.mrb[0].mxu0 %v1389
    %v1854 = vpop.f32.mrb[0].mxu0
    %v1855 = vadd.f32 %v1433, %v1854
    %v1856 = vpop.f32.mrb[0].mxu0
    %v1857 = vadd.f32 %v1437, %v1856
    %v1858 = vpop.f32.mrb[0].mxu0
    %v1859 = vadd.f32 %v1433, %v1858
    %v1860 = vpop.f32.mrb[0].mxu0
    %v1861 = vadd.f32 %v1437, %v1860
    %1862 = vmatprep.mubr.bf16.mxu0 %v1394
    %1863 = vmatmul.mubr.bf16.gmra.mrb[0].mxu0 %v1393
    %v1864 = vpop.f32.mrb[0].mxu0
    %v1865 = vadd.f32 %v1433, %v1864
    %v1866 = vpop.f32.mrb[0].mxu0
    %v1867 = vadd.f32 %v1437, %v1866
    %v1868 = vpop.f32.mrb[0].mxu0
    %v1869 = vadd.f32 %v1433, %v1868
    %v1870 = vpop.f32.mrb[0].mxu0
    %v1871 = vadd.f32 %v1437, %v1870
    %1872 = vmatprep.mubr.bf16.mxu0 %v1398
    %1873 = vmatmul.mubr.bf16.gmra.mrb[0].mxu0 %v1397
    %v1874 = vpop.f32.mrb[0].mxu0
    %v1875 = vadd.f32 %v1433, %v1874
    %v1876 = vpop.f32.mrb[0].mxu0
    %v1877 = vadd.f32 %v1437, %v1876
    %v1878 = vpop.f32.mrb[0].mxu0
    %v1879 = vadd.f32 %v1433, %v1878
    %v1880 = vpop.f32.mrb[0].mxu0
    %v1881 = vadd.f32 %v1437, %v1880
    %1882 = vmatprep.mubr.bf16.mxu0 %v1402
    %1883 = vmatmul.mubr.bf16.gmra.mrb[0].mxu0 %v1401
    %v1884 = vpop.f32.mrb[0].mxu0
    %v1885 = vadd.f32 %v1433, %v1884
    %v1886 = vpop.f32.mrb[0].mxu0
    %v1887 = vadd.f32 %v1437, %v1886
    %v1888 = vpop.f32.mrb[0].mxu0
    %v1889 = vadd.f32 %v1433, %v1888
    %v1890 = vpop.f32.mrb[0].mxu0
    %v1891 = vadd.f32 %v1437, %v1890
    %1892 = vmatprep.mubr.bf16.mxu0 %v1406
    %1893 = vmatmul.mubr.bf16.gmra.mrb[0].mxu0 %v1405
    %v1894 = vpop.f32.mrb[0].mxu0
    %v1895 = vadd.f32 %v1433, %v1894
    %v1896 = vpop.f32.mrb[0].mxu0
    %v1897 = vadd.f32 %v1437, %v1896
    %v1898 = vpop.f32.mrb[0].mxu0
    %v1899 = vadd.f32 %v1433, %v1898
    %v1900 = vpop.f32.mrb[0].mxu0
    %v1901 = vadd.f32 %v1437, %v1900
    %1902 = vmatprep.mubr.bf16.mxu0 %v1410
    %1903 = vmatmul.mubr.bf16.gmra.mrb[0].mxu0 %v1409
    %v1904 = vpop.f32.mrb[0].mxu0
    %v1905 = vadd.f32 %v1433, %v1904
    %v1906 = vpop.f32.mrb[0].mxu0
    %v1907 = vadd.f32 %v1437, %v1906
    %v1908 = vpop.f32.mrb[0].mxu0
    %v1909 = vadd.f32 %v1433, %v1908
    %v1910 = vpop.f32.mrb[0].mxu0
    %v1911 = vadd.f32 %v1437, %v1910
    %1912 = vmatprep.mubr.bf16.mxu0 %v1414
    %1913 = vmatmul.mubr.bf16.gmra.mrb[0].mxu0 %v1413
    %v1914 = vpop.f32.mrb[0].mxu0
    %v1915 = vadd.f32 %v1433, %v1914
    %v1916 = vpop.f32.mrb[0].mxu0
    %v1917 = vadd.f32 %v1437, %v1916
    %v1918 = vpop.f32.mrb[0].mxu0
    %v1919 = vadd.f32 %v1433, %v1918
    %v1920 = vpop.f32.mrb[0].mxu0
    %v1921 = vadd.f32 %v1437, %v1920
    %1922 = vmatprep.mubr.bf16.mxu0 %v1418
    %1923 = vmatmul.mubr.bf16.gmra.mrb[0].mxu0 %v1417
    %v1924 = vpop.f32.mrb[0].mxu0
    %v1925 = vadd.f32 %v1433, %v1924
    %v1926 = vpop.f32.mrb[0].mxu0
    %v1927 = vadd.f32 %v1437, %v1926
    %v1928 = vpop.f32.mrb[0].mxu0
    %v1929 = vadd.f32 %v1433, %v1928
    %v1930 = vpop.f32.mrb[0].mxu0
    %v1931 = vadd.f32 %v1437, %v1930
    %1932 = vmatprep.mubr.bf16.mxu0 %v1422
    %1933 = vmatmul.mubr.bf16.gmra.mrb[0].mxu0 %v1421
    %v1934 = vpop.f32.mrb[0].mxu0
    %v1935 = vadd.f32 %v1433, %v1934
    %v1936 = vpop.f32.mrb[0].mxu0
    %v1937 = vadd.f32 %v1437, %v1936
    %v1938 = vpop.f32.mrb[0].mxu0
    %v1939 = vadd.f32 %v1433, %v1938
    %v1940 = vpop.f32.mrb[0].mxu0
    %v1941 = vadd.f32 %v1437, %v1940
    %1942 = vmatprep.mubr.bf16.mxu0 %v1426
    %1943 = vmatmul.mubr.bf16.gmra.mrb[0].mxu0 %v1425
    %v1944 = vpop.f32.mrb[0].mxu0
    %v1945 = vadd.f32 %v1433, %v1944
    %v1946 = vpop.f32.mrb[0].mxu0
    %v1947 = vadd.f32 %v1437, %v1946
    %v1948 = vpop.f32.mrb[0].mxu0
    %v1949 = vadd.f32 %v1433, %v1948
    %v1950 = vpop.f32.mrb[0].mxu0
    %v1951 = vadd.f32 %v1437, %v1950
    %1952 = vdwg.mxu0
    %1953 = vmatprep.subr.bf16.mxu0 %v1665
    %1954 = vmatpush1.bf16.msra.mxu0 %v1664
    %1955 = vmatprep.subr.bf16.mxu0 %v1667
    %1956 = vmatpush1.bf16.msra.mxu0 %v1666
    %1957 = vmatprep.subr.bf16.mxu0 %v1669
    %1958 = vmatpush1.bf16.msra.mxu0 %v1668
    %1959 = vmatprep.subr.bf16.mxu0 %v1671
    %1960 = vmatpush1.bf16.msra.mxu0 %v1670
    %1961 = vmatprep.subr.bf16.mxu0 %v1673
    %1962 = vmatpush1.bf16.msra.mxu0 %v1672
    %1963 = vmatprep.subr.bf16.mxu0 %v1675
    %1964 = vmatpush1.bf16.msra.mxu0 %v1674
    %1965 = vmatprep.subr.bf16.mxu0 %v1677
    %1966 = vmatpush1.bf16.msra.mxu0 %v1676
    %1967 = vmatprep.subr.bf16.mxu0 %v1679
    %1968 = vmatpush1.bf16.msra.mxu0 %v1678
    %1969 = vmatprep.subr.bf16.mxu0 %v1681
    %1970 = vmatpush1.bf16.msra.mxu0 %v1680
    %1971 = vmatprep.subr.bf16.mxu0 %v1683
    %1972 = vmatpush1.bf16.msra.mxu0 %v1682
    %1973 = vmatprep.subr.bf16.mxu0 %v1685
    %1974 = vmatpush1.bf16.msra.mxu0 %v1684
    %1975 = vmatprep.subr.bf16.mxu0 %v1687
    %1976 = vmatpush1.bf16.msra.mxu0 %v1686
    %1977 = vmatprep.subr.bf16.mxu0 %v1689
    %1978 = vmatpush1.bf16.msra.mxu0 %v1688
    %1979 = vmatprep.subr.bf16.mxu0 %v1691
    %1980 = vmatpush1.bf16.msra.mxu0 %v1690
    %1981 = vmatprep.subr.bf16.mxu0 %v1693
    %1982 = vmatpush1.bf16.msra.mxu0 %v1692
    %1983 = vmatprep.subr.bf16.mxu0 %v1695
    %1984 = vmatpush1.bf16.msra.mxu0 %v1694
    %1985 = vmatprep.mubr.bf16.mxu0 %v1368
    %1986 = vmatmul.mubr.bf16.gmra.mrb[0].mxu0 %v1367
    %v1987 = vpop.f32.mrb[0].mxu0
    %v1988 = vadd.f32 %v1795, %v1987
    %v1989 = vpop.f32.mrb[0].mxu0
    %v1990 = vadd.f32 %v1797, %v1989
    %v1991 = vpop.f32.mrb[0].mxu0
    %v1992 = vadd.f32 %v1799, %v1991
    %v1993 = vpop.f32.mrb[0].mxu0
    %v1994 = vadd.f32 %v1801, %v1993
    %1995 = vmatprep.mubr.bf16.mxu0 %v1372
    %1996 = vmatmul.mubr.bf16.gmra.mrb[0].mxu0 %v1371
    %v1997 = vpop.f32.mrb[0].mxu0
    %v1998 = vadd.f32 %v1805, %v1997
    %v1999 = vpop.f32.mrb[0].mxu0
    %v2000 = vadd.f32 %v1807, %v1999
    %v2001 = vpop.f32.mrb[0].mxu0
    %v2002 = vadd.f32 %v1809, %v2001
    %v2003 = vpop.f32.mrb[0].mxu0
    %v2004 = vadd.f32 %v1811, %v2003
    %2005 = vmatprep.mubr.bf16.mxu0 %v1376
    %2006 = vmatmul.mubr.bf16.gmra.mrb[0].mxu0 %v1375
    %v2007 = vpop.f32.mrb[0].mxu0
    %v2008 = vadd.f32 %v1815, %v2007
    %v2009 = vpop.f32.mrb[0].mxu0
    %v2010 = vadd.f32 %v1817, %v2009
    %v2011 = vpop.f32.mrb[0].mxu0
    %v2012 = vadd.f32 %v1819, %v2011
    %v2013 = vpop.f32.mrb[0].mxu0
    %v2014 = vadd.f32 %v1821, %v2013
    %2015 = vmatprep.mubr.bf16.mxu0 %v1380
    %2016 = vmatmul.mubr.bf16.gmra.mrb[0].mxu0 %v1379
    %v2017 = vpop.f32.mrb[0].mxu0
    %v2018 = vadd.f32 %v1825, %v2017
    %v2019 = vpop.f32.mrb[0].mxu0
    %v2020 = vadd.f32 %v1827, %v2019
    %v2021 = vpop.f32.mrb[0].mxu0
    %v2022 = vadd.f32 %v1829, %v2021
    %v2023 = vpop.f32.mrb[0].mxu0
    %v2024 = vadd.f32 %v1831, %v2023
    %2025 = vmatprep.mubr.bf16.mxu0 %v1384
    %2026 = vmatmul.mubr.bf16.gmra.mrb[0].mxu0 %v1383
    %v2027 = vpop.f32.mrb[0].mxu0
    %v2028 = vadd.f32 %v1835, %v2027
    %v2029 = vpop.f32.mrb[0].mxu0
    %v2030 = vadd.f32 %v1837, %v2029
    %v2031 = vpop.f32.mrb[0].mxu0
    %v2032 = vadd.f32 %v1839, %v2031
    %v2033 = vpop.f32.mrb[0].mxu0
    %v2034 = vadd.f32 %v1841, %v2033
    %2035 = vmatprep.mubr.bf16.mxu0 %v1388
    %2036 = vmatmul.mubr.bf16.gmra.mrb[0].mxu0 %v1387
    %v2037 = vpop.f32.mrb[0].mxu0
    %v2038 = vadd.f32 %v1845, %v2037
    %v2039 = vpop.f32.mrb[0].mxu0
    %v2040 = vadd.f32 %v1847, %v2039
    %v2041 = vpop.f32.mrb[0].mxu0
    %v2042 = vadd.f32 %v1849, %v2041
    %v2043 = vpop.f32.mrb[0].mxu0
    %v2044 = vadd.f32 %v1851, %v2043
    %2045 = vmatprep.mubr.bf16.mxu0 %v1392
    %2046 = vmatmul.mubr.bf16.gmra.mrb[0].mxu0 %v1391
    %v2047 = vpop.f32.mrb[0].mxu0
    %v2048 = vadd.f32 %v1855, %v2047
    %v2049 = vpop.f32.mrb[0].mxu0
    %v2050 = vadd.f32 %v1857, %v2049
    %v2051 = vpop.f32.mrb[0].mxu0
    %v2052 = vadd.f32 %v1859, %v2051
    %v2053 = vpop.f32.mrb[0].mxu0
    %v2054 = vadd.f32 %v1861, %v2053
    %2055 = vmatprep.mubr.bf16.mxu0 %v1396
    %2056 = vmatmul.mubr.bf16.gmra.mrb[0].mxu0 %v1395
    %v2057 = vpop.f32.mrb[0].mxu0
    %v2058 = vadd.f32 %v1865, %v2057
    %v2059 = vpop.f32.mrb[0].mxu0
    %v2060 = vadd.f32 %v1867, %v2059
    %v2061 = vpop.f32.mrb[0].mxu0
    %v2062 = vadd.f32 %v1869, %v2061
    %v2063 = vpop.f32.mrb[0].mxu0
    %v2064 = vadd.f32 %v1871, %v2063
    %2065 = vmatprep.mubr.bf16.mxu0 %v1400
    %2066 = vmatmul.mubr.bf16.gmra.mrb[0].mxu0 %v1399
    %v2067 = vpop.f32.mrb[0].mxu0
    %v2068 = vadd.f32 %v1875, %v2067
    %v2069 = vpop.f32.mrb[0].mxu0
    %v2070 = vadd.f32 %v1877, %v2069
    %v2071 = vpop.f32.mrb[0].mxu0
    %v2072 = vadd.f32 %v1879, %v2071
    %v2073 = vpop.f32.mrb[0].mxu0
    %v2074 = vadd.f32 %v1881, %v2073
    %2075 = vmatprep.mubr.bf16.mxu0 %v1404
    %2076 = vmatmul.mubr.bf16.gmra.mrb[0].mxu0 %v1403
    %v2077 = vpop.f32.mrb[0].mxu0
    %v2078 = vadd.f32 %v1885, %v2077
    %v2079 = vpop.f32.mrb[0].mxu0
    %v2080 = vadd.f32 %v1887, %v2079
    %v2081 = vpop.f32.mrb[0].mxu0
    %v2082 = vadd.f32 %v1889, %v2081
    %v2083 = vpop.f32.mrb[0].mxu0
    %v2084 = vadd.f32 %v1891, %v2083
    %2085 = vmatprep.mubr.bf16.mxu0 %v1408
    %2086 = vmatmul.mubr.bf16.gmra.mrb[0].mxu0 %v1407
    %v2087 = vpop.f32.mrb[0].mxu0
    %v2088 = vadd.f32 %v1895, %v2087
    %v2089 = vpop.f32.mrb[0].mxu0
    %v2090 = vadd.f32 %v1897, %v2089
    %v2091 = vpop.f32.mrb[0].mxu0
    %v2092 = vadd.f32 %v1899, %v2091
    %v2093 = vpop.f32.mrb[0].mxu0
    %v2094 = vadd.f32 %v1901, %v2093
    %2095 = vmatprep.mubr.bf16.mxu0 %v1412
    %2096 = vmatmul.mubr.bf16.gmra.mrb[0].mxu0 %v1411
    %v2097 = vpop.f32.mrb[0].mxu0
    %v2098 = vadd.f32 %v1905, %v2097
    %v2099 = vpop.f32.mrb[0].mxu0
    %v2100 = vadd.f32 %v1907, %v2099
    %v2101 = vpop.f32.mrb[0].mxu0
    %v2102 = vadd.f32 %v1909, %v2101
    %v2103 = vpop.f32.mrb[0].mxu0
    %v2104 = vadd.f32 %v1911, %v2103
    %2105 = vmatprep.mubr.bf16.mxu0 %v1416
    %2106 = vmatmul.mubr.bf16.gmra.mrb[0].mxu0 %v1415
    %v2107 = vpop.f32.mrb[0].mxu0
    %v2108 = vadd.f32 %v1915, %v2107
    %v2109 = vpop.f32.mrb[0].mxu0
    %v2110 = vadd.f32 %v1917, %v2109
    %v2111 = vpop.f32.mrb[0].mxu0
    %v2112 = vadd.f32 %v1919, %v2111
    %v2113 = vpop.f32.mrb[0].mxu0
    %v2114 = vadd.f32 %v1921, %v2113
    %2115 = vmatprep.mubr.bf16.mxu0 %v1420
    %2116 = vmatmul.mubr.bf16.gmra.mrb[0].mxu0 %v1419
    %v2117 = vpop.f32.mrb[0].mxu0
    %v2118 = vadd.f32 %v1925, %v2117
    %v2119 = vpop.f32.mrb[0].mxu0
    %v2120 = vadd.f32 %v1927, %v2119
    %v2121 = vpop.f32.mrb[0].mxu0
    %v2122 = vadd.f32 %v1929, %v2121
    %v2123 = vpop.f32.mrb[0].mxu0
    %v2124 = vadd.f32 %v1931, %v2123
    %2125 = vmatprep.mubr.bf16.mxu0 %v1424
    %2126 = vmatmul.mubr.bf16.gmra.mrb[0].mxu0 %v1423
    %v2127 = vpop.f32.mrb[0].mxu0
    %v2128 = vadd.f32 %v1935, %v2127
    %v2129 = vpop.f32.mrb[0].mxu0
    %v2130 = vadd.f32 %v1937, %v2129
    %v2131 = vpop.f32.mrb[0].mxu0
    %v2132 = vadd.f32 %v1939, %v2131
    %v2133 = vpop.f32.mrb[0].mxu0
    %v2134 = vadd.f32 %v1941, %v2133
    %2135 = vmatprep.mubr.bf16.mxu0 %v1428
    %2136 = vmatmul.mubr.bf16.gmra.mrb[0].mxu0 %v1427
    %v2137 = vpop.f32.mrb[0].mxu0
    %v2138 = vadd.f32 %v1945, %v2137
    %v2139 = vpop.f32.mrb[0].mxu0
    %v2140 = vadd.f32 %v1947, %v2139
    %v2141 = vpop.f32.mrb[0].mxu0
    %v2142 = vadd.f32 %v1949, %v2141
    %v2143 = vpop.f32.mrb[0].mxu0
    %v2144 = vadd.f32 %v1951, %v2143
    %2145 = vdwg.mxu0
    %v2146 = vmax.f32 %v1988, 0.0
    %v2147 = vmax.f32 %v1990, 0.0
    %v2148 = vmax.f32 %v1992, 0.0
    %v2149 = vmax.f32 %v1994, 0.0
    %v2150 = vmax.f32 %v1998, 0.0
    %v2151 = vmax.f32 %v2000, 0.0
    %v2152 = vmax.f32 %v2002, 0.0
    %v2153 = vmax.f32 %v2004, 0.0
    %v2154 = vmax.f32 %v2008, 0.0
    %v2155 = vmax.f32 %v2010, 0.0
    %v2156 = vmax.f32 %v2012, 0.0
    %v2157 = vmax.f32 %v2014, 0.0
    %v2158 = vmax.f32 %v2018, 0.0
    %v2159 = vmax.f32 %v2020, 0.0
    %v2160 = vmax.f32 %v2022, 0.0
    %v2161 = vmax.f32 %v2024, 0.0
    %v2162 = vmax.f32 %v2028, 0.0
    %v2163 = vmax.f32 %v2030, 0.0
    %v2164 = vmax.f32 %v2032, 0.0
    %v2165 = vmax.f32 %v2034, 0.0
    %v2166 = vmax.f32 %v2038, 0.0
    %v2167 = vmax.f32 %v2040, 0.0
    %v2168 = vmax.f32 %v2042, 0.0
    %v2169 = vmax.f32 %v2044, 0.0
    %v2170 = vmax.f32 %v2048, 0.0
    %v2171 = vmax.f32 %v2050, 0.0
    %v2172 = vmax.f32 %v2052, 0.0
    %v2173 = vmax.f32 %v2054, 0.0
    %v2174 = vmax.f32 %v2058, 0.0
    %v2175 = vmax.f32 %v2060, 0.0
    %v2176 = vmax.f32 %v2062, 0.0
    %v2177 = vmax.f32 %v2064, 0.0
    %v2178 = vmax.f32 %v2068, 0.0
    %v2179 = vmax.f32 %v2070, 0.0
    %v2180 = vmax.f32 %v2072, 0.0
    %v2181 = vmax.f32 %v2074, 0.0
    %v2182 = vmax.f32 %v2078, 0.0
    %v2183 = vmax.f32 %v2080, 0.0
    %v2184 = vmax.f32 %v2082, 0.0
    %v2185 = vmax.f32 %v2084, 0.0
    %v2186 = vmax.f32 %v2088, 0.0
    %v2187 = vmax.f32 %v2090, 0.0
    %v2188 = vmax.f32 %v2092, 0.0
    %v2189 = vmax.f32 %v2094, 0.0
    %v2190 = vmax.f32 %v2098, 0.0
    %v2191 = vmax.f32 %v2100, 0.0
    %v2192 = vmax.f32 %v2102, 0.0
    %v2193 = vmax.f32 %v2104, 0.0
    %v2194 = vmax.f32 %v2108, 0.0
    %v2195 = vmax.f32 %v2110, 0.0
    %v2196 = vmax.f32 %v2112, 0.0
    %v2197 = vmax.f32 %v2114, 0.0
    %v2198 = vmax.f32 %v2118, 0.0
    %v2199 = vmax.f32 %v2120, 0.0
    %v2200 = vmax.f32 %v2122, 0.0
    %v2201 = vmax.f32 %v2124, 0.0
    %v2202 = vmax.f32 %v2128, 0.0
    %v2203 = vmax.f32 %v2130, 0.0
    %v2204 = vmax.f32 %v2132, 0.0
    %v2205 = vmax.f32 %v2134, 0.0
    %v2206 = vmax.f32 %v2138, 0.0
    %v2207 = vmax.f32 %v2140, 0.0
    %v2208 = vmax.f32 %v2142, 0.0
    %v2209 = vmax.f32 %v2144, 0.0
    %v2210 = vld [vmem:[#allocation6] sm:$0xff]
    %v2211 = vld [vmem:[#allocation6 + $0x8] sm:$0xff]
    %v2212 = vld [vmem:[#allocation6 + $0x10] sm:$0xff]
    %v2213 = vld [vmem:[#allocation6 + $0x18] sm:$0xff]
    %v2214 = vld [vmem:[#allocation6 + $0x20] sm:$0xff]
    %v2215 = vld [vmem:[#allocation6 + $0x28] sm:$0xff]
    %v2216 = vld [vmem:[#allocation6 + $0x30] sm:$0xff]
    %v2217 = vld [vmem:[#allocation6 + $0x38] sm:$0xff]
    %v2218 = vld [vmem:[#allocation6 + $0x40] sm:$0xff]
    %v2219 = vld [vmem:[#allocation6 + $0x48] sm:$0xff]
    %v2220 = vld [vmem:[#allocation6 + $0x50] sm:$0xff]
    %v2221 = vld [vmem:[#allocation6 + $0x58] sm:$0xff]
    %v2222 = vld [vmem:[#allocation6 + $0x60] sm:$0xff]
    %v2223 = vld [vmem:[#allocation6 + $0x68] sm:$0xff]
    %v2224 = vld [vmem:[#allocation6 + $0x70] sm:$0xff]
    %v2225 = vld [vmem:[#allocation6 + $0x78] sm:$0xff]
    %v2226 = vld [vmem:[#allocation6 + $0x80] sm:$0xff]
    %v2227 = vld [vmem:[#allocation6 + $0x88] sm:$0xff]
    %v2228 = vld [vmem:[#allocation6 + $0x90] sm:$0xff]
    %v2229 = vld [vmem:[#allocation6 + $0x98] sm:$0xff]
    %v2230 = vld [vmem:[#allocation6 + $0xa0] sm:$0xff]
    %v2231 = vld [vmem:[#allocation6 + $0xa8] sm:$0xff]
    %v2232 = vld [vmem:[#allocation6 + $0xb0] sm:$0xff]
    %v2233 = vld [vmem:[#allocation6 + $0xb8] sm:$0xff]
    %v2234 = vld [vmem:[#allocation6 + $0xc0] sm:$0xff]
    %v2235 = vld [vmem:[#allocation6 + $0xc8] sm:$0xff]
    %v2236 = vld [vmem:[#allocation6 + $0xd0] sm:$0xff]
    %v2237 = vld [vmem:[#allocation6 + $0xd8] sm:$0xff]
    %v2238 = vld [vmem:[#allocation6 + $0xe0] sm:$0xff]
    %v2239 = vld [vmem:[#allocation6 + $0xe8] sm:$0xff]
    %v2240 = vld [vmem:[#allocation6 + $0xf0] sm:$0xff]
    %v2241 = vld [vmem:[#allocation6 + $0xf8] sm:$0xff]
    %v2242 = vld [vmem:[#allocation6 + $0x100] sm:$0xff]
    %v2243 = vld [vmem:[#allocation6 + $0x108] sm:$0xff]
    %v2244 = vld [vmem:[#allocation6 + $0x110] sm:$0xff]
    %v2245 = vld [vmem:[#allocation6 + $0x118] sm:$0xff]
    %v2246 = vld [vmem:[#allocation6 + $0x120] sm:$0xff]
    %v2247 = vld [vmem:[#allocation6 + $0x128] sm:$0xff]
    %v2248 = vld [vmem:[#allocation6 + $0x130] sm:$0xff]
    %v2249 = vld [vmem:[#allocation6 + $0x138] sm:$0xff]
    %v2250 = vld [vmem:[#allocation6 + $0x140] sm:$0xff]
    %v2251 = vld [vmem:[#allocation6 + $0x148] sm:$0xff]
    %v2252 = vld [vmem:[#allocation6 + $0x150] sm:$0xff]
    %v2253 = vld [vmem:[#allocation6 + $0x158] sm:$0xff]
    %v2254 = vld [vmem:[#allocation6 + $0x160] sm:$0xff]
    %v2255 = vld [vmem:[#allocation6 + $0x168] sm:$0xff]
    %v2256 = vld [vmem:[#allocation6 + $0x170] sm:$0xff]
    %v2257 = vld [vmem:[#allocation6 + $0x178] sm:$0xff]
    %v2258 = vld [vmem:[#allocation6 + $0x180] sm:$0xff]
    %v2259 = vld [vmem:[#allocation6 + $0x188] sm:$0xff]
    %v2260 = vld [vmem:[#allocation6 + $0x190] sm:$0xff]
    %v2261 = vld [vmem:[#allocation6 + $0x198] sm:$0xff]
    %v2262 = vld [vmem:[#allocation6 + $0x1a0] sm:$0xff]
    %v2263 = vld [vmem:[#allocation6 + $0x1a8] sm:$0xff]
    %v2264 = vld [vmem:[#allocation6 + $0x1b0] sm:$0xff]
    %v2265 = vld [vmem:[#allocation6 + $0x1b8] sm:$0xff]
    %v2266 = vld [vmem:[#allocation6 + $0x1c0] sm:$0xff]
    %v2267 = vld [vmem:[#allocation6 + $0x1c8] sm:$0xff]
    %v2268 = vld [vmem:[#allocation6 + $0x1d0] sm:$0xff]
    %v2269 = vld [vmem:[#allocation6 + $0x1d8] sm:$0xff]
    %v2270 = vld [vmem:[#allocation6 + $0x1e0] sm:$0xff]
    %v2271 = vld [vmem:[#allocation6 + $0x1e8] sm:$0xff]
    %v2272 = vld [vmem:[#allocation6 + $0x1f0] sm:$0xff]
    %v2273 = vld [vmem:[#allocation6 + $0x1f8] sm:$0xff]
    %v2274 = vpack.c.bf16 %v1057, %v1049
    %v2275 = vpack.c.bf16 %v1058, %v1050
    %v2276 = vpack.c.bf16 %v1059, %v1051
    %v2277 = vpack.c.bf16 %v1060, %v1052
    %v2278 = vpack.c.bf16 %v1073, %v1065
    %v2279 = vpack.c.bf16 %v1074, %v1066
    %v2280 = vpack.c.bf16 %v1075, %v1067
    %v2281 = vpack.c.bf16 %v1076, %v1068
    %v2282 = vpack.c.bf16 %v1089, %v1081
    %v2283 = vpack.c.bf16 %v1090, %v1082
    %v2284 = vpack.c.bf16 %v1091, %v1083
    %v2285 = vpack.c.bf16 %v1092, %v1084
    %v2286 = vpack.c.bf16 %v1105, %v1097
    %v2287 = vpack.c.bf16 %v1106, %v1098
    %v2288 = vpack.c.bf16 %v1107, %v1099
    %v2289 = vpack.c.bf16 %v1108, %v1100
    %v2290 = vpack.c.bf16 %v1121, %v1113
    %v2291 = vpack.c.bf16 %v1122, %v1114
    %v2292 = vpack.c.bf16 %v1123, %v1115
    %v2293 = vpack.c.bf16 %v1124, %v1116
    %v2294 = vpack.c.bf16 %v1137, %v1129
    %v2295 = vpack.c.bf16 %v1138, %v1130
    %v2296 = vpack.c.bf16 %v1139, %v1131
    %v2297 = vpack.c.bf16 %v1140, %v1132
    %v2298 = vpack.c.bf16 %v1153, %v1145
    %v2299 = vpack.c.bf16 %v1154, %v1146
    %v2300 = vpack.c.bf16 %v1155, %v1147
    %v2301 = vpack.c.bf16 %v1156, %v1148
    %v2302 = vpack.c.bf16 %v1169, %v1161
    %v2303 = vpack.c.bf16 %v1170, %v1162
    %v2304 = vpack.c.bf16 %v1171, %v1163
    %v2305 = vpack.c.bf16 %v1172, %v1164
    %v2306 = vpack.c.bf16 %v1185, %v1177
    %v2307 = vpack.c.bf16 %v1186, %v1178
    %v2308 = vpack.c.bf16 %v1187, %v1179
    %v2309 = vpack.c.bf16 %v1188, %v1180
    %v2310 = vpack.c.bf16 %v1201, %v1193
    %v2311 = vpack.c.bf16 %v1202, %v1194
    %v2312 = vpack.c.bf16 %v1203, %v1195
    %v2313 = vpack.c.bf16 %v1204, %v1196
    %v2314 = vpack.c.bf16 %v1217, %v1209
    %v2315 = vpack.c.bf16 %v1218, %v1210
    %v2316 = vpack.c.bf16 %v1219, %v1211
    %v2317 = vpack.c.bf16 %v1220, %v1212
    %v2318 = vpack.c.bf16 %v1233, %v1225
    %v2319 = vpack.c.bf16 %v1234, %v1226
    %v2320 = vpack.c.bf16 %v1235, %v1227
    %v2321 = vpack.c.bf16 %v1236, %v1228
    %v2322 = vpack.c.bf16 %v1249, %v1241
    %v2323 = vpack.c.bf16 %v1250, %v1242
    %v2324 = vpack.c.bf16 %v1251, %v1243
    %v2325 = vpack.c.bf16 %v1252, %v1244
    %v2326 = vpack.c.bf16 %v1265, %v1257
    %v2327 = vpack.c.bf16 %v1266, %v1258
    %v2328 = vpack.c.bf16 %v1267, %v1259
    %v2329 = vpack.c.bf16 %v1268, %v1260
    %v2330 = vpack.c.bf16 %v1281, %v1273
    %v2331 = vpack.c.bf16 %v1282, %v1274
    %v2332 = vpack.c.bf16 %v1283, %v1275
    %v2333 = vpack.c.bf16 %v1284, %v1276
    %v2334 = vpack.c.bf16 %v1297, %v1289
    %v2335 = vpack.c.bf16 %v1298, %v1290
    %v2336 = vpack.c.bf16 %v1299, %v1291
    %v2337 = vpack.c.bf16 %v1300, %v1292
    %v2339 = vlaneseq
    %v2340 = vshrl.u32 %v2339, 7
    %v2341 = vsub.s32 0, %v2340
    %v2342 = vrot.slane %v116, %v2341
    %v2343 = vlaneseq
    %v2344 = vshrl.u32 %v2343, 7
    %v2345 = vsub.s32 1, %v2344
    %v2346 = vrot.slane %v116, %v2345
    %v2413 = vunpack.c.l.b16 %v2210
    %v2414 = vunpack.c.h.b16 %v2210
    %v2415 = vunpack.c.l.b16 %v2211
    %v2416 = vunpack.c.h.b16 %v2211
    %v2417 = vunpack.c.l.b16 %v2212
    %v2418 = vunpack.c.h.b16 %v2212
    %v2419 = vunpack.c.l.b16 %v2213
    %v2420 = vunpack.c.h.b16 %v2213
    %v2421 = vunpack.c.l.b16 %v2214
    %v2422 = vunpack.c.h.b16 %v2214
    %v2423 = vunpack.c.l.b16 %v2215
    %v2424 = vunpack.c.h.b16 %v2215
    %v2425 = vunpack.c.l.b16 %v2216
    %v2426 = vunpack.c.h.b16 %v2216
    %v2427 = vunpack.c.l.b16 %v2217
    %v2428 = vunpack.c.h.b16 %v2217
    %v2429 = vunpack.c.l.b16 %v2218
    %v2430 = vunpack.c.h.b16 %v2218
    %v2431 = vunpack.c.l.b16 %v2219
    %v2432 = vunpack.c.h.b16 %v2219
    %v2433 = vunpack.c.l.b16 %v2220
    %v2434 = vunpack.c.h.b16 %v2220
    %v2435 = vunpack.c.l.b16 %v2221
    %v2436 = vunpack.c.h.b16 %v2221
    %v2437 = vunpack.c.l.b16 %v2222
    %v2438 = vunpack.c.h.b16 %v2222
    %v2439 = vunpack.c.l.b16 %v2223
    %v2440 = vunpack.c.h.b16 %v2223
    %v2441 = vunpack.c.l.b16 %v2224
    %v2442 = vunpack.c.h.b16 %v2224
    %v2443 = vunpack.c.l.b16 %v2225
    %v2444 = vunpack.c.h.b16 %v2225
    %v2445 = vunpack.c.l.b16 %v2226
    %v2446 = vunpack.c.h.b16 %v2226
    %v2447 = vunpack.c.l.b16 %v2227
    %v2448 = vunpack.c.h.b16 %v2227
    %v2449 = vunpack.c.l.b16 %v2228
    %v2450 = vunpack.c.h.b16 %v2228
    %v2451 = vunpack.c.l.b16 %v2229
    %v2452 = vunpack.c.h.b16 %v2229
    %v2453 = vunpack.c.l.b16 %v2230
    %v2454 = vunpack.c.h.b16 %v2230
    %v2455 = vunpack.c.l.b16 %v2231
    %v2456 = vunpack.c.h.b16 %v2231
    %v2457 = vunpack.c.l.b16 %v2232
    %v2458 = vunpack.c.h.b16 %v2232
    %v2459 = vunpack.c.l.b16 %v2233
    %v2460 = vunpack.c.h.b16 %v2233
    %v2461 = vunpack.c.l.b16 %v2234
    %v2462 = vunpack.c.h.b16 %v2234
    %v2463 = vunpack.c.l.b16 %v2235
    %v2464 = vunpack.c.h.b16 %v2235
    %v2465 = vunpack.c.l.b16 %v2236
    %v2466 = vunpack.c.h.b16 %v2236
    %v2467 = vunpack.c.l.b16 %v2237
    %v2468 = vunpack.c.h.b16 %v2237
    %v2469 = vunpack.c.l.b16 %v2238
    %v2470 = vunpack.c.h.b16 %v2238
    %v2471 = vunpack.c.l.b16 %v2239
    %v2472 = vunpack.c.h.b16 %v2239
    %v2473 = vunpack.c.l.b16 %v2240
    %v2474 = vunpack.c.h.b16 %v2240
    %v2475 = vunpack.c.l.b16 %v2241
    %v2476 = vunpack.c.h.b16 %v2241
    %v2477 = vunpack.c.l.b16 %v2242
    %v2478 = vunpack.c.h.b16 %v2242
    %v2479 = vunpack.c.l.b16 %v2243
    %v2480 = vunpack.c.h.b16 %v2243
    %v2481 = vunpack.c.l.b16 %v2244
    %v2482 = vunpack.c.h.b16 %v2244
    %v2483 = vunpack.c.l.b16 %v2245
    %v2484 = vunpack.c.h.b16 %v2245
    %v2485 = vunpack.c.l.b16 %v2246
    %v2486 = vunpack.c.h.b16 %v2246
    %v2487 = vunpack.c.l.b16 %v2247
    %v2488 = vunpack.c.h.b16 %v2247
    %v2489 = vunpack.c.l.b16 %v2248
    %v2490 = vunpack.c.h.b16 %v2248
    %v2491 = vunpack.c.l.b16 %v2249
    %v2492 = vunpack.c.h.b16 %v2249
    %v2493 = vunpack.c.l.b16 %v2250
    %v2494 = vunpack.c.h.b16 %v2250
    %v2495 = vunpack.c.l.b16 %v2251
    %v2496 = vunpack.c.h.b16 %v2251
    %v2497 = vunpack.c.l.b16 %v2252
    %v2498 = vunpack.c.h.b16 %v2252
    %v2499 = vunpack.c.l.b16 %v2253
    %v2500 = vunpack.c.h.b16 %v2253
    %v2501 = vunpack.c.l.b16 %v2254
    %v2502 = vunpack.c.h.b16 %v2254
    %v2503 = vunpack.c.l.b16 %v2255
    %v2504 = vunpack.c.h.b16 %v2255
    %v2505 = vunpack.c.l.b16 %v2256
    %v2506 = vunpack.c.h.b16 %v2256
    %v2507 = vunpack.c.l.b16 %v2257
    %v2508 = vunpack.c.h.b16 %v2257
    %v2509 = vunpack.c.l.b16 %v2258
    %v2510 = vunpack.c.h.b16 %v2258
    %v2511 = vunpack.c.l.b16 %v2259
    %v2512 = vunpack.c.h.b16 %v2259
    %v2513 = vunpack.c.l.b16 %v2260
    %v2514 = vunpack.c.h.b16 %v2260
    %v2515 = vunpack.c.l.b16 %v2261
    %v2516 = vunpack.c.h.b16 %v2261
    %v2517 = vunpack.c.l.b16 %v2262
    %v2518 = vunpack.c.h.b16 %v2262
    %v2519 = vunpack.c.l.b16 %v2263
    %v2520 = vunpack.c.h.b16 %v2263
    %v2521 = vunpack.c.l.b16 %v2264
    %v2522 = vunpack.c.h.b16 %v2264
    %v2523 = vunpack.c.l.b16 %v2265
    %v2524 = vunpack.c.h.b16 %v2265
    %v2525 = vunpack.c.l.b16 %v2266
    %v2526 = vunpack.c.h.b16 %v2266
    %v2527 = vunpack.c.l.b16 %v2267
    %v2528 = vunpack.c.h.b16 %v2267
    %v2529 = vunpack.c.l.b16 %v2268
    %v2530 = vunpack.c.h.b16 %v2268
    %v2531 = vunpack.c.l.b16 %v2269
    %v2532 = vunpack.c.h.b16 %v2269
    %v2533 = vunpack.c.l.b16 %v2270
    %v2534 = vunpack.c.h.b16 %v2270
    %v2535 = vunpack.c.l.b16 %v2271
    %v2536 = vunpack.c.h.b16 %v2271
    %v2537 = vunpack.c.l.b16 %v2272
    %v2538 = vunpack.c.h.b16 %v2272
    %v2539 = vunpack.c.l.b16 %v2273
    %v2540 = vunpack.c.h.b16 %v2273
    %v2541 = vpack.c.b16 %v2415, %v2413
    %v2542 = vpack.c.b16 %v2416, %v2414
    %v2543 = vpack.c.b16 %v2419, %v2417
    %v2544 = vpack.c.b16 %v2420, %v2418
    %v2545 = vpack.c.b16 %v2423, %v2421
    %v2546 = vpack.c.b16 %v2424, %v2422
    %v2547 = vpack.c.b16 %v2427, %v2425
    %v2548 = vpack.c.b16 %v2428, %v2426
    %v2549 = vpack.c.b16 %v2431, %v2429
    %v2550 = vpack.c.b16 %v2432, %v2430
    %v2551 = vpack.c.b16 %v2435, %v2433
    %v2552 = vpack.c.b16 %v2436, %v2434
    %v2553 = vpack.c.b16 %v2439, %v2437
    %v2554 = vpack.c.b16 %v2440, %v2438
    %v2555 = vpack.c.b16 %v2443, %v2441
    %v2556 = vpack.c.b16 %v2444, %v2442
    %v2557 = vpack.c.b16 %v2447, %v2445
    %v2558 = vpack.c.b16 %v2448, %v2446
    %v2559 = vpack.c.b16 %v2451, %v2449
    %v2560 = vpack.c.b16 %v2452, %v2450
    %v2561 = vpack.c.b16 %v2455, %v2453
    %v2562 = vpack.c.b16 %v2456, %v2454
    %v2563 = vpack.c.b16 %v2459, %v2457
    %v2564 = vpack.c.b16 %v2460, %v2458
    %v2565 = vpack.c.b16 %v2463, %v2461
    %v2566 = vpack.c.b16 %v2464, %v2462
    %v2567 = vpack.c.b16 %v2467, %v2465
    %v2568 = vpack.c.b16 %v2468, %v2466
    %v2569 = vpack.c.b16 %v2471, %v2469
    %v2570 = vpack.c.b16 %v2472, %v2470
    %v2571 = vpack.c.b16 %v2475, %v2473
    %v2572 = vpack.c.b16 %v2476, %v2474
    %v2573 = vpack.c.b16 %v2479, %v2477
    %v2574 = vpack.c.b16 %v2480, %v2478
    %v2575 = vpack.c.b16 %v2483, %v2481
    %v2576 = vpack.c.b16 %v2484, %v2482
    %v2577 = vpack.c.b16 %v2487, %v2485
    %v2578 = vpack.c.b16 %v2488, %v2486
    %v2579 = vpack.c.b16 %v2491, %v2489
    %v2580 = vpack.c.b16 %v2492, %v2490
    %v2581 = vpack.c.b16 %v2495, %v2493
    %v2582 = vpack.c.b16 %v2496, %v2494
    %v2583 = vpack.c.b16 %v2499, %v2497
    %v2584 = vpack.c.b16 %v2500, %v2498
    %v2585 = vpack.c.b16 %v2503, %v2501
    %v2586 = vpack.c.b16 %v2504, %v2502
    %v2587 = vpack.c.b16 %v2507, %v2505
    %v2588 = vpack.c.b16 %v2508, %v2506
    %v2589 = vpack.c.b16 %v2511, %v2509
    %v2590 = vpack.c.b16 %v2512, %v2510
    %v2591 = vpack.c.b16 %v2515, %v2513
    %v2592 = vpack.c.b16 %v2516, %v2514
    %v2593 = vpack.c.b16 %v2519, %v2517
    %v2594 = vpack.c.b16 %v2520, %v2518
    %v2595 = vpack.c.b16 %v2523, %v2521
    %v2596 = vpack.c.b16 %v2524, %v2522
    %v2597 = vpack.c.b16 %v2527, %v2525
    %v2598 = vpack.c.b16 %v2528, %v2526
    %v2599 = vpack.c.b16 %v2531, %v2529
    %v2600 = vpack.c.b16 %v2532, %v2530
    %v2601 = vpack.c.b16 %v2535, %v2533
    %v2602 = vpack.c.b16 %v2536, %v2534
    %v2603 = vpack.c.b16 %v2539, %v2537
    %v2604 = vpack.c.b16 %v2540, %v2538
    %2669 = vmatprep.subr.bf16.mxu0 %v2542
    %2670 = vmatpush1.bf16.msra.mxu0 %v2541
    %2671 = vmatprep.subr.bf16.mxu0 %v2544
    %2672 = vmatpush1.bf16.msra.mxu0 %v2543
    %2673 = vmatprep.subr.bf16.mxu0 %v2546
    %2674 = vmatpush1.bf16.msra.mxu0 %v2545
    %2675 = vmatprep.subr.bf16.mxu0 %v2548
    %2676 = vmatpush1.bf16.msra.mxu0 %v2547
    %2677 = vmatprep.subr.bf16.mxu0 %v2550
    %2678 = vmatpush1.bf16.msra.mxu0 %v2549
    %2679 = vmatprep.subr.bf16.mxu0 %v2552
    %2680 = vmatpush1.bf16.msra.mxu0 %v2551
    %2681 = vmatprep.subr.bf16.mxu0 %v2554
    %2682 = vmatpush1.bf16.msra.mxu0 %v2553
    %2683 = vmatprep.subr.bf16.mxu0 %v2556
    %2684 = vmatpush1.bf16.msra.mxu0 %v2555
    %2685 = vmatprep.subr.bf16.mxu0 %v2558
    %2686 = vmatpush1.bf16.msra.mxu0 %v2557
    %2687 = vmatprep.subr.bf16.mxu0 %v2560
    %2688 = vmatpush1.bf16.msra.mxu0 %v2559
    %2689 = vmatprep.subr.bf16.mxu0 %v2562
    %2690 = vmatpush1.bf16.msra.mxu0 %v2561
    %2691 = vmatprep.subr.bf16.mxu0 %v2564
    %2692 = vmatpush1.bf16.msra.mxu0 %v2563
    %2693 = vmatprep.subr.bf16.mxu0 %v2566
    %2694 = vmatpush1.bf16.msra.mxu0 %v2565
    %2695 = vmatprep.subr.bf16.mxu0 %v2568
    %2696 = vmatpush1.bf16.msra.mxu0 %v2567
    %2697 = vmatprep.subr.bf16.mxu0 %v2570
    %2698 = vmatpush1.bf16.msra.mxu0 %v2569
    %2699 = vmatprep.subr.bf16.mxu0 %v2572
    %2700 = vmatpush1.bf16.msra.mxu0 %v2571
    %2701 = vmatprep.mubr.bf16.mxu0 %v2275
    %2702 = vmatmul.mubr.bf16.gmra.mrb[0].mxu0 %v2274
    %v2703 = vpop.f32.mrb[0].mxu0
    %v2704 = vadd.f32 %v2342, %v2703
    %v2705 = vpop.f32.mrb[0].mxu0
    %v2706 = vadd.f32 %v2346, %v2705
    %v2707 = vpop.f32.mrb[0].mxu0
    %v2708 = vadd.f32 %v2342, %v2707
    %v2709 = vpop.f32.mrb[0].mxu0
    %v2710 = vadd.f32 %v2346, %v2709
    %2711 = vmatprep.mubr.bf16.mxu0 %v2279
    %2712 = vmatmul.mubr.bf16.gmra.mrb[0].mxu0 %v2278
    %v2713 = vpop.f32.mrb[0].mxu0
    %v2714 = vadd.f32 %v2342, %v2713
    %v2715 = vpop.f32.mrb[0].mxu0
    %v2716 = vadd.f32 %v2346, %v2715
    %v2717 = vpop.f32.mrb[0].mxu0
    %v2718 = vadd.f32 %v2342, %v2717
    %v2719 = vpop.f32.mrb[0].mxu0
    %v2720 = vadd.f32 %v2346, %v2719
    %2721 = vmatprep.mubr.bf16.mxu0 %v2283
    %2722 = vmatmul.mubr.bf16.gmra.mrb[0].mxu0 %v2282
    %v2723 = vpop.f32.mrb[0].mxu0
    %v2724 = vadd.f32 %v2342, %v2723
    %v2725 = vpop.f32.mrb[0].mxu0
    %v2726 = vadd.f32 %v2346, %v2725
    %v2727 = vpop.f32.mrb[0].mxu0
    %v2728 = vadd.f32 %v2342, %v2727
    %v2729 = vpop.f32.mrb[0].mxu0
    %v2730 = vadd.f32 %v2346, %v2729
    %2731 = vmatprep.mubr.bf16.mxu0 %v2287
    %2732 = vmatmul.mubr.bf16.gmra.mrb[0].mxu0 %v2286
    %v2733 = vpop.f32.mrb[0].mxu0
    %v2734 = vadd.f32 %v2342, %v2733
    %v2735 = vpop.f32.mrb[0].mxu0
    %v2736 = vadd.f32 %v2346, %v2735
    %v2737 = vpop.f32.mrb[0].mxu0
    %v2738 = vadd.f32 %v2342, %v2737
    %v2739 = vpop.f32.mrb[0].mxu0
    %v2740 = vadd.f32 %v2346, %v2739
    %2741 = vmatprep.mubr.bf16.mxu0 %v2291
    %2742 = vmatmul.mubr.bf16.gmra.mrb[0].mxu0 %v2290
    %v2743 = vpop.f32.mrb[0].mxu0
    %v2744 = vadd.f32 %v2342, %v2743
    %v2745 = vpop.f32.mrb[0].mxu0
    %v2746 = vadd.f32 %v2346, %v2745
    %v2747 = vpop.f32.mrb[0].mxu0
    %v2748 = vadd.f32 %v2342, %v2747
    %v2749 = vpop.f32.mrb[0].mxu0
    %v2750 = vadd.f32 %v2346, %v2749
    %2751 = vmatprep.mubr.bf16.mxu0 %v2295
    %2752 = vmatmul.mubr.bf16.gmra.mrb[0].mxu0 %v2294
    %v2753 = vpop.f32.mrb[0].mxu0
    %v2754 = vadd.f32 %v2342, %v2753
    %v2755 = vpop.f32.mrb[0].mxu0
    %v2756 = vadd.f32 %v2346, %v2755
    %v2757 = vpop.f32.mrb[0].mxu0
    %v2758 = vadd.f32 %v2342, %v2757
    %v2759 = vpop.f32.mrb[0].mxu0
    %v2760 = vadd.f32 %v2346, %v2759
    %2761 = vmatprep.mubr.bf16.mxu0 %v2299
    %2762 = vmatmul.mubr.bf16.gmra.mrb[0].mxu0 %v2298
    %v2763 = vpop.f32.mrb[0].mxu0
    %v2764 = vadd.f32 %v2342, %v2763
    %v2765 = vpop.f32.mrb[0].mxu0
    %v2766 = vadd.f32 %v2346, %v2765
    %v2767 = vpop.f32.mrb[0].mxu0
    %v2768 = vadd.f32 %v2342, %v2767
    %v2769 = vpop.f32.mrb[0].mxu0
    %v2770 = vadd.f32 %v2346, %v2769
    %2771 = vmatprep.mubr.bf16.mxu0 %v2303
    %2772 = vmatmul.mubr.bf16.gmra.mrb[0].mxu0 %v2302
    %v2773 = vpop.f32.mrb[0].mxu0
    %v2774 = vadd.f32 %v2342, %v2773
    %v2775 = vpop.f32.mrb[0].mxu0
    %v2776 = vadd.f32 %v2346, %v2775
    %v2777 = vpop.f32.mrb[0].mxu0
    %v2778 = vadd.f32 %v2342, %v2777
    %v2779 = vpop.f32.mrb[0].mxu0
    %v2780 = vadd.f32 %v2346, %v2779
    %2781 = vmatprep.mubr.bf16.mxu0 %v2307
    %2782 = vmatmul.mubr.bf16.gmra.mrb[0].mxu0 %v2306
    %v2783 = vpop.f32.mrb[0].mxu0
    %v2784 = vadd.f32 %v2342, %v2783
    %v2785 = vpop.f32.mrb[0].mxu0
    %v2786 = vadd.f32 %v2346, %v2785
    %v2787 = vpop.f32.mrb[0].mxu0
    %v2788 = vadd.f32 %v2342, %v2787
    %v2789 = vpop.f32.mrb[0].mxu0
    %v2790 = vadd.f32 %v2346, %v2789
    %2791 = vmatprep.mubr.bf16.mxu0 %v2311
    %2792 = vmatmul.mubr.bf16.gmra.mrb[0].mxu0 %v2310
    %v2793 = vpop.f32.mrb[0].mxu0
    %v2794 = vadd.f32 %v2342, %v2793
    %v2795 = vpop.f32.mrb[0].mxu0
    %v2796 = vadd.f32 %v2346, %v2795
    %v2797 = vpop.f32.mrb[0].mxu0
    %v2798 = vadd.f32 %v2342, %v2797
    %v2799 = vpop.f32.mrb[0].mxu0
    %v2800 = vadd.f32 %v2346, %v2799
    %2801 = vmatprep.mubr.bf16.mxu0 %v2315
    %2802 = vmatmul.mubr.bf16.gmra.mrb[0].mxu0 %v2314
    %v2803 = vpop.f32.mrb[0].mxu0
    %v2804 = vadd.f32 %v2342, %v2803
    %v2805 = vpop.f32.mrb[0].mxu0
    %v2806 = vadd.f32 %v2346, %v2805
    %v2807 = vpop.f32.mrb[0].mxu0
    %v2808 = vadd.f32 %v2342, %v2807
    %v2809 = vpop.f32.mrb[0].mxu0
    %v2810 = vadd.f32 %v2346, %v2809
    %2811 = vmatprep.mubr.bf16.mxu0 %v2319
    %2812 = vmatmul.mubr.bf16.gmra.mrb[0].mxu0 %v2318
    %v2813 = vpop.f32.mrb[0].mxu0
    %v2814 = vadd.f32 %v2342, %v2813
    %v2815 = vpop.f32.mrb[0].mxu0
    %v2816 = vadd.f32 %v2346, %v2815
    %v2817 = vpop.f32.mrb[0].mxu0
    %v2818 = vadd.f32 %v2342, %v2817
    %v2819 = vpop.f32.mrb[0].mxu0
    %v2820 = vadd.f32 %v2346, %v2819
    %2821 = vmatprep.mubr.bf16.mxu0 %v2323
    %2822 = vmatmul.mubr.bf16.gmra.mrb[0].mxu0 %v2322
    %v2823 = vpop.f32.mrb[0].mxu0
    %v2824 = vadd.f32 %v2342, %v2823
    %v2825 = vpop.f32.mrb[0].mxu0
    %v2826 = vadd.f32 %v2346, %v2825
    %v2827 = vpop.f32.mrb[0].mxu0
    %v2828 = vadd.f32 %v2342, %v2827
    %v2829 = vpop.f32.mrb[0].mxu0
    %v2830 = vadd.f32 %v2346, %v2829
    %2831 = vmatprep.mubr.bf16.mxu0 %v2327
    %2832 = vmatmul.mubr.bf16.gmra.mrb[0].mxu0 %v2326
    %v2833 = vpop.f32.mrb[0].mxu0
    %v2834 = vadd.f32 %v2342, %v2833
    %v2835 = vpop.f32.mrb[0].mxu0
    %v2836 = vadd.f32 %v2346, %v2835
    %v2837 = vpop.f32.mrb[0].mxu0
    %v2838 = vadd.f32 %v2342, %v2837
    %v2839 = vpop.f32.mrb[0].mxu0
    %v2840 = vadd.f32 %v2346, %v2839
    %2841 = vmatprep.mubr.bf16.mxu0 %v2331
    %2842 = vmatmul.mubr.bf16.gmra.mrb[0].mxu0 %v2330
    %v2843 = vpop.f32.mrb[0].mxu0
    %v2844 = vadd.f32 %v2342, %v2843
    %v2845 = vpop.f32.mrb[0].mxu0
    %v2846 = vadd.f32 %v2346, %v2845
    %v2847 = vpop.f32.mrb[0].mxu0
    %v2848 = vadd.f32 %v2342, %v2847
    %v2849 = vpop.f32.mrb[0].mxu0
    %v2850 = vadd.f32 %v2346, %v2849
    %2851 = vmatprep.mubr.bf16.mxu0 %v2335
    %2852 = vmatmul.mubr.bf16.gmra.mrb[0].mxu0 %v2334
    %v2853 = vpop.f32.mrb[0].mxu0
    %v2854 = vadd.f32 %v2342, %v2853
    %v2855 = vpop.f32.mrb[0].mxu0
    %v2856 = vadd.f32 %v2346, %v2855
    %v2857 = vpop.f32.mrb[0].mxu0
    %v2858 = vadd.f32 %v2342, %v2857
    %v2859 = vpop.f32.mrb[0].mxu0
    %v2860 = vadd.f32 %v2346, %v2859
    %2861 = vdwg.mxu0
    %2862 = vmatprep.subr.bf16.mxu0 %v2574
    %2863 = vmatpush1.bf16.msra.mxu0 %v2573
    %2864 = vmatprep.subr.bf16.mxu0 %v2576
    %2865 = vmatpush1.bf16.msra.mxu0 %v2575
    %2866 = vmatprep.subr.bf16.mxu0 %v2578
    %2867 = vmatpush1.bf16.msra.mxu0 %v2577
    %2868 = vmatprep.subr.bf16.mxu0 %v2580
    %2869 = vmatpush1.bf16.msra.mxu0 %v2579
    %2870 = vmatprep.subr.bf16.mxu0 %v2582
    %2871 = vmatpush1.bf16.msra.mxu0 %v2581
    %2872 = vmatprep.subr.bf16.mxu0 %v2584
    %2873 = vmatpush1.bf16.msra.mxu0 %v2583
    %2874 = vmatprep.subr.bf16.mxu0 %v2586
    %2875 = vmatpush1.bf16.msra.mxu0 %v2585
    %2876 = vmatprep.subr.bf16.mxu0 %v2588
    %2877 = vmatpush1.bf16.msra.mxu0 %v2587
    %2878 = vmatprep.subr.bf16.mxu0 %v2590
    %2879 = vmatpush1.bf16.msra.mxu0 %v2589
    %2880 = vmatprep.subr.bf16.mxu0 %v2592
    %2881 = vmatpush1.bf16.msra.mxu0 %v2591
    %2882 = vmatprep.subr.bf16.mxu0 %v2594
    %2883 = vmatpush1.bf16.msra.mxu0 %v2593
    %2884 = vmatprep.subr.bf16.mxu0 %v2596
    %2885 = vmatpush1.bf16.msra.mxu0 %v2595
    %2886 = vmatprep.subr.bf16.mxu0 %v2598
    %2887 = vmatpush1.bf16.msra.mxu0 %v2597
    %2888 = vmatprep.subr.bf16.mxu0 %v2600
    %2889 = vmatpush1.bf16.msra.mxu0 %v2599
    %2890 = vmatprep.subr.bf16.mxu0 %v2602
    %2891 = vmatpush1.bf16.msra.mxu0 %v2601
    %2892 = vmatprep.subr.bf16.mxu0 %v2604
    %2893 = vmatpush1.bf16.msra.mxu0 %v2603
    %2894 = vmatprep.mubr.bf16.mxu0 %v2277
    %2895 = vmatmul.mubr.bf16.gmra.mrb[0].mxu0 %v2276
    %v2896 = vpop.f32.mrb[0].mxu0
    %v2897 = vadd.f32 %v2704, %v2896
    %v2898 = vpop.f32.mrb[0].mxu0
    %v2899 = vadd.f32 %v2706, %v2898
    %v2900 = vpop.f32.mrb[0].mxu0
    %v2901 = vadd.f32 %v2708, %v2900
    %v2902 = vpop.f32.mrb[0].mxu0
    %v2903 = vadd.f32 %v2710, %v2902
    %2904 = vmatprep.mubr.bf16.mxu0 %v2281
    %2905 = vmatmul.mubr.bf16.gmra.mrb[0].mxu0 %v2280
    %v2906 = vpop.f32.mrb[0].mxu0
    %v2907 = vadd.f32 %v2714, %v2906
    %v2908 = vpop.f32.mrb[0].mxu0
    %v2909 = vadd.f32 %v2716, %v2908
    %v2910 = vpop.f32.mrb[0].mxu0
    %v2911 = vadd.f32 %v2718, %v2910
    %v2912 = vpop.f32.mrb[0].mxu0
    %v2913 = vadd.f32 %v2720, %v2912
    %2914 = vmatprep.mubr.bf16.mxu0 %v2285
    %2915 = vmatmul.mubr.bf16.gmra.mrb[0].mxu0 %v2284
    %v2916 = vpop.f32.mrb[0].mxu0
    %v2917 = vadd.f32 %v2724, %v2916
    %v2918 = vpop.f32.mrb[0].mxu0
    %v2919 = vadd.f32 %v2726, %v2918
    %v2920 = vpop.f32.mrb[0].mxu0
    %v2921 = vadd.f32 %v2728, %v2920
    %v2922 = vpop.f32.mrb[0].mxu0
    %v2923 = vadd.f32 %v2730, %v2922
    %2924 = vmatprep.mubr.bf16.mxu0 %v2289
    %2925 = vmatmul.mubr.bf16.gmra.mrb[0].mxu0 %v2288
    %v2926 = vpop.f32.mrb[0].mxu0
    %v2927 = vadd.f32 %v2734, %v2926
    %v2928 = vpop.f32.mrb[0].mxu0
    %v2929 = vadd.f32 %v2736, %v2928
    %v2930 = vpop.f32.mrb[0].mxu0
    %v2931 = vadd.f32 %v2738, %v2930
    %v2932 = vpop.f32.mrb[0].mxu0
    %v2933 = vadd.f32 %v2740, %v2932
    %2934 = vmatprep.mubr.bf16.mxu0 %v2293
    %2935 = vmatmul.mubr.bf16.gmra.mrb[0].mxu0 %v2292
    %v2936 = vpop.f32.mrb[0].mxu0
    %v2937 = vadd.f32 %v2744, %v2936
    %v2938 = vpop.f32.mrb[0].mxu0
    %v2939 = vadd.f32 %v2746, %v2938
    %v2940 = vpop.f32.mrb[0].mxu0
    %v2941 = vadd.f32 %v2748, %v2940
    %v2942 = vpop.f32.mrb[0].mxu0
    %v2943 = vadd.f32 %v2750, %v2942
    %2944 = vmatprep.mubr.bf16.mxu0 %v2297
    %2945 = vmatmul.mubr.bf16.gmra.mrb[0].mxu0 %v2296
    %v2946 = vpop.f32.mrb[0].mxu0
    %v2947 = vadd.f32 %v2754, %v2946
    %v2948 = vpop.f32.mrb[0].mxu0
    %v2949 = vadd.f32 %v2756, %v2948
    %v2950 = vpop.f32.mrb[0].mxu0
    %v2951 = vadd.f32 %v2758, %v2950
    %v2952 = vpop.f32.mrb[0].mxu0
    %v2953 = vadd.f32 %v2760, %v2952
    %2954 = vmatprep.mubr.bf16.mxu0 %v2301
    %2955 = vmatmul.mubr.bf16.gmra.mrb[0].mxu0 %v2300
    %v2956 = vpop.f32.mrb[0].mxu0
    %v2957 = vadd.f32 %v2764, %v2956
    %v2958 = vpop.f32.mrb[0].mxu0
    %v2959 = vadd.f32 %v2766, %v2958
    %v2960 = vpop.f32.mrb[0].mxu0
    %v2961 = vadd.f32 %v2768, %v2960
    %v2962 = vpop.f32.mrb[0].mxu0
    %v2963 = vadd.f32 %v2770, %v2962
    %2964 = vmatprep.mubr.bf16.mxu0 %v2305
    %2965 = vmatmul.mubr.bf16.gmra.mrb[0].mxu0 %v2304
    %v2966 = vpop.f32.mrb[0].mxu0
    %v2967 = vadd.f32 %v2774, %v2966
    %v2968 = vpop.f32.mrb[0].mxu0
    %v2969 = vadd.f32 %v2776, %v2968
    %v2970 = vpop.f32.mrb[0].mxu0
    %v2971 = vadd.f32 %v2778, %v2970
    %v2972 = vpop.f32.mrb[0].mxu0
    %v2973 = vadd.f32 %v2780, %v2972
    %2974 = vmatprep.mubr.bf16.mxu0 %v2309
    %2975 = vmatmul.mubr.bf16.gmra.mrb[0].mxu0 %v2308
    %v2976 = vpop.f32.mrb[0].mxu0
    %v2977 = vadd.f32 %v2784, %v2976
    %v2978 = vpop.f32.mrb[0].mxu0
    %v2979 = vadd.f32 %v2786, %v2978
    %v2980 = vpop.f32.mrb[0].mxu0
    %v2981 = vadd.f32 %v2788, %v2980
    %v2982 = vpop.f32.mrb[0].mxu0
    %v2983 = vadd.f32 %v2790, %v2982
    %2984 = vmatprep.mubr.bf16.mxu0 %v2313
    %2985 = vmatmul.mubr.bf16.gmra.mrb[0].mxu0 %v2312
    %v2986 = vpop.f32.mrb[0].mxu0
    %v2987 = vadd.f32 %v2794, %v2986
    %v2988 = vpop.f32.mrb[0].mxu0
    %v2989 = vadd.f32 %v2796, %v2988
    %v2990 = vpop.f32.mrb[0].mxu0
    %v2991 = vadd.f32 %v2798, %v2990
    %v2992 = vpop.f32.mrb[0].mxu0
    %v2993 = vadd.f32 %v2800, %v2992
    %2994 = vmatprep.mubr.bf16.mxu0 %v2317
    %2995 = vmatmul.mubr.bf16.gmra.mrb[0].mxu0 %v2316
    %v2996 = vpop.f32.mrb[0].mxu0
    %v2997 = vadd.f32 %v2804, %v2996
    %v2998 = vpop.f32.mrb[0].mxu0
    %v2999 = vadd.f32 %v2806, %v2998
    %v3000 = vpop.f32.mrb[0].mxu0
    %v3001 = vadd.f32 %v2808, %v3000
    %v3002 = vpop.f32.mrb[0].mxu0
    %v3003 = vadd.f32 %v2810, %v3002
    %3004 = vmatprep.mubr.bf16.mxu0 %v2321
    %3005 = vmatmul.mubr.bf16.gmra.mrb[0].mxu0 %v2320
    %v3006 = vpop.f32.mrb[0].mxu0
    %v3007 = vadd.f32 %v2814, %v3006
    %v3008 = vpop.f32.mrb[0].mxu0
    %v3009 = vadd.f32 %v2816, %v3008
    %v3010 = vpop.f32.mrb[0].mxu0
    %v3011 = vadd.f32 %v2818, %v3010
    %v3012 = vpop.f32.mrb[0].mxu0
    %v3013 = vadd.f32 %v2820, %v3012
    %3014 = vmatprep.mubr.bf16.mxu0 %v2325
    %3015 = vmatmul.mubr.bf16.gmra.mrb[0].mxu0 %v2324
    %v3016 = vpop.f32.mrb[0].mxu0
    %v3017 = vadd.f32 %v2824, %v3016
    %v3018 = vpop.f32.mrb[0].mxu0
    %v3019 = vadd.f32 %v2826, %v3018
    %v3020 = vpop.f32.mrb[0].mxu0
    %v3021 = vadd.f32 %v2828, %v3020
    %v3022 = vpop.f32.mrb[0].mxu0
    %v3023 = vadd.f32 %v2830, %v3022
    %3024 = vmatprep.mubr.bf16.mxu0 %v2329
    %3025 = vmatmul.mubr.bf16.gmra.mrb[0].mxu0 %v2328
    %v3026 = vpop.f32.mrb[0].mxu0
    %v3027 = vadd.f32 %v2834, %v3026
    %v3028 = vpop.f32.mrb[0].mxu0
    %v3029 = vadd.f32 %v2836, %v3028
    %v3030 = vpop.f32.mrb[0].mxu0
    %v3031 = vadd.f32 %v2838, %v3030
    %v3032 = vpop.f32.mrb[0].mxu0
    %v3033 = vadd.f32 %v2840, %v3032
    %3034 = vmatprep.mubr.bf16.mxu0 %v2333
    %3035 = vmatmul.mubr.bf16.gmra.mrb[0].mxu0 %v2332
    %v3036 = vpop.f32.mrb[0].mxu0
    %v3037 = vadd.f32 %v2844, %v3036
    %v3038 = vpop.f32.mrb[0].mxu0
    %v3039 = vadd.f32 %v2846, %v3038
    %v3040 = vpop.f32.mrb[0].mxu0
    %v3041 = vadd.f32 %v2848, %v3040
    %v3042 = vpop.f32.mrb[0].mxu0
    %v3043 = vadd.f32 %v2850, %v3042
    %3044 = vmatprep.mubr.bf16.mxu0 %v2337
    %3045 = vmatmul.mubr.bf16.gmra.mrb[0].mxu0 %v2336
    %v3046 = vpop.f32.mrb[0].mxu0
    %v3047 = vadd.f32 %v2854, %v3046
    %v3048 = vpop.f32.mrb[0].mxu0
    %v3049 = vadd.f32 %v2856, %v3048
    %v3050 = vpop.f32.mrb[0].mxu0
    %v3051 = vadd.f32 %v2858, %v3050
    %v3052 = vpop.f32.mrb[0].mxu0
    %v3053 = vadd.f32 %v2860, %v3052
    %3054 = vdwg.mxu0
    %v3055 = vmax.f32 %v2897, 0.0
    %v3056 = vmax.f32 %v2899, 0.0
    %v3057 = vmax.f32 %v2901, 0.0
    %v3058 = vmax.f32 %v2903, 0.0
    %v3059 = vmax.f32 %v2907, 0.0
    %v3060 = vmax.f32 %v2909, 0.0
    %v3061 = vmax.f32 %v2911, 0.0
    %v3062 = vmax.f32 %v2913, 0.0
    %v3063 = vmax.f32 %v2917, 0.0
    %v3064 = vmax.f32 %v2919, 0.0
    %v3065 = vmax.f32 %v2921, 0.0
    %v3066 = vmax.f32 %v2923, 0.0
    %v3067 = vmax.f32 %v2927, 0.0
    %v3068 = vmax.f32 %v2929, 0.0
    %v3069 = vmax.f32 %v2931, 0.0
    %v3070 = vmax.f32 %v2933, 0.0
    %v3071 = vmax.f32 %v2937, 0.0
    %v3072 = vmax.f32 %v2939, 0.0
    %v3073 = vmax.f32 %v2941, 0.0
    %v3074 = vmax.f32 %v2943, 0.0
    %v3075 = vmax.f32 %v2947, 0.0
    %v3076 = vmax.f32 %v2949, 0.0
    %v3077 = vmax.f32 %v2951, 0.0
    %v3078 = vmax.f32 %v2953, 0.0
    %v3079 = vmax.f32 %v2957, 0.0
    %v3080 = vmax.f32 %v2959, 0.0
    %v3081 = vmax.f32 %v2961, 0.0
    %v3082 = vmax.f32 %v2963, 0.0
    %v3083 = vmax.f32 %v2967, 0.0
    %v3084 = vmax.f32 %v2969, 0.0
    %v3085 = vmax.f32 %v2971, 0.0
    %v3086 = vmax.f32 %v2973, 0.0
    %v3087 = vmax.f32 %v2977, 0.0
    %v3088 = vmax.f32 %v2979, 0.0
    %v3089 = vmax.f32 %v2981, 0.0
    %v3090 = vmax.f32 %v2983, 0.0
    %v3091 = vmax.f32 %v2987, 0.0
    %v3092 = vmax.f32 %v2989, 0.0
    %v3093 = vmax.f32 %v2991, 0.0
    %v3094 = vmax.f32 %v2993, 0.0
    %v3095 = vmax.f32 %v2997, 0.0
    %v3096 = vmax.f32 %v2999, 0.0
    %v3097 = vmax.f32 %v3001, 0.0
    %v3098 = vmax.f32 %v3003, 0.0
    %v3099 = vmax.f32 %v3007, 0.0
    %v3100 = vmax.f32 %v3009, 0.0
    %v3101 = vmax.f32 %v3011, 0.0
    %v3102 = vmax.f32 %v3013, 0.0
    %v3103 = vmax.f32 %v3017, 0.0
    %v3104 = vmax.f32 %v3019, 0.0
    %v3105 = vmax.f32 %v3021, 0.0
    %v3106 = vmax.f32 %v3023, 0.0
    %v3107 = vmax.f32 %v3027, 0.0
    %v3108 = vmax.f32 %v3029, 0.0
    %v3109 = vmax.f32 %v3031, 0.0
    %v3110 = vmax.f32 %v3033, 0.0
    %v3111 = vmax.f32 %v3037, 0.0
    %v3112 = vmax.f32 %v3039, 0.0
    %v3113 = vmax.f32 %v3041, 0.0
    %v3114 = vmax.f32 %v3043, 0.0
    %v3115 = vmax.f32 %v3047, 0.0
    %v3116 = vmax.f32 %v3049, 0.0
    %v3117 = vmax.f32 %v3051, 0.0
    %v3118 = vmax.f32 %v3053, 0.0
    %v3119 = vld [vmem:[%s4] sm:$0xff]
    %v3120 = vld [vmem:[%s4 + $0x8] sm:$0xff]
    %v3121 = vld [vmem:[%s4 + $0x10] sm:$0xff]
    %v3122 = vld [vmem:[%s4 + $0x18] sm:$0xff]
    %v3123 = vld [vmem:[%s4 + $0x20] sm:$0xff]
    %v3124 = vld [vmem:[%s4 + $0x28] sm:$0xff]
    %v3125 = vld [vmem:[%s4 + $0x30] sm:$0xff]
    %v3126 = vld [vmem:[%s4 + $0x38] sm:$0xff]
    %v3127 = vld [vmem:[%s4 + $0x40] sm:$0xff]
    %v3128 = vld [vmem:[%s4 + $0x48] sm:$0xff]
    %v3129 = vld [vmem:[%s4 + $0x50] sm:$0xff]
    %v3130 = vld [vmem:[%s4 + $0x58] sm:$0xff]
    %v3131 = vld [vmem:[%s4 + $0x60] sm:$0xff]
    %v3132 = vld [vmem:[%s4 + $0x68] sm:$0xff]
    %v3133 = vld [vmem:[%s4 + $0x70] sm:$0xff]
    %v3134 = vld [vmem:[%s4 + $0x78] sm:$0xff]
    %v3135 = vld [vmem:[%s4 + $0x80] sm:$0xff]
    %v3136 = vld [vmem:[%s4 + $0x88] sm:$0xff]
    %v3137 = vld [vmem:[%s4 + $0x90] sm:$0xff]
    %v3138 = vld [vmem:[%s4 + $0x98] sm:$0xff]
    %v3139 = vld [vmem:[%s4 + $0xa0] sm:$0xff]
    %v3140 = vld [vmem:[%s4 + $0xa8] sm:$0xff]
    %v3141 = vld [vmem:[%s4 + $0xb0] sm:$0xff]
    %v3142 = vld [vmem:[%s4 + $0xb8] sm:$0xff]
    %v3143 = vld [vmem:[%s4 + $0xc0] sm:$0xff]
    %v3144 = vld [vmem:[%s4 + $0xc8] sm:$0xff]
    %v3145 = vld [vmem:[%s4 + $0xd0] sm:$0xff]
    %v3146 = vld [vmem:[%s4 + $0xd8] sm:$0xff]
    %v3147 = vld [vmem:[%s4 + $0xe0] sm:$0xff]
    %v3148 = vld [vmem:[%s4 + $0xe8] sm:$0xff]
    %v3149 = vld [vmem:[%s4 + $0xf0] sm:$0xff]
    %v3150 = vld [vmem:[%s4 + $0xf8] sm:$0xff]
    %v3151 = vpack.c.bf16 %v2148, %v2146
    %v3152 = vpack.c.bf16 %v2149, %v2147
    %v3153 = vpack.c.bf16 %v2152, %v2150
    %v3154 = vpack.c.bf16 %v2153, %v2151
    %v3155 = vpack.c.bf16 %v2156, %v2154
    %v3156 = vpack.c.bf16 %v2157, %v2155
    %v3157 = vpack.c.bf16 %v2160, %v2158
    %v3158 = vpack.c.bf16 %v2161, %v2159
    %v3159 = vpack.c.bf16 %v2164, %v2162
    %v3160 = vpack.c.bf16 %v2165, %v2163
    %v3161 = vpack.c.bf16 %v2168, %v2166
    %v3162 = vpack.c.bf16 %v2169, %v2167
    %v3163 = vpack.c.bf16 %v2172, %v2170
    %v3164 = vpack.c.bf16 %v2173, %v2171
    %v3165 = vpack.c.bf16 %v2176, %v2174
    %v3166 = vpack.c.bf16 %v2177, %v2175
    %v3167 = vpack.c.bf16 %v2180, %v2178
    %v3168 = vpack.c.bf16 %v2181, %v2179
    %v3169 = vpack.c.bf16 %v2184, %v2182
    %v3170 = vpack.c.bf16 %v2185, %v2183
    %v3171 = vpack.c.bf16 %v2188, %v2186
    %v3172 = vpack.c.bf16 %v2189, %v2187
    %v3173 = vpack.c.bf16 %v2192, %v2190
    %v3174 = vpack.c.bf16 %v2193, %v2191
    %v3175 = vpack.c.bf16 %v2196, %v2194
    %v3176 = vpack.c.bf16 %v2197, %v2195
    %v3177 = vpack.c.bf16 %v2200, %v2198
    %v3178 = vpack.c.bf16 %v2201, %v2199
    %v3179 = vpack.c.bf16 %v2204, %v2202
    %v3180 = vpack.c.bf16 %v2205, %v2203
    %v3181 = vpack.c.bf16 %v2208, %v2206
    %v3182 = vpack.c.bf16 %v2209, %v2207
    %v3184 = vlaneseq
    %v3185 = vshrl.u32 %v3184, 7
    %v3186 = vsub.s32 0, %v3185
    %v3187 = vrot.slane %v117, %v3186
    %v3188 = vlaneseq
    %v3189 = vshrl.u32 %v3188, 7
    %v3190 = vsub.s32 1, %v3189
    %v3191 = vrot.slane %v117, %v3190
    %v3226 = vunpack.c.l.b16 %v3119
    %v3227 = vunpack.c.h.b16 %v3119
    %v3228 = vunpack.c.l.b16 %v3120
    %v3229 = vunpack.c.h.b16 %v3120
    %v3230 = vunpack.c.l.b16 %v3121
    %v3231 = vunpack.c.h.b16 %v3121
    %v3232 = vunpack.c.l.b16 %v3122
    %v3233 = vunpack.c.h.b16 %v3122
    %v3234 = vunpack.c.l.b16 %v3123
    %v3235 = vunpack.c.h.b16 %v3123
    %v3236 = vunpack.c.l.b16 %v3124
    %v3237 = vunpack.c.h.b16 %v3124
    %v3238 = vunpack.c.l.b16 %v3125
    %v3239 = vunpack.c.h.b16 %v3125
    %v3240 = vunpack.c.l.b16 %v3126
    %v3241 = vunpack.c.h.b16 %v3126
    %v3242 = vunpack.c.l.b16 %v3127
    %v3243 = vunpack.c.h.b16 %v3127
    %v3244 = vunpack.c.l.b16 %v3128
    %v3245 = vunpack.c.h.b16 %v3128
    %v3246 = vunpack.c.l.b16 %v3129
    %v3247 = vunpack.c.h.b16 %v3129
    %v3248 = vunpack.c.l.b16 %v3130
    %v3249 = vunpack.c.h.b16 %v3130
    %v3250 = vunpack.c.l.b16 %v3131
    %v3251 = vunpack.c.h.b16 %v3131
    %v3252 = vunpack.c.l.b16 %v3132
    %v3253 = vunpack.c.h.b16 %v3132
    %v3254 = vunpack.c.l.b16 %v3133
    %v3255 = vunpack.c.h.b16 %v3133
    %v3256 = vunpack.c.l.b16 %v3134
    %v3257 = vunpack.c.h.b16 %v3134
    %v3258 = vunpack.c.l.b16 %v3135
    %v3259 = vunpack.c.h.b16 %v3135
    %v3260 = vunpack.c.l.b16 %v3136
    %v3261 = vunpack.c.h.b16 %v3136
    %v3262 = vunpack.c.l.b16 %v3137
    %v3263 = vunpack.c.h.b16 %v3137
    %v3264 = vunpack.c.l.b16 %v3138
    %v3265 = vunpack.c.h.b16 %v3138
    %v3266 = vunpack.c.l.b16 %v3139
    %v3267 = vunpack.c.h.b16 %v3139
    %v3268 = vunpack.c.l.b16 %v3140
    %v3269 = vunpack.c.h.b16 %v3140
    %v3270 = vunpack.c.l.b16 %v3141
    %v3271 = vunpack.c.h.b16 %v3141
    %v3272 = vunpack.c.l.b16 %v3142
    %v3273 = vunpack.c.h.b16 %v3142
    %v3274 = vunpack.c.l.b16 %v3143
    %v3275 = vunpack.c.h.b16 %v3143
    %v3276 = vunpack.c.l.b16 %v3144
    %v3277 = vunpack.c.h.b16 %v3144
    %v3278 = vunpack.c.l.b16 %v3145
    %v3279 = vunpack.c.h.b16 %v3145
    %v3280 = vunpack.c.l.b16 %v3146
    %v3281 = vunpack.c.h.b16 %v3146
    %v3282 = vunpack.c.l.b16 %v3147
    %v3283 = vunpack.c.h.b16 %v3147
    %v3284 = vunpack.c.l.b16 %v3148
    %v3285 = vunpack.c.h.b16 %v3148
    %v3286 = vunpack.c.l.b16 %v3149
    %v3287 = vunpack.c.h.b16 %v3149
    %v3288 = vunpack.c.l.b16 %v3150
    %v3289 = vunpack.c.h.b16 %v3150
    %v3290 = vpack.c.b16 %v3228, %v3226
    %v3291 = vpack.c.b16 %v3229, %v3227
    %v3292 = vpack.c.b16 %v3232, %v3230
    %v3293 = vpack.c.b16 %v3233, %v3231
    %v3294 = vpack.c.b16 %v3236, %v3234
    %v3295 = vpack.c.b16 %v3237, %v3235
    %v3296 = vpack.c.b16 %v3240, %v3238
    %v3297 = vpack.c.b16 %v3241, %v3239
    %v3298 = vpack.c.b16 %v3244, %v3242
    %v3299 = vpack.c.b16 %v3245, %v3243
    %v3300 = vpack.c.b16 %v3248, %v3246
    %v3301 = vpack.c.b16 %v3249, %v3247
    %v3302 = vpack.c.b16 %v3252, %v3250
    %v3303 = vpack.c.b16 %v3253, %v3251
    %v3304 = vpack.c.b16 %v3256, %v3254
    %v3305 = vpack.c.b16 %v3257, %v3255
    %v3306 = vpack.c.b16 %v3260, %v3258
    %v3307 = vpack.c.b16 %v3261, %v3259
    %v3308 = vpack.c.b16 %v3264, %v3262
    %v3309 = vpack.c.b16 %v3265, %v3263
    %v3310 = vpack.c.b16 %v3268, %v3266
    %v3311 = vpack.c.b16 %v3269, %v3267
    %v3312 = vpack.c.b16 %v3272, %v3270
    %v3313 = vpack.c.b16 %v3273, %v3271
    %v3314 = vpack.c.b16 %v3276, %v3274
    %v3315 = vpack.c.b16 %v3277, %v3275
    %v3316 = vpack.c.b16 %v3280, %v3278
    %v3317 = vpack.c.b16 %v3281, %v3279
    %v3318 = vpack.c.b16 %v3284, %v3282
    %v3319 = vpack.c.b16 %v3285, %v3283
    %v3320 = vpack.c.b16 %v3288, %v3286
    %v3321 = vpack.c.b16 %v3289, %v3287
    %3354 = vmatprep.subr.bf16.mxu0 %v3291
    %3355 = vmatpush1.bf16.msra.mxu0 %v3290
    %3356 = vmatprep.subr.bf16.mxu0 %v3293
    %3357 = vmatpush1.bf16.msra.mxu0 %v3292
    %3358 = vmatprep.subr.bf16.mxu0 %v3295
    %3359 = vmatpush1.bf16.msra.mxu0 %v3294
    %3360 = vmatprep.subr.bf16.mxu0 %v3297
    %3361 = vmatpush1.bf16.msra.mxu0 %v3296
    %3362 = vmatprep.subr.bf16.mxu0 %v3299
    %3363 = vmatpush1.bf16.msra.mxu0 %v3298
    %3364 = vmatprep.subr.bf16.mxu0 %v3301
    %3365 = vmatpush1.bf16.msra.mxu0 %v3300
    %3366 = vmatprep.subr.bf16.mxu0 %v3303
    %3367 = vmatpush1.bf16.msra.mxu0 %v3302
    %3368 = vmatprep.subr.bf16.mxu0 %v3305
    %3369 = vmatpush1.bf16.msra.mxu0 %v3304
    %3370 = vmatprep.subr.bf16.mxu0 %v3307
    %3371 = vmatpush1.bf16.msra.mxu0 %v3306
    %3372 = vmatprep.subr.bf16.mxu0 %v3309
    %3373 = vmatpush1.bf16.msra.mxu0 %v3308
    %3374 = vmatprep.subr.bf16.mxu0 %v3311
    %3375 = vmatpush1.bf16.msra.mxu0 %v3310
    %3376 = vmatprep.subr.bf16.mxu0 %v3313
    %3377 = vmatpush1.bf16.msra.mxu0 %v3312
    %3378 = vmatprep.subr.bf16.mxu0 %v3315
    %3379 = vmatpush1.bf16.msra.mxu0 %v3314
    %3380 = vmatprep.subr.bf16.mxu0 %v3317
    %3381 = vmatpush1.bf16.msra.mxu0 %v3316
    %3382 = vmatprep.subr.bf16.mxu0 %v3319
    %3383 = vmatpush1.bf16.msra.mxu0 %v3318
    %3384 = vmatprep.subr.bf16.mxu0 %v3321
    %3385 = vmatpush1.bf16.msra.mxu0 %v3320
    %3386 = vmatprep.mubr.bf16.mxu0 %v3152
    %3387 = vmatmul.mubr.bf16.gmra.mrb[0].mxu0 %v3151
    %v3388 = vpop.f32.mrb[0].mxu0
    %v3389 = vadd.f32 %v3187, %v3388
    %v3390 = vpop.f32.mrb[0].mxu0
    %v3391 = vadd.f32 %v3191, %v3390
    %v3392 = vpop.f32.mrb[0].mxu0
    %v3393 = vadd.f32 %v3187, %v3392
    %v3394 = vpop.f32.mrb[0].mxu0
    %v3395 = vadd.f32 %v3191, %v3394
    %3396 = vmatprep.mubr.bf16.mxu0 %v3154
    %3397 = vmatmul.mubr.bf16.gmra.mrb[0].mxu0 %v3153
    %v3398 = vpop.f32.mrb[0].mxu0
    %v3399 = vadd.f32 %v3187, %v3398
    %v3400 = vpop.f32.mrb[0].mxu0
    %v3401 = vadd.f32 %v3191, %v3400
    %v3402 = vpop.f32.mrb[0].mxu0
    %v3403 = vadd.f32 %v3187, %v3402
    %v3404 = vpop.f32.mrb[0].mxu0
    %v3405 = vadd.f32 %v3191, %v3404
    %3406 = vmatprep.mubr.bf16.mxu0 %v3156
    %3407 = vmatmul.mubr.bf16.gmra.mrb[0].mxu0 %v3155
    %v3408 = vpop.f32.mrb[0].mxu0
    %v3409 = vadd.f32 %v3187, %v3408
    %v3410 = vpop.f32.mrb[0].mxu0
    %v3411 = vadd.f32 %v3191, %v3410
    %v3412 = vpop.f32.mrb[0].mxu0
    %v3413 = vadd.f32 %v3187, %v3412
    %v3414 = vpop.f32.mrb[0].mxu0
    %v3415 = vadd.f32 %v3191, %v3414
    %3416 = vmatprep.mubr.bf16.mxu0 %v3158
    %3417 = vmatmul.mubr.bf16.gmra.mrb[0].mxu0 %v3157
    %v3418 = vpop.f32.mrb[0].mxu0
    %v3419 = vadd.f32 %v3187, %v3418
    %v3420 = vpop.f32.mrb[0].mxu0
    %v3421 = vadd.f32 %v3191, %v3420
    %v3422 = vpop.f32.mrb[0].mxu0
    %v3423 = vadd.f32 %v3187, %v3422
    %v3424 = vpop.f32.mrb[0].mxu0
    %v3425 = vadd.f32 %v3191, %v3424
    %3426 = vmatprep.mubr.bf16.mxu0 %v3160
    %3427 = vmatmul.mubr.bf16.gmra.mrb[0].mxu0 %v3159
    %v3428 = vpop.f32.mrb[0].mxu0
    %v3429 = vadd.f32 %v3187, %v3428
    %v3430 = vpop.f32.mrb[0].mxu0
    %v3431 = vadd.f32 %v3191, %v3430
    %v3432 = vpop.f32.mrb[0].mxu0
    %v3433 = vadd.f32 %v3187, %v3432
    %v3434 = vpop.f32.mrb[0].mxu0
    %v3435 = vadd.f32 %v3191, %v3434
    %3436 = vmatprep.mubr.bf16.mxu0 %v3162
    %3437 = vmatmul.mubr.bf16.gmra.mrb[0].mxu0 %v3161
    %v3438 = vpop.f32.mrb[0].mxu0
    %v3439 = vadd.f32 %v3187, %v3438
    %v3440 = vpop.f32.mrb[0].mxu0
    %v3441 = vadd.f32 %v3191, %v3440
    %v3442 = vpop.f32.mrb[0].mxu0
    %v3443 = vadd.f32 %v3187, %v3442
    %v3444 = vpop.f32.mrb[0].mxu0
    %v3445 = vadd.f32 %v3191, %v3444
    %3446 = vmatprep.mubr.bf16.mxu0 %v3164
    %3447 = vmatmul.mubr.bf16.gmra.mrb[0].mxu0 %v3163
    %v3448 = vpop.f32.mrb[0].mxu0
    %v3449 = vadd.f32 %v3187, %v3448
    %v3450 = vpop.f32.mrb[0].mxu0
    %v3451 = vadd.f32 %v3191, %v3450
    %v3452 = vpop.f32.mrb[0].mxu0
    %v3453 = vadd.f32 %v3187, %v3452
    %v3454 = vpop.f32.mrb[0].mxu0
    %v3455 = vadd.f32 %v3191, %v3454
    %3456 = vmatprep.mubr.bf16.mxu0 %v3166
    %3457 = vmatmul.mubr.bf16.gmra.mrb[0].mxu0 %v3165
    %v3458 = vpop.f32.mrb[0].mxu0
    %v3459 = vadd.f32 %v3187, %v3458
    %v3460 = vpop.f32.mrb[0].mxu0
    %v3461 = vadd.f32 %v3191, %v3460
    %v3462 = vpop.f32.mrb[0].mxu0
    %v3463 = vadd.f32 %v3187, %v3462
    %v3464 = vpop.f32.mrb[0].mxu0
    %v3465 = vadd.f32 %v3191, %v3464
    %3466 = vmatprep.mubr.bf16.mxu0 %v3168
    %3467 = vmatmul.mubr.bf16.gmra.mrb[0].mxu0 %v3167
    %v3468 = vpop.f32.mrb[0].mxu0
    %v3469 = vadd.f32 %v3187, %v3468
    %v3470 = vpop.f32.mrb[0].mxu0
    %v3471 = vadd.f32 %v3191, %v3470
    %v3472 = vpop.f32.mrb[0].mxu0
    %v3473 = vadd.f32 %v3187, %v3472
    %v3474 = vpop.f32.mrb[0].mxu0
    %v3475 = vadd.f32 %v3191, %v3474
    %3476 = vmatprep.mubr.bf16.mxu0 %v3170
    %3477 = vmatmul.mubr.bf16.gmra.mrb[0].mxu0 %v3169
    %v3478 = vpop.f32.mrb[0].mxu0
    %v3479 = vadd.f32 %v3187, %v3478
    %v3480 = vpop.f32.mrb[0].mxu0
    %v3481 = vadd.f32 %v3191, %v3480
    %v3482 = vpop.f32.mrb[0].mxu0
    %v3483 = vadd.f32 %v3187, %v3482
    %v3484 = vpop.f32.mrb[0].mxu0
    %v3485 = vadd.f32 %v3191, %v3484
    %3486 = vmatprep.mubr.bf16.mxu0 %v3172
    %3487 = vmatmul.mubr.bf16.gmra.mrb[0].mxu0 %v3171
    %v3488 = vpop.f32.mrb[0].mxu0
    %v3489 = vadd.f32 %v3187, %v3488
    %v3490 = vpop.f32.mrb[0].mxu0
    %v3491 = vadd.f32 %v3191, %v3490
    %v3492 = vpop.f32.mrb[0].mxu0
    %v3493 = vadd.f32 %v3187, %v3492
    %v3494 = vpop.f32.mrb[0].mxu0
    %v3495 = vadd.f32 %v3191, %v3494
    %3496 = vmatprep.mubr.bf16.mxu0 %v3174
    %3497 = vmatmul.mubr.bf16.gmra.mrb[0].mxu0 %v3173
    %v3498 = vpop.f32.mrb[0].mxu0
    %v3499 = vadd.f32 %v3187, %v3498
    %v3500 = vpop.f32.mrb[0].mxu0
    %v3501 = vadd.f32 %v3191, %v3500
    %v3502 = vpop.f32.mrb[0].mxu0
    %v3503 = vadd.f32 %v3187, %v3502
    %v3504 = vpop.f32.mrb[0].mxu0
    %v3505 = vadd.f32 %v3191, %v3504
    %3506 = vmatprep.mubr.bf16.mxu0 %v3176
    %3507 = vmatmul.mubr.bf16.gmra.mrb[0].mxu0 %v3175
    %v3508 = vpop.f32.mrb[0].mxu0
    %v3509 = vadd.f32 %v3187, %v3508
    %v3510 = vpop.f32.mrb[0].mxu0
    %v3511 = vadd.f32 %v3191, %v3510
    %v3512 = vpop.f32.mrb[0].mxu0
    %v3513 = vadd.f32 %v3187, %v3512
    %v3514 = vpop.f32.mrb[0].mxu0
    %v3515 = vadd.f32 %v3191, %v3514
    %3516 = vmatprep.mubr.bf16.mxu0 %v3178
    %3517 = vmatmul.mubr.bf16.gmra.mrb[0].mxu0 %v3177
    %v3518 = vpop.f32.mrb[0].mxu0
    %v3519 = vadd.f32 %v3187, %v3518
    %v3520 = vpop.f32.mrb[0].mxu0
    %v3521 = vadd.f32 %v3191, %v3520
    %v3522 = vpop.f32.mrb[0].mxu0
    %v3523 = vadd.f32 %v3187, %v3522
    %v3524 = vpop.f32.mrb[0].mxu0
    %v3525 = vadd.f32 %v3191, %v3524
    %3526 = vmatprep.mubr.bf16.mxu0 %v3180
    %3527 = vmatmul.mubr.bf16.gmra.mrb[0].mxu0 %v3179
    %v3528 = vpop.f32.mrb[0].mxu0
    %v3529 = vadd.f32 %v3187, %v3528
    %v3530 = vpop.f32.mrb[0].mxu0
    %v3531 = vadd.f32 %v3191, %v3530
    %v3532 = vpop.f32.mrb[0].mxu0
    %v3533 = vadd.f32 %v3187, %v3532
    %v3534 = vpop.f32.mrb[0].mxu0
    %v3535 = vadd.f32 %v3191, %v3534
    %3536 = vmatprep.mubr.bf16.mxu0 %v3182
    %3537 = vmatmul.mubr.bf16.gmra.mrb[0].mxu0 %v3181
    %v3538 = vpop.f32.mrb[0].mxu0
    %v3539 = vadd.f32 %v3187, %v3538
    %v3540 = vpop.f32.mrb[0].mxu0
    %v3541 = vadd.f32 %v3191, %v3540
    %v3542 = vpop.f32.mrb[0].mxu0
    %v3543 = vadd.f32 %v3187, %v3542
    %v3544 = vpop.f32.mrb[0].mxu0
    %v3545 = vadd.f32 %v3191, %v3544
    %3546 = vdwg.mxu0
    %v3547 = vmax.f32 %v3389, 0.0
    %v3548 = vmax.f32 %v3391, 0.0
    %v3549 = vmax.f32 %v3393, 0.0
    %v3550 = vmax.f32 %v3395, 0.0
    %v3551 = vmax.f32 %v3399, 0.0
    %v3552 = vmax.f32 %v3401, 0.0
    %v3553 = vmax.f32 %v3403, 0.0
    %v3554 = vmax.f32 %v3405, 0.0
    %v3555 = vmax.f32 %v3409, 0.0
    %v3556 = vmax.f32 %v3411, 0.0
    %v3557 = vmax.f32 %v3413, 0.0
    %v3558 = vmax.f32 %v3415, 0.0
    %v3559 = vmax.f32 %v3419, 0.0
    %v3560 = vmax.f32 %v3421, 0.0
    %v3561 = vmax.f32 %v3423, 0.0
    %v3562 = vmax.f32 %v3425, 0.0
    %v3563 = vmax.f32 %v3429, 0.0
    %v3564 = vmax.f32 %v3431, 0.0
    %v3565 = vmax.f32 %v3433, 0.0
    %v3566 = vmax.f32 %v3435, 0.0
    %v3567 = vmax.f32 %v3439, 0.0
    %v3568 = vmax.f32 %v3441, 0.0
    %v3569 = vmax.f32 %v3443, 0.0
    %v3570 = vmax.f32 %v3445, 0.0
    %v3571 = vmax.f32 %v3449, 0.0
    %v3572 = vmax.f32 %v3451, 0.0
    %v3573 = vmax.f32 %v3453, 0.0
    %v3574 = vmax.f32 %v3455, 0.0
    %v3575 = vmax.f32 %v3459, 0.0
    %v3576 = vmax.f32 %v3461, 0.0
    %v3577 = vmax.f32 %v3463, 0.0
    %v3578 = vmax.f32 %v3465, 0.0
    %v3579 = vmax.f32 %v3469, 0.0
    %v3580 = vmax.f32 %v3471, 0.0
    %v3581 = vmax.f32 %v3473, 0.0
    %v3582 = vmax.f32 %v3475, 0.0
    %v3583 = vmax.f32 %v3479, 0.0
    %v3584 = vmax.f32 %v3481, 0.0
    %v3585 = vmax.f32 %v3483, 0.0
    %v3586 = vmax.f32 %v3485, 0.0
    %v3587 = vmax.f32 %v3489, 0.0
    %v3588 = vmax.f32 %v3491, 0.0
    %v3589 = vmax.f32 %v3493, 0.0
    %v3590 = vmax.f32 %v3495, 0.0
    %v3591 = vmax.f32 %v3499, 0.0
    %v3592 = vmax.f32 %v3501, 0.0
    %v3593 = vmax.f32 %v3503, 0.0
    %v3594 = vmax.f32 %v3505, 0.0
    %v3595 = vmax.f32 %v3509, 0.0
    %v3596 = vmax.f32 %v3511, 0.0
    %v3597 = vmax.f32 %v3513, 0.0
    %v3598 = vmax.f32 %v3515, 0.0
    %v3599 = vmax.f32 %v3519, 0.0
    %v3600 = vmax.f32 %v3521, 0.0
    %v3601 = vmax.f32 %v3523, 0.0
    %v3602 = vmax.f32 %v3525, 0.0
    %v3603 = vmax.f32 %v3529, 0.0
    %v3604 = vmax.f32 %v3531, 0.0
    %v3605 = vmax.f32 %v3533, 0.0
    %v3606 = vmax.f32 %v3535, 0.0
    %v3607 = vmax.f32 %v3539, 0.0
    %v3608 = vmax.f32 %v3541, 0.0
    %v3609 = vmax.f32 %v3543, 0.0
    %v3610 = vmax.f32 %v3545, 0.0
    %v3611 = vld [vmem:[#allocation7] sm:$0xf]
    %v3612 = vld [vmem:[#allocation7 + $0x4] sm:$0xf]
    %v3613 = vld [vmem:[#allocation7 + $0x8] sm:$0xf]
    %v3614 = vld [vmem:[#allocation7 + $0xc] sm:$0xf]
    %v3615 = vld [vmem:[#allocation7 + $0x10] sm:$0xf]
    %v3616 = vld [vmem:[#allocation7 + $0x14] sm:$0xf]
    %v3617 = vld [vmem:[#allocation7 + $0x18] sm:$0xf]
    %v3618 = vld [vmem:[#allocation7 + $0x1c] sm:$0xf]
    %v3619 = vld [vmem:[#allocation7 + $0x20] sm:$0xf]
    %v3620 = vld [vmem:[#allocation7 + $0x24] sm:$0xf]
    %v3621 = vld [vmem:[#allocation7 + $0x28] sm:$0xf]
    %v3622 = vld [vmem:[#allocation7 + $0x2c] sm:$0xf]
    %v3623 = vld [vmem:[#allocation7 + $0x30] sm:$0xf]
    %v3624 = vld [vmem:[#allocation7 + $0x34] sm:$0xf]
    %v3625 = vld [vmem:[#allocation7 + $0x38] sm:$0xf]
    %v3626 = vld [vmem:[#allocation7 + $0x3c] sm:$0xf]
    %v3627 = vld [vmem:[#allocation7 + $0x40] sm:$0xf]
    %v3628 = vld [vmem:[#allocation7 + $0x44] sm:$0xf]
    %v3629 = vld [vmem:[#allocation7 + $0x48] sm:$0xf]
    %v3630 = vld [vmem:[#allocation7 + $0x4c] sm:$0xf]
    %v3631 = vld [vmem:[#allocation7 + $0x50] sm:$0xf]
    %v3632 = vld [vmem:[#allocation7 + $0x54] sm:$0xf]
    %v3633 = vld [vmem:[#allocation7 + $0x58] sm:$0xf]
    %v3634 = vld [vmem:[#allocation7 + $0x5c] sm:$0xf]
    %v3635 = vld [vmem:[#allocation7 + $0x60] sm:$0xf]
    %v3636 = vld [vmem:[#allocation7 + $0x64] sm:$0xf]
    %v3637 = vld [vmem:[#allocation7 + $0x68] sm:$0xf]
    %v3638 = vld [vmem:[#allocation7 + $0x6c] sm:$0xf]
    %v3639 = vld [vmem:[#allocation7 + $0x70] sm:$0xf]
    %v3640 = vld [vmem:[#allocation7 + $0x74] sm:$0xf]
    %v3641 = vld [vmem:[#allocation7 + $0x78] sm:$0xf]
    %v3642 = vld [vmem:[#allocation7 + $0x7c] sm:$0xf]
    %v3643 = vpack.c.bf16 %v3549, %v3547
    %v3644 = vpack.c.bf16 %v3550, %v3548
    %v3645 = vpack.c.bf16 %v3553, %v3551
    %v3646 = vpack.c.bf16 %v3554, %v3552
    %v3647 = vpack.c.bf16 %v3557, %v3555
    %v3648 = vpack.c.bf16 %v3558, %v3556
    %v3649 = vpack.c.bf16 %v3561, %v3559
    %v3650 = vpack.c.bf16 %v3562, %v3560
    %v3651 = vpack.c.bf16 %v3565, %v3563
    %v3652 = vpack.c.bf16 %v3566, %v3564
    %v3653 = vpack.c.bf16 %v3569, %v3567
    %v3654 = vpack.c.bf16 %v3570, %v3568
    %v3655 = vpack.c.bf16 %v3573, %v3571
    %v3656 = vpack.c.bf16 %v3574, %v3572
    %v3657 = vpack.c.bf16 %v3577, %v3575
    %v3658 = vpack.c.bf16 %v3578, %v3576
    %v3659 = vpack.c.bf16 %v3581, %v3579
    %v3660 = vpack.c.bf16 %v3582, %v3580
    %v3661 = vpack.c.bf16 %v3585, %v3583
    %v3662 = vpack.c.bf16 %v3586, %v3584
    %v3663 = vpack.c.bf16 %v3589, %v3587
    %v3664 = vpack.c.bf16 %v3590, %v3588
    %v3665 = vpack.c.bf16 %v3593, %v3591
    %v3666 = vpack.c.bf16 %v3594, %v3592
    %v3667 = vpack.c.bf16 %v3597, %v3595
    %v3668 = vpack.c.bf16 %v3598, %v3596
    %v3669 = vpack.c.bf16 %v3601, %v3599
    %v3670 = vpack.c.bf16 %v3602, %v3600
    %v3671 = vpack.c.bf16 %v3605, %v3603
    %v3672 = vpack.c.bf16 %v3606, %v3604
    %v3673 = vpack.c.bf16 %v3609, %v3607
    %v3674 = vpack.c.bf16 %v3610, %v3608
    %v3675 = vld [vmem:[#allocation7 + $0x80] sm:$0xf]
    %v3676 = vld [vmem:[#allocation7 + $0x84] sm:$0xf]
    %v3677 = vld [vmem:[#allocation7 + $0x88] sm:$0xf]
    %v3678 = vld [vmem:[#allocation7 + $0x8c] sm:$0xf]
    %v3679 = vld [vmem:[#allocation7 + $0x90] sm:$0xf]
    %v3680 = vld [vmem:[#allocation7 + $0x94] sm:$0xf]
    %v3681 = vld [vmem:[#allocation7 + $0x98] sm:$0xf]
    %v3682 = vld [vmem:[#allocation7 + $0x9c] sm:$0xf]
    %v3683 = vld [vmem:[#allocation7 + $0xa0] sm:$0xf]
    %v3684 = vld [vmem:[#allocation7 + $0xa4] sm:$0xf]
    %v3685 = vld [vmem:[#allocation7 + $0xa8] sm:$0xf]
    %v3686 = vld [vmem:[#allocation7 + $0xac] sm:$0xf]
    %v3687 = vld [vmem:[#allocation7 + $0xb0] sm:$0xf]
    %v3688 = vld [vmem:[#allocation7 + $0xb4] sm:$0xf]
    %v3689 = vld [vmem:[#allocation7 + $0xb8] sm:$0xf]
    %v3690 = vld [vmem:[#allocation7 + $0xbc] sm:$0xf]
    %v3691 = vld [vmem:[#allocation7 + $0xc0] sm:$0xf]
    %v3692 = vld [vmem:[#allocation7 + $0xc4] sm:$0xf]
    %v3693 = vld [vmem:[#allocation7 + $0xc8] sm:$0xf]
    %v3694 = vld [vmem:[#allocation7 + $0xcc] sm:$0xf]
    %v3695 = vld [vmem:[#allocation7 + $0xd0] sm:$0xf]
    %v3696 = vld [vmem:[#allocation7 + $0xd4] sm:$0xf]
    %v3697 = vld [vmem:[#allocation7 + $0xd8] sm:$0xf]
    %v3698 = vld [vmem:[#allocation7 + $0xdc] sm:$0xf]
    %v3699 = vld [vmem:[#allocation7 + $0xe0] sm:$0xf]
    %v3700 = vld [vmem:[#allocation7 + $0xe4] sm:$0xf]
    %v3701 = vld [vmem:[#allocation7 + $0xe8] sm:$0xf]
    %v3702 = vld [vmem:[#allocation7 + $0xec] sm:$0xf]
    %v3703 = vld [vmem:[#allocation7 + $0xf0] sm:$0xf]
    %v3704 = vld [vmem:[#allocation7 + $0xf4] sm:$0xf]
    %v3705 = vld [vmem:[#allocation7 + $0xf8] sm:$0xf]
    %v3706 = vld [vmem:[#allocation7 + $0xfc] sm:$0xf]
    %v3707 = vpack.c.bf16 %v3057, %v3055
    %v3708 = vpack.c.bf16 %v3058, %v3056
    %v3709 = vpack.c.bf16 %v3061, %v3059
    %v3710 = vpack.c.bf16 %v3062, %v3060
    %v3711 = vpack.c.bf16 %v3065, %v3063
    %v3712 = vpack.c.bf16 %v3066, %v3064
    %v3713 = vpack.c.bf16 %v3069, %v3067
    %v3714 = vpack.c.bf16 %v3070, %v3068
    %v3715 = vpack.c.bf16 %v3073, %v3071
    %v3716 = vpack.c.bf16 %v3074, %v3072
    %v3717 = vpack.c.bf16 %v3077, %v3075
    %v3718 = vpack.c.bf16 %v3078, %v3076
    %v3719 = vpack.c.bf16 %v3081, %v3079
    %v3720 = vpack.c.bf16 %v3082, %v3080
    %v3721 = vpack.c.bf16 %v3085, %v3083
    %v3722 = vpack.c.bf16 %v3086, %v3084
    %v3723 = vpack.c.bf16 %v3089, %v3087
    %v3724 = vpack.c.bf16 %v3090, %v3088
    %v3725 = vpack.c.bf16 %v3093, %v3091
    %v3726 = vpack.c.bf16 %v3094, %v3092
    %v3727 = vpack.c.bf16 %v3097, %v3095
    %v3728 = vpack.c.bf16 %v3098, %v3096
    %v3729 = vpack.c.bf16 %v3101, %v3099
    %v3730 = vpack.c.bf16 %v3102, %v3100
    %v3731 = vpack.c.bf16 %v3105, %v3103
    %v3732 = vpack.c.bf16 %v3106, %v3104
    %v3733 = vpack.c.bf16 %v3109, %v3107
    %v3734 = vpack.c.bf16 %v3110, %v3108
    %v3735 = vpack.c.bf16 %v3113, %v3111
    %v3736 = vpack.c.bf16 %v3114, %v3112
    %v3737 = vpack.c.bf16 %v3117, %v3115
    %v3738 = vpack.c.bf16 %v3118, %v3116
    %v3771 = vunpack.c.l.b16 %v3675
    %v3772 = vunpack.c.l.b16 %v3676
    %v3773 = vunpack.c.l.b16 %v3677
    %v3774 = vunpack.c.l.b16 %v3678
    %v3775 = vunpack.c.l.b16 %v3679
    %v3776 = vunpack.c.l.b16 %v3680
    %v3777 = vunpack.c.l.b16 %v3681
    %v3778 = vunpack.c.l.b16 %v3682
    %v3779 = vunpack.c.l.b16 %v3683
    %v3780 = vunpack.c.l.b16 %v3684
    %v3781 = vunpack.c.l.b16 %v3685
    %v3782 = vunpack.c.l.b16 %v3686
    %v3783 = vunpack.c.l.b16 %v3687
    %v3784 = vunpack.c.l.b16 %v3688
    %v3785 = vunpack.c.l.b16 %v3689
    %v3786 = vunpack.c.l.b16 %v3690
    %v3787 = vunpack.c.l.b16 %v3691
    %v3788 = vunpack.c.l.b16 %v3692
    %v3789 = vunpack.c.l.b16 %v3693
    %v3790 = vunpack.c.l.b16 %v3694
    %v3791 = vunpack.c.l.b16 %v3695
    %v3792 = vunpack.c.l.b16 %v3696
    %v3793 = vunpack.c.l.b16 %v3697
    %v3794 = vunpack.c.l.b16 %v3698
    %v3795 = vunpack.c.l.b16 %v3699
    %v3796 = vunpack.c.l.b16 %v3700
    %v3797 = vunpack.c.l.b16 %v3701
    %v3798 = vunpack.c.l.b16 %v3702
    %v3799 = vunpack.c.l.b16 %v3703
    %v3800 = vunpack.c.l.b16 %v3704
    %v3801 = vunpack.c.l.b16 %v3705
    %v3802 = vunpack.c.l.b16 %v3706
    %v3803 = vpack.c.b16 %v3772, %v3771
    %v3804 = vpack.c.b16 %v3774, %v3773
    %v3805 = vpack.c.b16 %v3776, %v3775
    %v3806 = vpack.c.b16 %v3778, %v3777
    %v3807 = vpack.c.b16 %v3780, %v3779
    %v3808 = vpack.c.b16 %v3782, %v3781
    %v3809 = vpack.c.b16 %v3784, %v3783
    %v3810 = vpack.c.b16 %v3786, %v3785
    %v3811 = vpack.c.b16 %v3788, %v3787
    %v3812 = vpack.c.b16 %v3790, %v3789
    %v3813 = vpack.c.b16 %v3792, %v3791
    %v3814 = vpack.c.b16 %v3794, %v3793
    %v3815 = vpack.c.b16 %v3796, %v3795
    %v3816 = vpack.c.b16 %v3798, %v3797
    %v3817 = vpack.c.b16 %v3800, %v3799
    %v3818 = vpack.c.b16 %v3802, %v3801
    %3835 = vmatprep.subr.bf16.mxu0 0
    %3836 = vmatpush1.bf16.msra.mxu0 %v3803
    %3837 = vmatprep.subr.bf16.mxu0 0
    %3838 = vmatpush1.bf16.msra.mxu0 %v3804
    %3839 = vmatprep.subr.bf16.mxu0 0
    %3840 = vmatpush1.bf16.msra.mxu0 %v3805
    %3841 = vmatprep.subr.bf16.mxu0 0
    %3842 = vmatpush1.bf16.msra.mxu0 %v3806
    %3843 = vmatprep.subr.bf16.mxu0 0
    %3844 = vmatpush1.bf16.msra.mxu0 %v3807
    %3845 = vmatprep.subr.bf16.mxu0 0
    %3846 = vmatpush1.bf16.msra.mxu0 %v3808
    %3847 = vmatprep.subr.bf16.mxu0 0
    %3848 = vmatpush1.bf16.msra.mxu0 %v3809
    %3849 = vmatprep.subr.bf16.mxu0 0
    %3850 = vmatpush1.bf16.msra.mxu0 %v3810
    %3851 = vmatprep.subr.bf16.mxu0 0
    %3852 = vmatpush1.bf16.msra.mxu0 %v3811
    %3853 = vmatprep.subr.bf16.mxu0 0
    %3854 = vmatpush1.bf16.msra.mxu0 %v3812
    %3855 = vmatprep.subr.bf16.mxu0 0
    %3856 = vmatpush1.bf16.msra.mxu0 %v3813
    %3857 = vmatprep.subr.bf16.mxu0 0
    %3858 = vmatpush1.bf16.msra.mxu0 %v3814
    %3859 = vmatprep.subr.bf16.mxu0 0
    %3860 = vmatpush1.bf16.msra.mxu0 %v3815
    %3861 = vmatprep.subr.bf16.mxu0 0
    %3862 = vmatpush1.bf16.msra.mxu0 %v3816
    %3863 = vmatprep.subr.bf16.mxu0 0
    %3864 = vmatpush1.bf16.msra.mxu0 %v3817
    %3865 = vmatprep.subr.bf16.mxu0 0
    %3866 = vmatpush1.bf16.msra.mxu0 %v3818
    %3867 = vmatprep.mubr.bf16.mxu0 %v3708
    %3868 = vmatmul.mubr.bf16.gmra.mrb[0].mxu0 %v3707
    %v3869 = vpop.f32.mrb[0].mxu0
    %v3870 = vadd.f32 0.0, %v3869
    %v3871 = vpop.f32.mrb[0].mxu0
    %v3872 = vpop.f32.mrb[0].mxu0
    %v3873 = vadd.f32 0.0, %v3872
    %v3874 = vpop.f32.mrb[0].mxu0
    %3875 = vmatprep.mubr.bf16.mxu0 %v3710
    %3876 = vmatmul.mubr.bf16.gmra.mrb[0].mxu0 %v3709
    %v3877 = vpop.f32.mrb[0].mxu0
    %v3878 = vadd.f32 0.0, %v3877
    %v3879 = vpop.f32.mrb[0].mxu0
    %v3880 = vpop.f32.mrb[0].mxu0
    %v3881 = vadd.f32 0.0, %v3880
    %v3882 = vpop.f32.mrb[0].mxu0
    %3883 = vmatprep.mubr.bf16.mxu0 %v3712
    %3884 = vmatmul.mubr.bf16.gmra.mrb[0].mxu0 %v3711
    %v3885 = vpop.f32.mrb[0].mxu0
    %v3886 = vadd.f32 0.0, %v3885
    %v3887 = vpop.f32.mrb[0].mxu0
    %v3888 = vpop.f32.mrb[0].mxu0
    %v3889 = vadd.f32 0.0, %v3888
    %v3890 = vpop.f32.mrb[0].mxu0
    %3891 = vmatprep.mubr.bf16.mxu0 %v3714
    %3892 = vmatmul.mubr.bf16.gmra.mrb[0].mxu0 %v3713
    %v3893 = vpop.f32.mrb[0].mxu0
    %v3894 = vadd.f32 0.0, %v3893
    %v3895 = vpop.f32.mrb[0].mxu0
    %v3896 = vpop.f32.mrb[0].mxu0
    %v3897 = vadd.f32 0.0, %v3896
    %v3898 = vpop.f32.mrb[0].mxu0
    %3899 = vmatprep.mubr.bf16.mxu0 %v3716
    %3900 = vmatmul.mubr.bf16.gmra.mrb[0].mxu0 %v3715
    %v3901 = vpop.f32.mrb[0].mxu0
    %v3902 = vadd.f32 0.0, %v3901
    %v3903 = vpop.f32.mrb[0].mxu0
    %v3904 = vpop.f32.mrb[0].mxu0
    %v3905 = vadd.f32 0.0, %v3904
    %v3906 = vpop.f32.mrb[0].mxu0
    %3907 = vmatprep.mubr.bf16.mxu0 %v3718
    %3908 = vmatmul.mubr.bf16.gmra.mrb[0].mxu0 %v3717
    %v3909 = vpop.f32.mrb[0].mxu0
    %v3910 = vadd.f32 0.0, %v3909
    %v3911 = vpop.f32.mrb[0].mxu0
    %v3912 = vpop.f32.mrb[0].mxu0
    %v3913 = vadd.f32 0.0, %v3912
    %v3914 = vpop.f32.mrb[0].mxu0
    %3915 = vmatprep.mubr.bf16.mxu0 %v3720
    %3916 = vmatmul.mubr.bf16.gmra.mrb[0].mxu0 %v3719
    %v3917 = vpop.f32.mrb[0].mxu0
    %v3918 = vadd.f32 0.0, %v3917
    %v3919 = vpop.f32.mrb[0].mxu0
    %v3920 = vpop.f32.mrb[0].mxu0
    %v3921 = vadd.f32 0.0, %v3920
    %v3922 = vpop.f32.mrb[0].mxu0
    %3923 = vmatprep.mubr.bf16.mxu0 %v3722
    %3924 = vmatmul.mubr.bf16.gmra.mrb[0].mxu0 %v3721
    %v3925 = vpop.f32.mrb[0].mxu0
    %v3926 = vadd.f32 0.0, %v3925
    %v3927 = vpop.f32.mrb[0].mxu0
    %v3928 = vpop.f32.mrb[0].mxu0
    %v3929 = vadd.f32 0.0, %v3928
    %v3930 = vpop.f32.mrb[0].mxu0
    %3931 = vmatprep.mubr.bf16.mxu0 %v3724
    %3932 = vmatmul.mubr.bf16.gmra.mrb[0].mxu0 %v3723
    %v3933 = vpop.f32.mrb[0].mxu0
    %v3934 = vadd.f32 0.0, %v3933
    %v3935 = vpop.f32.mrb[0].mxu0
    %v3936 = vpop.f32.mrb[0].mxu0
    %v3937 = vadd.f32 0.0, %v3936
    %v3938 = vpop.f32.mrb[0].mxu0
    %3939 = vmatprep.mubr.bf16.mxu0 %v3726
    %3940 = vmatmul.mubr.bf16.gmra.mrb[0].mxu0 %v3725
    %v3941 = vpop.f32.mrb[0].mxu0
    %v3942 = vadd.f32 0.0, %v3941
    %v3943 = vpop.f32.mrb[0].mxu0
    %v3944 = vpop.f32.mrb[0].mxu0
    %v3945 = vadd.f32 0.0, %v3944
    %v3946 = vpop.f32.mrb[0].mxu0
    %3947 = vmatprep.mubr.bf16.mxu0 %v3728
    %3948 = vmatmul.mubr.bf16.gmra.mrb[0].mxu0 %v3727
    %v3949 = vpop.f32.mrb[0].mxu0
    %v3950 = vadd.f32 0.0, %v3949
    %v3951 = vpop.f32.mrb[0].mxu0
    %v3952 = vpop.f32.mrb[0].mxu0
    %v3953 = vadd.f32 0.0, %v3952
    %v3954 = vpop.f32.mrb[0].mxu0
    %3955 = vmatprep.mubr.bf16.mxu0 %v3730
    %3956 = vmatmul.mubr.bf16.gmra.mrb[0].mxu0 %v3729
    %v3957 = vpop.f32.mrb[0].mxu0
    %v3958 = vadd.f32 0.0, %v3957
    %v3959 = vpop.f32.mrb[0].mxu0
    %v3960 = vpop.f32.mrb[0].mxu0
    %v3961 = vadd.f32 0.0, %v3960
    %v3962 = vpop.f32.mrb[0].mxu0
    %3963 = vmatprep.mubr.bf16.mxu0 %v3732
    %3964 = vmatmul.mubr.bf16.gmra.mrb[0].mxu0 %v3731
    %v3965 = vpop.f32.mrb[0].mxu0
    %v3966 = vadd.f32 0.0, %v3965
    %v3967 = vpop.f32.mrb[0].mxu0
    %v3968 = vpop.f32.mrb[0].mxu0
    %v3969 = vadd.f32 0.0, %v3968
    %v3970 = vpop.f32.mrb[0].mxu0
    %3971 = vmatprep.mubr.bf16.mxu0 %v3734
    %3972 = vmatmul.mubr.bf16.gmra.mrb[0].mxu0 %v3733
    %v3973 = vpop.f32.mrb[0].mxu0
    %v3974 = vadd.f32 0.0, %v3973
    %v3975 = vpop.f32.mrb[0].mxu0
    %v3976 = vpop.f32.mrb[0].mxu0
    %v3977 = vadd.f32 0.0, %v3976
    %v3978 = vpop.f32.mrb[0].mxu0
    %3979 = vmatprep.mubr.bf16.mxu0 %v3736
    %3980 = vmatmul.mubr.bf16.gmra.mrb[0].mxu0 %v3735
    %v3981 = vpop.f32.mrb[0].mxu0
    %v3982 = vadd.f32 0.0, %v3981
    %v3983 = vpop.f32.mrb[0].mxu0
    %v3984 = vpop.f32.mrb[0].mxu0
    %v3985 = vadd.f32 0.0, %v3984
    %v3986 = vpop.f32.mrb[0].mxu0
    %3987 = vmatprep.mubr.bf16.mxu0 %v3738
    %3988 = vmatmul.mubr.bf16.gmra.mrb[0].mxu0 %v3737
    %v3989 = vpop.f32.mrb[0].mxu0
    %v3990 = vadd.f32 0.0, %v3989
    %v3991 = vpop.f32.mrb[0].mxu0
    %v3992 = vpop.f32.mrb[0].mxu0
    %v3993 = vadd.f32 0.0, %v3992
    %v3994 = vpop.f32.mrb[0].mxu0
    %3995 = vdwg.mxu0
    %v4028 = vunpack.c.l.b16 %v3611
    %v4029 = vunpack.c.l.b16 %v3612
    %v4030 = vunpack.c.l.b16 %v3613
    %v4031 = vunpack.c.l.b16 %v3614
    %v4032 = vunpack.c.l.b16 %v3615
    %v4033 = vunpack.c.l.b16 %v3616
    %v4034 = vunpack.c.l.b16 %v3617
    %v4035 = vunpack.c.l.b16 %v3618
    %v4036 = vunpack.c.l.b16 %v3619
    %v4037 = vunpack.c.l.b16 %v3620
    %v4038 = vunpack.c.l.b16 %v3621
    %v4039 = vunpack.c.l.b16 %v3622
    %v4040 = vunpack.c.l.b16 %v3623
    %v4041 = vunpack.c.l.b16 %v3624
    %v4042 = vunpack.c.l.b16 %v3625
    %v4043 = vunpack.c.l.b16 %v3626
    %v4044 = vunpack.c.l.b16 %v3627
    %v4045 = vunpack.c.l.b16 %v3628
    %v4046 = vunpack.c.l.b16 %v3629
    %v4047 = vunpack.c.l.b16 %v3630
    %v4048 = vunpack.c.l.b16 %v3631
    %v4049 = vunpack.c.l.b16 %v3632
    %v4050 = vunpack.c.l.b16 %v3633
    %v4051 = vunpack.c.l.b16 %v3634
    %v4052 = vunpack.c.l.b16 %v3635
    %v4053 = vunpack.c.l.b16 %v3636
    %v4054 = vunpack.c.l.b16 %v3637
    %v4055 = vunpack.c.l.b16 %v3638
    %v4056 = vunpack.c.l.b16 %v3639
    %v4057 = vunpack.c.l.b16 %v3640
    %v4058 = vunpack.c.l.b16 %v3641
    %v4059 = vunpack.c.l.b16 %v3642
    %v4060 = vpack.c.b16 %v4029, %v4028
    %v4061 = vpack.c.b16 %v4031, %v4030
    %v4062 = vpack.c.b16 %v4033, %v4032
    %v4063 = vpack.c.b16 %v4035, %v4034
    %v4064 = vpack.c.b16 %v4037, %v4036
    %v4065 = vpack.c.b16 %v4039, %v4038
    %v4066 = vpack.c.b16 %v4041, %v4040
    %v4067 = vpack.c.b16 %v4043, %v4042
    %v4068 = vpack.c.b16 %v4045, %v4044
    %v4069 = vpack.c.b16 %v4047, %v4046
    %v4070 = vpack.c.b16 %v4049, %v4048
    %v4071 = vpack.c.b16 %v4051, %v4050
    %v4072 = vpack.c.b16 %v4053, %v4052
    %v4073 = vpack.c.b16 %v4055, %v4054
    %v4074 = vpack.c.b16 %v4057, %v4056
    %v4075 = vpack.c.b16 %v4059, %v4058
    %4092 = vmatprep.subr.bf16.mxu0 0
    %4093 = vmatpush1.bf16.msra.mxu0 %v4060
    %4094 = vmatprep.subr.bf16.mxu0 0
    %4095 = vmatpush1.bf16.msra.mxu0 %v4061
    %4096 = vmatprep.subr.bf16.mxu0 0
    %4097 = vmatpush1.bf16.msra.mxu0 %v4062
    %4098 = vmatprep.subr.bf16.mxu0 0
    %4099 = vmatpush1.bf16.msra.mxu0 %v4063
    %4100 = vmatprep.subr.bf16.mxu0 0
    %4101 = vmatpush1.bf16.msra.mxu0 %v4064
    %4102 = vmatprep.subr.bf16.mxu0 0
    %4103 = vmatpush1.bf16.msra.mxu0 %v4065
    %4104 = vmatprep.subr.bf16.mxu0 0
    %4105 = vmatpush1.bf16.msra.mxu0 %v4066
    %4106 = vmatprep.subr.bf16.mxu0 0
    %4107 = vmatpush1.bf16.msra.mxu0 %v4067
    %4108 = vmatprep.subr.bf16.mxu0 0
    %4109 = vmatpush1.bf16.msra.mxu0 %v4068
    %4110 = vmatprep.subr.bf16.mxu0 0
    %4111 = vmatpush1.bf16.msra.mxu0 %v4069
    %4112 = vmatprep.subr.bf16.mxu0 0
    %4113 = vmatpush1.bf16.msra.mxu0 %v4070
    %4114 = vmatprep.subr.bf16.mxu0 0
    %4115 = vmatpush1.bf16.msra.mxu0 %v4071
    %4116 = vmatprep.subr.bf16.mxu0 0
    %4117 = vmatpush1.bf16.msra.mxu0 %v4072
    %4118 = vmatprep.subr.bf16.mxu0 0
    %4119 = vmatpush1.bf16.msra.mxu0 %v4073
    %4120 = vmatprep.subr.bf16.mxu0 0
    %4121 = vmatpush1.bf16.msra.mxu0 %v4074
    %4122 = vmatprep.subr.bf16.mxu0 0
    %4123 = vmatpush1.bf16.msra.mxu0 %v4075
    %4124 = vmatprep.mubr.bf16.mxu0 %v3644
    %4125 = vmatmul.mubr.bf16.gmra.mrb[0].mxu0 %v3643
    %v4126 = vpop.f32.mrb[0].mxu0
    %v4127 = vadd.f32 %v3870, %v4126
    %v4128 = vpop.f32.mrb[0].mxu0
    %v4129 = vpop.f32.mrb[0].mxu0
    %v4130 = vadd.f32 %v3873, %v4129
    %v4131 = vpop.f32.mrb[0].mxu0
    %4132 = vmatprep.mubr.bf16.mxu0 %v3646
    %4133 = vmatmul.mubr.bf16.gmra.mrb[0].mxu0 %v3645
    %v4134 = vpop.f32.mrb[0].mxu0
    %v4135 = vadd.f32 %v3878, %v4134
    %v4136 = vpop.f32.mrb[0].mxu0
    %v4137 = vpop.f32.mrb[0].mxu0
    %v4138 = vadd.f32 %v3881, %v4137
    %v4139 = vpop.f32.mrb[0].mxu0
    %4140 = vmatprep.mubr.bf16.mxu0 %v3648
    %4141 = vmatmul.mubr.bf16.gmra.mrb[0].mxu0 %v3647
    %v4142 = vpop.f32.mrb[0].mxu0
    %v4143 = vadd.f32 %v3886, %v4142
    %v4144 = vpop.f32.mrb[0].mxu0
    %v4145 = vpop.f32.mrb[0].mxu0
    %v4146 = vadd.f32 %v3889, %v4145
    %v4147 = vpop.f32.mrb[0].mxu0
    %4148 = vmatprep.mubr.bf16.mxu0 %v3650
    %4149 = vmatmul.mubr.bf16.gmra.mrb[0].mxu0 %v3649
    %v4150 = vpop.f32.mrb[0].mxu0
    %v4151 = vadd.f32 %v3894, %v4150
    %v4152 = vpop.f32.mrb[0].mxu0
    %v4153 = vpop.f32.mrb[0].mxu0
    %v4154 = vadd.f32 %v3897, %v4153
    %v4155 = vpop.f32.mrb[0].mxu0
    %4156 = vmatprep.mubr.bf16.mxu0 %v3652
    %4157 = vmatmul.mubr.bf16.gmra.mrb[0].mxu0 %v3651
    %v4158 = vpop.f32.mrb[0].mxu0
    %v4159 = vadd.f32 %v3902, %v4158
    %v4160 = vpop.f32.mrb[0].mxu0
    %v4161 = vpop.f32.mrb[0].mxu0
    %v4162 = vadd.f32 %v3905, %v4161
    %v4163 = vpop.f32.mrb[0].mxu0
    %4164 = vmatprep.mubr.bf16.mxu0 %v3654
    %4165 = vmatmul.mubr.bf16.gmra.mrb[0].mxu0 %v3653
    %v4166 = vpop.f32.mrb[0].mxu0
    %v4167 = vadd.f32 %v3910, %v4166
    %v4168 = vpop.f32.mrb[0].mxu0
    %v4169 = vpop.f32.mrb[0].mxu0
    %v4170 = vadd.f32 %v3913, %v4169
    %v4171 = vpop.f32.mrb[0].mxu0
    %4172 = vmatprep.mubr.bf16.mxu0 %v3656
    %4173 = vmatmul.mubr.bf16.gmra.mrb[0].mxu0 %v3655
    %v4174 = vpop.f32.mrb[0].mxu0
    %v4175 = vadd.f32 %v3918, %v4174
    %v4176 = vpop.f32.mrb[0].mxu0
    %v4177 = vpop.f32.mrb[0].mxu0
    %v4178 = vadd.f32 %v3921, %v4177
    %v4179 = vpop.f32.mrb[0].mxu0
    %4180 = vmatprep.mubr.bf16.mxu0 %v3658
    %4181 = vmatmul.mubr.bf16.gmra.mrb[0].mxu0 %v3657
    %v4182 = vpop.f32.mrb[0].mxu0
    %v4183 = vadd.f32 %v3926, %v4182
    %v4184 = vpop.f32.mrb[0].mxu0
    %v4185 = vpop.f32.mrb[0].mxu0
    %v4186 = vadd.f32 %v3929, %v4185
    %v4187 = vpop.f32.mrb[0].mxu0
    %4188 = vmatprep.mubr.bf16.mxu0 %v3660
    %4189 = vmatmul.mubr.bf16.gmra.mrb[0].mxu0 %v3659
    %v4190 = vpop.f32.mrb[0].mxu0
    %v4191 = vadd.f32 %v3934, %v4190
    %v4192 = vpop.f32.mrb[0].mxu0
    %v4193 = vpop.f32.mrb[0].mxu0
    %v4194 = vadd.f32 %v3937, %v4193
    %v4195 = vpop.f32.mrb[0].mxu0
    %4196 = vmatprep.mubr.bf16.mxu0 %v3662
    %4197 = vmatmul.mubr.bf16.gmra.mrb[0].mxu0 %v3661
    %v4198 = vpop.f32.mrb[0].mxu0
    %v4199 = vadd.f32 %v3942, %v4198
    %v4200 = vpop.f32.mrb[0].mxu0
    %v4201 = vpop.f32.mrb[0].mxu0
    %v4202 = vadd.f32 %v3945, %v4201
    %v4203 = vpop.f32.mrb[0].mxu0
    %4204 = vmatprep.mubr.bf16.mxu0 %v3664
    %4205 = vmatmul.mubr.bf16.gmra.mrb[0].mxu0 %v3663
    %v4206 = vpop.f32.mrb[0].mxu0
    %v4207 = vadd.f32 %v3950, %v4206
    %v4208 = vpop.f32.mrb[0].mxu0
    %v4209 = vpop.f32.mrb[0].mxu0
    %v4210 = vadd.f32 %v3953, %v4209
    %v4211 = vpop.f32.mrb[0].mxu0
    %4212 = vmatprep.mubr.bf16.mxu0 %v3666
    %4213 = vmatmul.mubr.bf16.gmra.mrb[0].mxu0 %v3665
    %v4214 = vpop.f32.mrb[0].mxu0
    %v4215 = vadd.f32 %v3958, %v4214
    %v4216 = vpop.f32.mrb[0].mxu0
    %v4217 = vpop.f32.mrb[0].mxu0
    %v4218 = vadd.f32 %v3961, %v4217
    %v4219 = vpop.f32.mrb[0].mxu0
    %4220 = vmatprep.mubr.bf16.mxu0 %v3668
    %4221 = vmatmul.mubr.bf16.gmra.mrb[0].mxu0 %v3667
    %v4222 = vpop.f32.mrb[0].mxu0
    %v4223 = vadd.f32 %v3966, %v4222
    %v4224 = vpop.f32.mrb[0].mxu0
    %v4225 = vpop.f32.mrb[0].mxu0
    %v4226 = vadd.f32 %v3969, %v4225
    %v4227 = vpop.f32.mrb[0].mxu0
    %4228 = vmatprep.mubr.bf16.mxu0 %v3670
    %4229 = vmatmul.mubr.bf16.gmra.mrb[0].mxu0 %v3669
    %v4230 = vpop.f32.mrb[0].mxu0
    %v4231 = vadd.f32 %v3974, %v4230
    %v4232 = vpop.f32.mrb[0].mxu0
    %v4233 = vpop.f32.mrb[0].mxu0
    %v4234 = vadd.f32 %v3977, %v4233
    %v4235 = vpop.f32.mrb[0].mxu0
    %4236 = vmatprep.mubr.bf16.mxu0 %v3672
    %4237 = vmatmul.mubr.bf16.gmra.mrb[0].mxu0 %v3671
    %v4238 = vpop.f32.mrb[0].mxu0
    %v4239 = vadd.f32 %v3982, %v4238
    %v4240 = vpop.f32.mrb[0].mxu0
    %v4241 = vpop.f32.mrb[0].mxu0
    %v4242 = vadd.f32 %v3985, %v4241
    %v4243 = vpop.f32.mrb[0].mxu0
    %4244 = vmatprep.mubr.bf16.mxu0 %v3674
    %4245 = vmatmul.mubr.bf16.gmra.mrb[0].mxu0 %v3673
    %v4246 = vpop.f32.mrb[0].mxu0
    %v4247 = vadd.f32 %v3990, %v4246
    %v4248 = vpop.f32.mrb[0].mxu0
    %v4249 = vpop.f32.mrb[0].mxu0
    %v4250 = vadd.f32 %v3993, %v4249
    %v4251 = vpop.f32.mrb[0].mxu0
    %4252 = vdwg.mxu0
    %v4254 = vlaneseq
    %v4255 = vshrl.u32 %v4254, 7
    %v4256 = vsub.s32 0, %v4255
    %v4257 = vrot.slane %v118, %v4256
    %v4259 = vadd.f32 %v4127, %v4257
    %v4260 = vadd.f32 %v4130, %v4257
    %v4261 = vadd.f32 %v4135, %v4257
    %v4262 = vadd.f32 %v4138, %v4257
    %v4263 = vadd.f32 %v4143, %v4257
    %v4264 = vadd.f32 %v4146, %v4257
    %v4265 = vadd.f32 %v4151, %v4257
    %v4266 = vadd.f32 %v4154, %v4257
    %v4267 = vadd.f32 %v4159, %v4257
    %v4268 = vadd.f32 %v4162, %v4257
    %v4269 = vadd.f32 %v4167, %v4257
    %v4270 = vadd.f32 %v4170, %v4257
    %v4271 = vadd.f32 %v4175, %v4257
    %v4272 = vadd.f32 %v4178, %v4257
    %v4273 = vadd.f32 %v4183, %v4257
    %v4274 = vadd.f32 %v4186, %v4257
    %v4275 = vadd.f32 %v4191, %v4257
    %v4276 = vadd.f32 %v4194, %v4257
    %v4277 = vadd.f32 %v4199, %v4257
    %v4278 = vadd.f32 %v4202, %v4257
    %v4279 = vadd.f32 %v4207, %v4257
    %v4280 = vadd.f32 %v4210, %v4257
    %v4281 = vadd.f32 %v4215, %v4257
    %v4282 = vadd.f32 %v4218, %v4257
    %v4283 = vadd.f32 %v4223, %v4257
    %v4284 = vadd.f32 %v4226, %v4257
    %v4285 = vadd.f32 %v4231, %v4257
    %v4286 = vadd.f32 %v4234, %v4257
    %v4287 = vadd.f32 %v4239, %v4257
    %v4288 = vadd.f32 %v4242, %v4257
    %v4289 = vadd.f32 %v4247, %v4257
    %v4290 = vadd.f32 %v4250, %v4257
    %v4291 = vlaneseq
    %v4292 = vand.u32 %v4291, 127
    %v4293 = vtanh.pop %v4259
    %v4294 = vtanh.pop %v4260
    %v4295 = vtanh.pop %v4261
    %v4296 = vtanh.pop %v4262
    %v4297 = vtanh.pop %v4263
    %v4298 = vtanh.pop %v4264
    %v4299 = vtanh.pop %v4265
    %v4300 = vtanh.pop %v4266
    %v4301 = vtanh.pop %v4267
    %v4302 = vtanh.pop %v4268
    %v4303 = vtanh.pop %v4269
    %v4304 = vtanh.pop %v4270
    %v4305 = vtanh.pop %v4271
    %v4306 = vtanh.pop %v4272
    %v4307 = vtanh.pop %v4273
    %v4308 = vtanh.pop %v4274
    %v4309 = vtanh.pop %v4275
    %v4310 = vtanh.pop %v4276
    %v4311 = vtanh.pop %v4277
    %v4312 = vtanh.pop %v4278
    %v4313 = vtanh.pop %v4279
    %v4314 = vtanh.pop %v4280
    %v4315 = vtanh.pop %v4281
    %v4316 = vtanh.pop %v4282
    %v4317 = vtanh.pop %v4283
    %v4318 = vtanh.pop %v4284
    %v4319 = vtanh.pop %v4285
    %v4320 = vtanh.pop %v4286
    %v4321 = vtanh.pop %v4287
    %v4322 = vtanh.pop %v4288
    %v4323 = vtanh.pop %v4289
    %v4324 = vtanh.pop %v4290
    %v4325 = vmul.f32 %v4293, 2.0
    %v4326 = vmul.f32 %v4294, 2.0
    %v4327 = vmul.f32 %v4295, 2.0
    %v4328 = vmul.f32 %v4296, 2.0
    %v4329 = vmul.f32 %v4297, 2.0
    %v4330 = vmul.f32 %v4298, 2.0
    %v4331 = vmul.f32 %v4299, 2.0
    %v4332 = vmul.f32 %v4300, 2.0
    %v4333 = vmul.f32 %v4301, 2.0
    %v4334 = vmul.f32 %v4302, 2.0
    %v4335 = vmul.f32 %v4303, 2.0
    %v4336 = vmul.f32 %v4304, 2.0
    %v4337 = vmul.f32 %v4305, 2.0
    %v4338 = vmul.f32 %v4306, 2.0
    %v4339 = vmul.f32 %v4307, 2.0
    %v4340 = vmul.f32 %v4308, 2.0
    %v4341 = vmul.f32 %v4309, 2.0
    %v4342 = vmul.f32 %v4310, 2.0
    %v4343 = vmul.f32 %v4311, 2.0
    %v4344 = vmul.f32 %v4312, 2.0
    %v4345 = vmul.f32 %v4313, 2.0
    %v4346 = vmul.f32 %v4314, 2.0
    %v4347 = vmul.f32 %v4315, 2.0
    %v4348 = vmul.f32 %v4316, 2.0
    %v4349 = vmul.f32 %v4317, 2.0
    %v4350 = vmul.f32 %v4318, 2.0
    %v4351 = vmul.f32 %v4319, 2.0
    %v4352 = vmul.f32 %v4320, 2.0
    %v4353 = vmul.f32 %v4321, 2.0
    %v4354 = vmul.f32 %v4322, 2.0
    %v4355 = vmul.f32 %v4323, 2.0
    %v4356 = vmul.f32 %v4324, 2.0
    %v4357 = vmax.f32 %v4259, 0.0
    %v4358 = vmax.f32 %v4260, 0.0
    %v4359 = vmax.f32 %v4261, 0.0
    %v4360 = vmax.f32 %v4262, 0.0
    %v4361 = vmax.f32 %v4263, 0.0
    %v4362 = vmax.f32 %v4264, 0.0
    %v4363 = vmax.f32 %v4265, 0.0
    %v4364 = vmax.f32 %v4266, 0.0
    %v4365 = vmax.f32 %v4267, 0.0
    %v4366 = vmax.f32 %v4268, 0.0
    %v4367 = vmax.f32 %v4269, 0.0
    %v4368 = vmax.f32 %v4270, 0.0
    %v4369 = vmax.f32 %v4271, 0.0
    %v4370 = vmax.f32 %v4272, 0.0
    %v4371 = vmax.f32 %v4273, 0.0
    %v4372 = vmax.f32 %v4274, 0.0
    %v4373 = vmax.f32 %v4275, 0.0
    %v4374 = vmax.f32 %v4276, 0.0
    %v4375 = vmax.f32 %v4277, 0.0
    %v4376 = vmax.f32 %v4278, 0.0
    %v4377 = vmax.f32 %v4279, 0.0
    %v4378 = vmax.f32 %v4280, 0.0
    %v4379 = vmax.f32 %v4281, 0.0
    %v4380 = vmax.f32 %v4282, 0.0
    %v4381 = vmax.f32 %v4283, 0.0
    %v4382 = vmax.f32 %v4284, 0.0
    %v4383 = vmax.f32 %v4285, 0.0
    %v4384 = vmax.f32 %v4286, 0.0
    %v4385 = vmax.f32 %v4287, 0.0
    %v4386 = vmax.f32 %v4288, 0.0
    %v4387 = vmax.f32 %v4289, 0.0
    %v4388 = vmax.f32 %v4290, 0.0
    %v4389 = vand.u32 2147483647, %v4259
    %v4390 = vand.u32 2147483647, %v4260
    %v4391 = vand.u32 2147483647, %v4261
    %v4392 = vand.u32 2147483647, %v4262
    %v4393 = vand.u32 2147483647, %v4263
    %v4394 = vand.u32 2147483647, %v4264
    %v4395 = vand.u32 2147483647, %v4265
    %v4396 = vand.u32 2147483647, %v4266
    %v4397 = vand.u32 2147483647, %v4267
    %v4398 = vand.u32 2147483647, %v4268
    %v4399 = vand.u32 2147483647, %v4269
    %v4400 = vand.u32 2147483647, %v4270
    %v4401 = vand.u32 2147483647, %v4271
    %v4402 = vand.u32 2147483647, %v4272
    %v4403 = vand.u32 2147483647, %v4273
    %v4404 = vand.u32 2147483647, %v4274
    %v4405 = vand.u32 2147483647, %v4275
    %v4406 = vand.u32 2147483647, %v4276
    %v4407 = vand.u32 2147483647, %v4277
    %v4408 = vand.u32 2147483647, %v4278
    %v4409 = vand.u32 2147483647, %v4279
    %v4410 = vand.u32 2147483647, %v4280
    %v4411 = vand.u32 2147483647, %v4281
    %v4412 = vand.u32 2147483647, %v4282
    %v4413 = vand.u32 2147483647, %v4283
    %v4414 = vand.u32 2147483647, %v4284
    %v4415 = vand.u32 2147483647, %v4285
    %v4416 = vand.u32 2147483647, %v4286
    %v4417 = vand.u32 2147483647, %v4287
    %v4418 = vand.u32 2147483647, %v4288
    %v4419 = vand.u32 2147483647, %v4289
    %v4420 = vand.u32 2147483647, %v4290
    %v4421 = vsub.f32 0.0, %v4389
    %v4422 = vsub.f32 0.0, %v4390
    %v4423 = vsub.f32 0.0, %v4391
    %v4424 = vsub.f32 0.0, %v4392
    %v4425 = vsub.f32 0.0, %v4393
    %v4426 = vsub.f32 0.0, %v4394
    %v4427 = vsub.f32 0.0, %v4395
    %v4428 = vsub.f32 0.0, %v4396
    %v4429 = vsub.f32 0.0, %v4397
    %v4430 = vsub.f32 0.0, %v4398
    %v4431 = vsub.f32 0.0, %v4399
    %v4432 = vsub.f32 0.0, %v4400
    %v4433 = vsub.f32 0.0, %v4401
    %v4434 = vsub.f32 0.0, %v4402
    %v4435 = vsub.f32 0.0, %v4403
    %v4436 = vsub.f32 0.0, %v4404
    %v4437 = vsub.f32 0.0, %v4405
    %v4438 = vsub.f32 0.0, %v4406
    %v4439 = vsub.f32 0.0, %v4407
    %v4440 = vsub.f32 0.0, %v4408
    %v4441 = vsub.f32 0.0, %v4409
    %v4442 = vsub.f32 0.0, %v4410
    %v4443 = vsub.f32 0.0, %v4411
    %v4444 = vsub.f32 0.0, %v4412
    %v4445 = vsub.f32 0.0, %v4413
    %v4446 = vsub.f32 0.0, %v4414
    %v4447 = vsub.f32 0.0, %v4415
    %v4448 = vsub.f32 0.0, %v4416
    %v4449 = vsub.f32 0.0, %v4417
    %v4450 = vsub.f32 0.0, %v4418
    %v4451 = vsub.f32 0.0, %v4419
    %v4452 = vsub.f32 0.0, %v4420
    %v4453 = vmul.f32 %v4421, 1.442695
    %v4454 = vpow.pop %v4453
    %v4455 = vmul.f32 %v4422, 1.442695
    %v4456 = vpow.pop %v4455
    %v4457 = vmul.f32 %v4423, 1.442695
    %v4458 = vpow.pop %v4457
    %v4459 = vmul.f32 %v4424, 1.442695
    %v4460 = vpow.pop %v4459
    %v4461 = vmul.f32 %v4425, 1.442695
    %v4462 = vpow.pop %v4461
    %v4463 = vmul.f32 %v4426, 1.442695
    %v4464 = vpow.pop %v4463
    %v4465 = vmul.f32 %v4427, 1.442695
    %v4466 = vpow.pop %v4465
    %v4467 = vmul.f32 %v4428, 1.442695
    %v4468 = vpow.pop %v4467
    %v4469 = vmul.f32 %v4429, 1.442695
    %v4470 = vpow.pop %v4469
    %v4471 = vmul.f32 %v4430, 1.442695
    %v4472 = vpow.pop %v4471
    %v4473 = vmul.f32 %v4431, 1.442695
    %v4474 = vpow.pop %v4473
    %v4475 = vmul.f32 %v4432, 1.442695
    %v4476 = vpow.pop %v4475
    %v4477 = vmul.f32 %v4433, 1.442695
    %v4478 = vpow.pop %v4477
    %v4479 = vmul.f32 %v4434, 1.442695
    %v4480 = vpow.pop %v4479
    %v4481 = vmul.f32 %v4435, 1.442695
    %v4482 = vpow.pop %v4481
    %v4483 = vmul.f32 %v4436, 1.442695
    %v4484 = vpow.pop %v4483
    %v4485 = vmul.f32 %v4437, 1.442695
    %v4486 = vpow.pop %v4485
    %v4487 = vmul.f32 %v4438, 1.442695
    %v4488 = vpow.pop %v4487
    %v4489 = vmul.f32 %v4439, 1.442695
    %v4490 = vpow.pop %v4489
    %v4491 = vmul.f32 %v4440, 1.442695
    %v4492 = vpow.pop %v4491
    %v4493 = vmul.f32 %v4441, 1.442695
    %v4494 = vpow.pop %v4493
    %v4495 = vmul.f32 %v4442, 1.442695
    %v4496 = vpow.pop %v4495
    %v4497 = vmul.f32 %v4443, 1.442695
    %v4498 = vpow.pop %v4497
    %v4499 = vmul.f32 %v4444, 1.442695
    %v4500 = vpow.pop %v4499
    %v4501 = vmul.f32 %v4445, 1.442695
    %v4502 = vpow.pop %v4501
    %v4503 = vmul.f32 %v4446, 1.442695
    %v4504 = vpow.pop %v4503
    %v4505 = vmul.f32 %v4447, 1.442695
    %v4506 = vpow.pop %v4505
    %v4507 = vmul.f32 %v4448, 1.442695
    %v4508 = vpow.pop %v4507
    %v4509 = vmul.f32 %v4449, 1.442695
    %v4510 = vpow.pop %v4509
    %v4511 = vmul.f32 %v4450, 1.442695
    %v4512 = vpow.pop %v4511
    %v4513 = vmul.f32 %v4451, 1.442695
    %v4514 = vpow.pop %v4513
    %v4515 = vmul.f32 %v4452, 1.442695
    %v4516 = vpow.pop %v4515
    %v4517 = vadd.f32 %v4454, 1.0
    %v4518 = vlog2.pop %v4517
    %v4519 = vmul.f32 %v4518, 0.6931472
    %v4520 = vmul.f32 -0.5, %v4454
    %v4521 = vadd.f32 %v4520, 1.0
    %v4522 = vmul.f32 %v4521, %v4454
    %v4523 = vand.u32 2147483647, %v4454
    %vm4524 = vcmp.lt.f32.partialorder %v4523, 0.0004427343
    %v4525 = vsel %vm4524, %v4522, %v4519
    %v4526 = vadd.f32 %v4456, 1.0
    %v4527 = vlog2.pop %v4526
    %v4528 = vmul.f32 %v4527, 0.6931472
    %v4529 = vmul.f32 -0.5, %v4456
    %v4530 = vadd.f32 %v4529, 1.0
    %v4531 = vmul.f32 %v4530, %v4456
    %v4532 = vand.u32 2147483647, %v4456
    %vm4533 = vcmp.lt.f32.partialorder %v4532, 0.0004427343
    %v4534 = vsel %vm4533, %v4531, %v4528
    %v4535 = vadd.f32 %v4458, 1.0
    %v4536 = vlog2.pop %v4535
    %v4537 = vmul.f32 %v4536, 0.6931472
    %v4538 = vmul.f32 -0.5, %v4458
    %v4539 = vadd.f32 %v4538, 1.0
    %v4540 = vmul.f32 %v4539, %v4458
    %v4541 = vand.u32 2147483647, %v4458
    %vm4542 = vcmp.lt.f32.partialorder %v4541, 0.0004427343
    %v4543 = vsel %vm4542, %v4540, %v4537
    %v4544 = vadd.f32 %v4460, 1.0
    %v4545 = vlog2.pop %v4544
    %v4546 = vmul.f32 %v4545, 0.6931472
    %v4547 = vmul.f32 -0.5, %v4460
    %v4548 = vadd.f32 %v4547, 1.0
    %v4549 = vmul.f32 %v4548, %v4460
    %v4550 = vand.u32 2147483647, %v4460
    %vm4551 = vcmp.lt.f32.partialorder %v4550, 0.0004427343
    %v4552 = vsel %vm4551, %v4549, %v4546
    %v4553 = vadd.f32 %v4462, 1.0
    %v4554 = vlog2.pop %v4553
    %v4555 = vmul.f32 %v4554, 0.6931472
    %v4556 = vmul.f32 -0.5, %v4462
    %v4557 = vadd.f32 %v4556, 1.0
    %v4558 = vmul.f32 %v4557, %v4462
    %v4559 = vand.u32 2147483647, %v4462
    %vm4560 = vcmp.lt.f32.partialorder %v4559, 0.0004427343
    %v4561 = vsel %vm4560, %v4558, %v4555
    %v4562 = vadd.f32 %v4464, 1.0
    %v4563 = vlog2.pop %v4562
    %v4564 = vmul.f32 %v4563, 0.6931472
    %v4565 = vmul.f32 -0.5, %v4464
    %v4566 = vadd.f32 %v4565, 1.0
    %v4567 = vmul.f32 %v4566, %v4464
    %v4568 = vand.u32 2147483647, %v4464
    %vm4569 = vcmp.lt.f32.partialorder %v4568, 0.0004427343
    %v4570 = vsel %vm4569, %v4567, %v4564
    %v4571 = vadd.f32 %v4466, 1.0
    %v4572 = vlog2.pop %v4571
    %v4573 = vmul.f32 %v4572, 0.6931472
    %v4574 = vmul.f32 -0.5, %v4466
    %v4575 = vadd.f32 %v4574, 1.0
    %v4576 = vmul.f32 %v4575, %v4466
    %v4577 = vand.u32 2147483647, %v4466
    %vm4578 = vcmp.lt.f32.partialorder %v4577, 0.0004427343
    %v4579 = vsel %vm4578, %v4576, %v4573
    %v4580 = vadd.f32 %v4468, 1.0
    %v4581 = vlog2.pop %v4580
    %v4582 = vmul.f32 %v4581, 0.6931472
    %v4583 = vmul.f32 -0.5, %v4468
    %v4584 = vadd.f32 %v4583, 1.0
    %v4585 = vmul.f32 %v4584, %v4468
    %v4586 = vand.u32 2147483647, %v4468
    %vm4587 = vcmp.lt.f32.partialorder %v4586, 0.0004427343
    %v4588 = vsel %vm4587, %v4585, %v4582
    %v4589 = vadd.f32 %v4470, 1.0
    %v4590 = vlog2.pop %v4589
    %v4591 = vmul.f32 %v4590, 0.6931472
    %v4592 = vmul.f32 -0.5, %v4470
    %v4593 = vadd.f32 %v4592, 1.0
    %v4594 = vmul.f32 %v4593, %v4470
    %v4595 = vand.u32 2147483647, %v4470
    %vm4596 = vcmp.lt.f32.partialorder %v4595, 0.0004427343
    %v4597 = vsel %vm4596, %v4594, %v4591
    %v4598 = vadd.f32 %v4472, 1.0
    %v4599 = vlog2.pop %v4598
    %v4600 = vmul.f32 %v4599, 0.6931472
    %v4601 = vmul.f32 -0.5, %v4472
    %v4602 = vadd.f32 %v4601, 1.0
    %v4603 = vmul.f32 %v4602, %v4472
    %v4604 = vand.u32 2147483647, %v4472
    %vm4605 = vcmp.lt.f32.partialorder %v4604, 0.0004427343
    %v4606 = vsel %vm4605, %v4603, %v4600
    %v4607 = vadd.f32 %v4474, 1.0
    %v4608 = vlog2.pop %v4607
    %v4609 = vmul.f32 %v4608, 0.6931472
    %v4610 = vmul.f32 -0.5, %v4474
    %v4611 = vadd.f32 %v4610, 1.0
    %v4612 = vmul.f32 %v4611, %v4474
    %v4613 = vand.u32 2147483647, %v4474
    %vm4614 = vcmp.lt.f32.partialorder %v4613, 0.0004427343
    %v4615 = vsel %vm4614, %v4612, %v4609
    %v4616 = vadd.f32 %v4476, 1.0
    %v4617 = vlog2.pop %v4616
    %v4618 = vmul.f32 %v4617, 0.6931472
    %v4619 = vmul.f32 -0.5, %v4476
    %v4620 = vadd.f32 %v4619, 1.0
    %v4621 = vmul.f32 %v4620, %v4476
    %v4622 = vand.u32 2147483647, %v4476
    %vm4623 = vcmp.lt.f32.partialorder %v4622, 0.0004427343
    %v4624 = vsel %vm4623, %v4621, %v4618
    %v4625 = vadd.f32 %v4478, 1.0
    %v4626 = vlog2.pop %v4625
    %v4627 = vmul.f32 %v4626, 0.6931472
    %v4628 = vmul.f32 -0.5, %v4478
    %v4629 = vadd.f32 %v4628, 1.0
    %v4630 = vmul.f32 %v4629, %v4478
    %v4631 = vand.u32 2147483647, %v4478
    %vm4632 = vcmp.lt.f32.partialorder %v4631, 0.0004427343
    %v4633 = vsel %vm4632, %v4630, %v4627
    %v4634 = vadd.f32 %v4480, 1.0
    %v4635 = vlog2.pop %v4634
    %v4636 = vmul.f32 %v4635, 0.6931472
    %v4637 = vmul.f32 -0.5, %v4480
    %v4638 = vadd.f32 %v4637, 1.0
    %v4639 = vmul.f32 %v4638, %v4480
    %v4640 = vand.u32 2147483647, %v4480
    %vm4641 = vcmp.lt.f32.partialorder %v4640, 0.0004427343
    %v4642 = vsel %vm4641, %v4639, %v4636
    %v4643 = vadd.f32 %v4482, 1.0
    %v4644 = vlog2.pop %v4643
    %v4645 = vmul.f32 %v4644, 0.6931472
    %v4646 = vmul.f32 -0.5, %v4482
    %v4647 = vadd.f32 %v4646, 1.0
    %v4648 = vmul.f32 %v4647, %v4482
    %v4649 = vand.u32 2147483647, %v4482
    %vm4650 = vcmp.lt.f32.partialorder %v4649, 0.0004427343
    %v4651 = vsel %vm4650, %v4648, %v4645
    %v4652 = vadd.f32 %v4484, 1.0
    %v4653 = vlog2.pop %v4652
    %v4654 = vmul.f32 %v4653, 0.6931472
    %v4655 = vmul.f32 -0.5, %v4484
    %v4656 = vadd.f32 %v4655, 1.0
    %v4657 = vmul.f32 %v4656, %v4484
    %v4658 = vand.u32 2147483647, %v4484
    %vm4659 = vcmp.lt.f32.partialorder %v4658, 0.0004427343
    %v4660 = vsel %vm4659, %v4657, %v4654
    %v4661 = vadd.f32 %v4486, 1.0
    %v4662 = vlog2.pop %v4661
    %v4663 = vmul.f32 %v4662, 0.6931472
    %v4664 = vmul.f32 -0.5, %v4486
    %v4665 = vadd.f32 %v4664, 1.0
    %v4666 = vmul.f32 %v4665, %v4486
    %v4667 = vand.u32 2147483647, %v4486
    %vm4668 = vcmp.lt.f32.partialorder %v4667, 0.0004427343
    %v4669 = vsel %vm4668, %v4666, %v4663
    %v4670 = vadd.f32 %v4488, 1.0
    %v4671 = vlog2.pop %v4670
    %v4672 = vmul.f32 %v4671, 0.6931472
    %v4673 = vmul.f32 -0.5, %v4488
    %v4674 = vadd.f32 %v4673, 1.0
    %v4675 = vmul.f32 %v4674, %v4488
    %v4676 = vand.u32 2147483647, %v4488
    %vm4677 = vcmp.lt.f32.partialorder %v4676, 0.0004427343
    %v4678 = vsel %vm4677, %v4675, %v4672
    %v4679 = vadd.f32 %v4490, 1.0
    %v4680 = vlog2.pop %v4679
    %v4681 = vmul.f32 %v4680, 0.6931472
    %v4682 = vmul.f32 -0.5, %v4490
    %v4683 = vadd.f32 %v4682, 1.0
    %v4684 = vmul.f32 %v4683, %v4490
    %v4685 = vand.u32 2147483647, %v4490
    %vm4686 = vcmp.lt.f32.partialorder %v4685, 0.0004427343
    %v4687 = vsel %vm4686, %v4684, %v4681
    %v4688 = vadd.f32 %v4492, 1.0
    %v4689 = vlog2.pop %v4688
    %v4690 = vmul.f32 %v4689, 0.6931472
    %v4691 = vmul.f32 -0.5, %v4492
    %v4692 = vadd.f32 %v4691, 1.0
    %v4693 = vmul.f32 %v4692, %v4492
    %v4694 = vand.u32 2147483647, %v4492
    %vm4695 = vcmp.lt.f32.partialorder %v4694, 0.0004427343
    %v4696 = vsel %vm4695, %v4693, %v4690
    %v4697 = vadd.f32 %v4494, 1.0
    %v4698 = vlog2.pop %v4697
    %v4699 = vmul.f32 %v4698, 0.6931472
    %v4700 = vmul.f32 -0.5, %v4494
    %v4701 = vadd.f32 %v4700, 1.0
    %v4702 = vmul.f32 %v4701, %v4494
    %v4703 = vand.u32 2147483647, %v4494
    %vm4704 = vcmp.lt.f32.partialorder %v4703, 0.0004427343
    %v4705 = vsel %vm4704, %v4702, %v4699
    %v4706 = vadd.f32 %v4496, 1.0
    %v4707 = vlog2.pop %v4706
    %v4708 = vmul.f32 %v4707, 0.6931472
    %v4709 = vmul.f32 -0.5, %v4496
    %v4710 = vadd.f32 %v4709, 1.0
    %v4711 = vmul.f32 %v4710, %v4496
    %v4712 = vand.u32 2147483647, %v4496
    %vm4713 = vcmp.lt.f32.partialorder %v4712, 0.0004427343
    %v4714 = vsel %vm4713, %v4711, %v4708
    %v4715 = vadd.f32 %v4498, 1.0
    %v4716 = vlog2.pop %v4715
    %v4717 = vmul.f32 %v4716, 0.6931472
    %v4718 = vmul.f32 -0.5, %v4498
    %v4719 = vadd.f32 %v4718, 1.0
    %v4720 = vmul.f32 %v4719, %v4498
    %v4721 = vand.u32 2147483647, %v4498
    %vm4722 = vcmp.lt.f32.partialorder %v4721, 0.0004427343
    %v4723 = vsel %vm4722, %v4720, %v4717
    %v4724 = vadd.f32 %v4500, 1.0
    %v4725 = vlog2.pop %v4724
    %v4726 = vmul.f32 %v4725, 0.6931472
    %v4727 = vmul.f32 -0.5, %v4500
    %v4728 = vadd.f32 %v4727, 1.0
    %v4729 = vmul.f32 %v4728, %v4500
    %v4730 = vand.u32 2147483647, %v4500
    %vm4731 = vcmp.lt.f32.partialorder %v4730, 0.0004427343
    %v4732 = vsel %vm4731, %v4729, %v4726
    %v4733 = vadd.f32 %v4502, 1.0
    %v4734 = vlog2.pop %v4733
    %v4735 = vmul.f32 %v4734, 0.6931472
    %v4736 = vmul.f32 -0.5, %v4502
    %v4737 = vadd.f32 %v4736, 1.0
    %v4738 = vmul.f32 %v4737, %v4502
    %v4739 = vand.u32 2147483647, %v4502
    %vm4740 = vcmp.lt.f32.partialorder %v4739, 0.0004427343
    %v4741 = vsel %vm4740, %v4738, %v4735
    %v4742 = vadd.f32 %v4504, 1.0
    %v4743 = vlog2.pop %v4742
    %v4744 = vmul.f32 %v4743, 0.6931472
    %v4745 = vmul.f32 -0.5, %v4504
    %v4746 = vadd.f32 %v4745, 1.0
    %v4747 = vmul.f32 %v4746, %v4504
    %v4748 = vand.u32 2147483647, %v4504
    %vm4749 = vcmp.lt.f32.partialorder %v4748, 0.0004427343
    %v4750 = vsel %vm4749, %v4747, %v4744
    %v4751 = vadd.f32 %v4506, 1.0
    %v4752 = vlog2.pop %v4751
    %v4753 = vmul.f32 %v4752, 0.6931472
    %v4754 = vmul.f32 -0.5, %v4506
    %v4755 = vadd.f32 %v4754, 1.0
    %v4756 = vmul.f32 %v4755, %v4506
    %v4757 = vand.u32 2147483647, %v4506
    %vm4758 = vcmp.lt.f32.partialorder %v4757, 0.0004427343
    %v4759 = vsel %vm4758, %v4756, %v4753
    %v4760 = vadd.f32 %v4508, 1.0
    %v4761 = vlog2.pop %v4760
    %v4762 = vmul.f32 %v4761, 0.6931472
    %v4763 = vmul.f32 -0.5, %v4508
    %v4764 = vadd.f32 %v4763, 1.0
    %v4765 = vmul.f32 %v4764, %v4508
    %v4766 = vand.u32 2147483647, %v4508
    %vm4767 = vcmp.lt.f32.partialorder %v4766, 0.0004427343
    %v4768 = vsel %vm4767, %v4765, %v4762
    %v4769 = vadd.f32 %v4510, 1.0
    %v4770 = vlog2.pop %v4769
    %v4771 = vmul.f32 %v4770, 0.6931472
    %v4772 = vmul.f32 -0.5, %v4510
    %v4773 = vadd.f32 %v4772, 1.0
    %v4774 = vmul.f32 %v4773, %v4510
    %v4775 = vand.u32 2147483647, %v4510
    %vm4776 = vcmp.lt.f32.partialorder %v4775, 0.0004427343
    %v4777 = vsel %vm4776, %v4774, %v4771
    %v4778 = vadd.f32 %v4512, 1.0
    %v4779 = vlog2.pop %v4778
    %v4780 = vmul.f32 %v4779, 0.6931472
    %v4781 = vmul.f32 -0.5, %v4512
    %v4782 = vadd.f32 %v4781, 1.0
    %v4783 = vmul.f32 %v4782, %v4512
    %v4784 = vand.u32 2147483647, %v4512
    %vm4785 = vcmp.lt.f32.partialorder %v4784, 0.0004427343
    %v4786 = vsel %vm4785, %v4783, %v4780
    %v4787 = vadd.f32 %v4514, 1.0
    %v4788 = vlog2.pop %v4787
    %v4789 = vmul.f32 %v4788, 0.6931472
    %v4790 = vmul.f32 -0.5, %v4514
    %v4791 = vadd.f32 %v4790, 1.0
    %v4792 = vmul.f32 %v4791, %v4514
    %v4793 = vand.u32 2147483647, %v4514
    %vm4794 = vcmp.lt.f32.partialorder %v4793, 0.0004427343
    %v4795 = vsel %vm4794, %v4792, %v4789
    %v4796 = vadd.f32 %v4516, 1.0
    %v4797 = vlog2.pop %v4796
    %v4798 = vmul.f32 %v4797, 0.6931472
    %v4799 = vmul.f32 -0.5, %v4516
    %v4800 = vadd.f32 %v4799, 1.0
    %v4801 = vmul.f32 %v4800, %v4516
    %v4802 = vand.u32 2147483647, %v4516
    %vm4803 = vcmp.lt.f32.partialorder %v4802, 0.0004427343
    %v4804 = vsel %vm4803, %v4801, %v4798
    %v4805 = vadd.f32 %v4357, %v4525
    %v4806 = vadd.f32 %v4358, %v4534
    %v4807 = vadd.f32 %v4359, %v4543
    %v4808 = vadd.f32 %v4360, %v4552
    %v4809 = vadd.f32 %v4361, %v4561
    %v4810 = vadd.f32 %v4362, %v4570
    %v4811 = vadd.f32 %v4363, %v4579
    %v4812 = vadd.f32 %v4364, %v4588
    %v4813 = vadd.f32 %v4365, %v4597
    %v4814 = vadd.f32 %v4366, %v4606
    %v4815 = vadd.f32 %v4367, %v4615
    %v4816 = vadd.f32 %v4368, %v4624
    %v4817 = vadd.f32 %v4369, %v4633
    %v4818 = vadd.f32 %v4370, %v4642
    %v4819 = vadd.f32 %v4371, %v4651
    %v4820 = vadd.f32 %v4372, %v4660
    %v4821 = vadd.f32 %v4373, %v4669
    %v4822 = vadd.f32 %v4374, %v4678
    %v4823 = vadd.f32 %v4375, %v4687
    %v4824 = vadd.f32 %v4376, %v4696
    %v4825 = vadd.f32 %v4377, %v4705
    %v4826 = vadd.f32 %v4378, %v4714
    %v4827 = vadd.f32 %v4379, %v4723
    %v4828 = vadd.f32 %v4380, %v4732
    %v4829 = vadd.f32 %v4381, %v4741
    %v4830 = vadd.f32 %v4382, %v4750
    %v4831 = vadd.f32 %v4383, %v4759
    %v4832 = vadd.f32 %v4384, %v4768
    %v4833 = vadd.f32 %v4385, %v4777
    %v4834 = vadd.f32 %v4386, %v4786
    %v4835 = vadd.f32 %v4387, %v4795
    %v4836 = vadd.f32 %v4388, %v4804
    %vm4837 = vcmp.lt.s32.totalorder %v4292, 4
    %vm4838 = vcmp.lt.s32.totalorder %v4292, 8
    %vm4839 = vcmp.lt.s32.totalorder %v4292, 9
    %v4840 = vsel %vm4839, %v4259, 0.0
    %v4841 = vsel %vm4839, %v4260, 0.0
    %v4842 = vsel %vm4839, %v4261, 0.0
    %v4843 = vsel %vm4839, %v4262, 0.0
    %v4844 = vsel %vm4839, %v4263, 0.0
    %v4845 = vsel %vm4839, %v4264, 0.0
    %v4846 = vsel %vm4839, %v4265, 0.0
    %v4847 = vsel %vm4839, %v4266, 0.0
    %v4848 = vsel %vm4839, %v4267, 0.0
    %v4849 = vsel %vm4839, %v4268, 0.0
    %v4850 = vsel %vm4839, %v4269, 0.0
    %v4851 = vsel %vm4839, %v4270, 0.0
    %v4852 = vsel %vm4839, %v4271, 0.0
    %v4853 = vsel %vm4839, %v4272, 0.0
    %v4854 = vsel %vm4839, %v4273, 0.0
    %v4855 = vsel %vm4839, %v4274, 0.0
    %v4856 = vsel %vm4839, %v4275, 0.0
    %v4857 = vsel %vm4839, %v4276, 0.0
    %v4858 = vsel %vm4839, %v4277, 0.0
    %v4859 = vsel %vm4839, %v4278, 0.0
    %v4860 = vsel %vm4839, %v4279, 0.0
    %v4861 = vsel %vm4839, %v4280, 0.0
    %v4862 = vsel %vm4839, %v4281, 0.0
    %v4863 = vsel %vm4839, %v4282, 0.0
    %v4864 = vsel %vm4839, %v4283, 0.0
    %v4865 = vsel %vm4839, %v4284, 0.0
    %v4866 = vsel %vm4839, %v4285, 0.0
    %v4867 = vsel %vm4839, %v4286, 0.0
    %v4868 = vsel %vm4839, %v4287, 0.0
    %v4869 = vsel %vm4839, %v4288, 0.0
    %v4870 = vsel %vm4839, %v4289, 0.0
    %v4871 = vsel %vm4839, %v4290, 0.0
    %v4872 = vsel %vm4838, %v4805, %v4840
    %v4873 = vsel %vm4838, %v4806, %v4841
    %v4874 = vsel %vm4838, %v4807, %v4842
    %v4875 = vsel %vm4838, %v4808, %v4843
    %v4876 = vsel %vm4838, %v4809, %v4844
    %v4877 = vsel %vm4838, %v4810, %v4845
    %v4878 = vsel %vm4838, %v4811, %v4846
    %v4879 = vsel %vm4838, %v4812, %v4847
    %v4880 = vsel %vm4838, %v4813, %v4848
    %v4881 = vsel %vm4838, %v4814, %v4849
    %v4882 = vsel %vm4838, %v4815, %v4850
    %v4883 = vsel %vm4838, %v4816, %v4851
    %v4884 = vsel %vm4838, %v4817, %v4852
    %v4885 = vsel %vm4838, %v4818, %v4853
    %v4886 = vsel %vm4838, %v4819, %v4854
    %v4887 = vsel %vm4838, %v4820, %v4855
    %v4888 = vsel %vm4838, %v4821, %v4856
    %v4889 = vsel %vm4838, %v4822, %v4857
    %v4890 = vsel %vm4838, %v4823, %v4858
    %v4891 = vsel %vm4838, %v4824, %v4859
    %v4892 = vsel %vm4838, %v4825, %v4860
    %v4893 = vsel %vm4838, %v4826, %v4861
    %v4894 = vsel %vm4838, %v4827, %v4862
    %v4895 = vsel %vm4838, %v4828, %v4863
    %v4896 = vsel %vm4838, %v4829, %v4864
    %v4897 = vsel %vm4838, %v4830, %v4865
    %v4898 = vsel %vm4838, %v4831, %v4866
    %v4899 = vsel %vm4838, %v4832, %v4867
    %v4900 = vsel %vm4838, %v4833, %v4868
    %v4901 = vsel %vm4838, %v4834, %v4869
    %v4902 = vsel %vm4838, %v4835, %v4870
    %v4903 = vsel %vm4838, %v4836, %v4871
    %v4904 = vsel %vm4837, %v4325, %v4872
    %v4905 = vsel %vm4837, %v4326, %v4873
    %v4906 = vsel %vm4837, %v4327, %v4874
    %v4907 = vsel %vm4837, %v4328, %v4875
    %v4908 = vsel %vm4837, %v4329, %v4876
    %v4909 = vsel %vm4837, %v4330, %v4877
    %v4910 = vsel %vm4837, %v4331, %v4878
    %v4911 = vsel %vm4837, %v4332, %v4879
    %v4912 = vsel %vm4837, %v4333, %v4880
    %v4913 = vsel %vm4837, %v4334, %v4881
    %v4914 = vsel %vm4837, %v4335, %v4882
    %v4915 = vsel %vm4837, %v4336, %v4883
    %v4916 = vsel %vm4837, %v4337, %v4884
    %v4917 = vsel %vm4837, %v4338, %v4885
    %v4918 = vsel %vm4837, %v4339, %v4886
    %v4919 = vsel %vm4837, %v4340, %v4887
    %v4920 = vsel %vm4837, %v4341, %v4888
    %v4921 = vsel %vm4837, %v4342, %v4889
    %v4922 = vsel %vm4837, %v4343, %v4890
    %v4923 = vsel %vm4837, %v4344, %v4891
    %v4924 = vsel %vm4837, %v4345, %v4892
    %v4925 = vsel %vm4837, %v4346, %v4893
    %v4926 = vsel %vm4837, %v4347, %v4894
    %v4927 = vsel %vm4837, %v4348, %v4895
    %v4928 = vsel %vm4837, %v4349, %v4896
    %v4929 = vsel %vm4837, %v4350, %v4897
    %v4930 = vsel %vm4837, %v4351, %v4898
    %v4931 = vsel %vm4837, %v4352, %v4899
    %v4932 = vsel %vm4837, %v4353, %v4900
    %v4933 = vsel %vm4837, %v4354, %v4901
    %v4934 = vsel %vm4837, %v4355, %v4902
    %v4935 = vsel %vm4837, %v4356, %v4903
    %4936 = vst [vmem:[%s7] sm:$0xff] %v4904
    %4937 = vst [vmem:[%s7 + $0x8] sm:$0xff] %v4905
    %4938 = vst [vmem:[%s7 + $0x10] sm:$0xff] %v4906
    %4939 = vst [vmem:[%s7 + $0x18] sm:$0xff] %v4907
    %4940 = vst [vmem:[%s7 + $0x20] sm:$0xff] %v4908
    %4941 = vst [vmem:[%s7 + $0x28] sm:$0xff] %v4909
    %4942 = vst [vmem:[%s7 + $0x30] sm:$0xff] %v4910
    %4943 = vst [vmem:[%s7 + $0x38] sm:$0xff] %v4911
    %4944 = vst [vmem:[%s7 + $0x40] sm:$0xff] %v4912
    %4945 = vst [vmem:[%s7 + $0x48] sm:$0xff] %v4913
    %4946 = vst [vmem:[%s7 + $0x50] sm:$0xff] %v4914
    %4947 = vst [vmem:[%s7 + $0x58] sm:$0xff] %v4915
    %4948 = vst [vmem:[%s7 + $0x60] sm:$0xff] %v4916
    %4949 = vst [vmem:[%s7 + $0x68] sm:$0xff] %v4917
    %4950 = vst [vmem:[%s7 + $0x70] sm:$0xff] %v4918
    %4951 = vst [vmem:[%s7 + $0x78] sm:$0xff] %v4919
    %4952 = vst [vmem:[%s7 + $0x80] sm:$0xff] %v4920
    %4953 = vst [vmem:[%s7 + $0x88] sm:$0xff] %v4921
    %4954 = vst [vmem:[%s7 + $0x90] sm:$0xff] %v4922
    %4955 = vst [vmem:[%s7 + $0x98] sm:$0xff] %v4923
    %4956 = vst [vmem:[%s7 + $0xa0] sm:$0xff] %v4924
    %4957 = vst [vmem:[%s7 + $0xa8] sm:$0xff] %v4925
    %4958 = vst [vmem:[%s7 + $0xb0] sm:$0xff] %v4926
    %4959 = vst [vmem:[%s7 + $0xb8] sm:$0xff] %v4927
    %4960 = vst [vmem:[%s7 + $0xc0] sm:$0xff] %v4928
    %4961 = vst [vmem:[%s7 + $0xc8] sm:$0xff] %v4929
    %4962 = vst [vmem:[%s7 + $0xd0] sm:$0xff] %v4930
    %4963 = vst [vmem:[%s7 + $0xd8] sm:$0xff] %v4931
    %4964 = vst [vmem:[%s7 + $0xe0] sm:$0xff] %v4932
    %4965 = vst [vmem:[%s7 + $0xe8] sm:$0xff] %v4933
    %4966 = vst [vmem:[%s7 + $0xf0] sm:$0xff] %v4934
    %4967 = vst [vmem:[%s7 + $0xf8] sm:$0xff] %v4935
    // Predicated region
    $region46: #{actor_critic_forward.1} parent=1 // pred_check
      _
    $region47: #{actor_critic_forward.1} parent=1 // pred_check_branch
      %4969 = sbr.rel (0) target = $region49
    $region48: #{actor_critic_forward.1} parent=1 // pred_region
      _
    $region49: #{actor_critic_forward.1} parent=1 // pred_fallthru
      _
    // Predicated region
    $region50: #{actor_critic_forward.1} parent=1 // pred_check
      _
    $region51: #{actor_critic_forward.1} parent=1 // pred_check_branch
      %4971 = sbr.rel (0) target = $region53
    $region52: #{actor_critic_forward.1} parent=1 // pred_region
      _
    $region53: #{actor_critic_forward.1} parent=1 // pred_fallthru
      _
    %4972 = vsyncpa [#allocation3], 1
    %4973 = vsyncpa [#allocation5], 1
    %4974 = vsyncpa [#allocation8], 1

</llo_original>
